<compile_context>
chip_gen: v7x
topology: tpu7x:2x2x1
jax: 0.10.0
libtpu: 0.0.40
codegen_flags: <defaults>
</compile_context>

<pallas_src>
import functools
import math

import jax
import jax.numpy as jnp
from jax import lax
from jax.experimental import pallas as pl
from jax.experimental.pallas import tpu as pltpu


# --------------------------------------------------------------------------- #
# Kernel: one grid step == one batch element, whole encoder stack fused.       #
# --------------------------------------------------------------------------- #
def _encoder_kernel(src_ref, pe_ref, emb_w_ref, emb_b_ref,
                    ln1_g_ref, ln1_b_ref,
                    wq_ref, bq_ref, wk_ref, bk_ref, wo_ref, bo_ref,
                    ln2_g_ref, ln2_b_ref,
                    w1_ref, b1_ref, w2_ref, b2_ref,
                    lnf_g_ref, lnf_b_ref,
                    out_ref,
                    *, nlayers, nhead, d_model, eps, scale_emb):
    f32 = jnp.float32

    def layer_norm(v, g, b):
        # Custom LayerNormalization: torch .std() is unbiased (ddof=1) and the
        # module normalizes by (sigma + eps), NOT sqrt(var + eps).
        diff = v - jnp.mean(v, axis=-1, keepdims=True)
        var = jnp.sum(diff * diff, axis=-1, keepdims=True) * (1.0 / (d_model - 1))
        sigma = jnp.sqrt(var)
        return g * (diff / (sigma + eps)) + b

    # ---- InputEmbeddings + PositionalEncoding -------------------------------
    x = src_ref[0].astype(f32)                               # (seq, in_dim_padded)
    h = (jnp.dot(x, emb_w_ref[...], preferred_element_type=f32)
         + emb_b_ref[...]) * scale_emb
    h = h + pe_ref[...]
    # (dropout after positional encoding: identity at inference)

    d_k = d_model // nhead
    inv_scale = 1.0 / math.sqrt(d_k)

    for l in range(nlayers):                                 # static unroll
        # ---- residual1: h + MultiHeadAtention(LN(h), LN(h), LN(h)) ----------
        y = layer_norm(h, ln1_g_ref[l], ln1_b_ref[l])
        attn_out = None
        for hd in range(nhead):
            lo = hd * d_k
            # Per-head projections via lane-sliced weight loads.
            qh = (jnp.dot(y, wq_ref[l, :, lo:lo + d_k], preferred_element_type=f32)
                  + bq_ref[l, :, lo:lo + d_k])               # (seq, d_k)
            kh = (jnp.dot(y, wk_ref[l, :, lo:lo + d_k], preferred_element_type=f32)
                  + bk_ref[l, :, lo:lo + d_k])               # (seq, d_k)
            # Module quirk preserved: v = w_k(value), and value == key == query.
            vh = kh
            # scores = q_h @ k_h^T / sqrt(d_k)
            s = lax.dot_general(qh, kh, (((1,), (1,)), ((), ())),
                                preferred_element_type=f32) * inv_scale
            s = s - jnp.max(s, axis=-1, keepdims=True)       # stable softmax
            e = jnp.exp(s)
            p = e / jnp.sum(e, axis=-1, keepdims=True)
            # (dropout on attention weights: identity at inference)
            ctx_h = jnp.dot(p, vh, preferred_element_type=f32)          # (seq, d_k)
            # Fold head-concat + W_o: concat(heads) @ Wo == sum_h head_h @ Wo[rows_h]
            contrib = jnp.dot(ctx_h, wo_ref[l, lo:lo + d_k, :],
                              preferred_element_type=f32)               # (seq, d_model)
            attn_out = contrib if attn_out is None else attn_out + contrib
        h = h + attn_out + bo_ref[l]

        # ---- residual2: h + FeedForward(LN(h)) -------------------------------
        y = layer_norm(h, ln2_g_ref[l], ln2_b_ref[l])
        ff = jnp.maximum(jnp.dot(y, w1_ref[l], preferred_element_type=f32)
                         + b1_ref[l], 0.0)                              # ReLU
        # (dropout inside FeedForward: identity at inference)
        ff = jnp.dot(ff, w2_ref[l], preferred_element_type=f32) + b2_ref[l]
        h = h + ff

    # ---- final LayerNormalization of the encoder block -----------------------
    h = layer_norm(h, lnf_g_ref[...], lnf_b_ref[...])
    out_ref[0] = h.astype(out_ref.dtype)


# --------------------------------------------------------------------------- #
# Wrapper                                                                       #
# --------------------------------------------------------------------------- #
def model_encoder_forward(src, params, pe, *, nhead, eps, src_mask=None):
    """ModelEncoder.forward(src, src_mask=None) as a single fused Pallas kernel."""
    assert src_mask is None  # TODO(synk): masked attention path not implemented.
    batch, seq, input_dim = src.shape
    d_model = params["emb_w"].shape[1]
    nlayers = params["wq"].shape[0]

    # Zero-pad the embedding contraction dim to a multiple of 8 (mathematically
    # a no-op; keeps the MXU contraction sublane-aligned).  Only a few bytes.
    kpad = (-input_dim) % 8
    emb_w = params["emb_w"]
    if kpad:
        src = jnp.pad(src, ((0, 0), (0, 0), (0, kpad)))
        emb_w = jnp.pad(emb_w, ((0, kpad), (0, 0)))

    pe_s = pe[:seq].astype(jnp.float32)

    kernel = functools.partial(
        _encoder_kernel, nlayers=nlayers, nhead=nhead, d_model=d_model,
        eps=eps, scale_emb=math.sqrt(d_model))

    weights = [pe_s, emb_w, params["emb_b"],
               params["ln1_g"], params["ln1_b"],
               params["wq"], params["bq"], params["wk"], params["bk"],
               params["wo"], params["bo"],
               params["ln2_g"], params["ln2_b"],
               params["w1"], params["b1"], params["w2"], params["b2"],
               params["lnf_g"], params["lnf_b"]]

    def _resident(a):
        # Full-array block + constant index map: DMA'd once, VMEM-resident
        # across all grid steps.
        return pl.BlockSpec(a.shape, lambda *_: (0,) * a.ndim)

    in_specs = ([pl.BlockSpec((1, seq, src.shape[-1]), lambda b: (b, 0, 0))]
                + [_resident(a) for a in weights])

    return pl.pallas_call(
        kernel,
        out_shape=jax.ShapeDtypeStruct((batch, seq, d_model), src.dtype),
        grid_spec=pltpu.PrefetchScalarGridSpec(
            num_scalar_prefetch=0,
            grid=(batch,),
            in_specs=in_specs,
            out_specs=pl.BlockSpec((1, seq, d_model), lambda b: (b, 0, 0)),
        ),
        compiler_params=pltpu.CompilerParams(
            # Batch axis is embarrassingly parallel -> multi-TC chips (v7x)
            # shard it across cores; harmless no-op on single-TC v5e/v6e.
            dimension_semantics=("parallel",),
        ),
    )(src, *weights)


# --------------------------------------------------------------------------- #
# Parameter construction (deterministic) and pure-JAX reference                #
# --------------------------------------------------------------------------- #
def make_positional_encoding(max_len, d_model):
    position = jnp.arange(max_len, dtype=jnp.float32)[:, None]
    div_term = jnp.exp(jnp.arange(0, d_model, 2, dtype=jnp.float32)
                       * (-math.log(10000.0) / d_model))
    pe = jnp.zeros((max_len, d_model), dtype=jnp.float32)
    pe = pe.at[:, 0::2].set(jnp.sin(position * div_term))
    pe = pe.at[:, 1::2].set(jnp.cos(position * div_term))
    return pe


def init_params(key, *, input_dim, d_model, d_ff, nlayers):
    """Linear weights stored in matmul layout (in_features, out_features) == torch W.T."""
    keys = iter(jax.random.split(key, 64))

    def linear(in_f, out_f, prefix=()):
        bound = 1.0 / math.sqrt(in_f)
        w = jax.random.uniform(next(keys), prefix + (in_f, out_f), jnp.float32, -bound, bound)
        b = jax.random.uniform(next(keys), prefix + (1, out_f), jnp.float32, -bound, bound)
        return w, b

    p = {}
    p["emb_w"], p["emb_b"] = linear(input_dim, d_model)
    p["wq"], p["bq"] = linear(d_model, d_model, (nlayers,))
    p["wk"], p["bk"] = linear(d_model, d_model, (nlayers,))
    # NOTE: the torch module also creates w_v, but its forward never uses it
    # (v = self.w_k(value)); it is therefore omitted here.
    p["wo"], p["bo"] = linear(d_model, d_model, (nlayers,))
    p["w1"], p["b1"] = linear(d_model, d_ff, (nlayers,))
    p["w2"], p["b2"] = linear(d_ff, d_model, (nlayers,))

    # LayerNormalization params (gamma=1, beta=0 at init in the module; slightly
    # perturbed here so the affine path is numerically exercised by the test).
    def ln_pair(shape):
        g = 1.0 + 0.1 * jax.random.normal(next(keys), shape, jnp.float32)
        b = 0.1 * jax.random.normal(next(keys), shape, jnp.float32)
        return g, b

    p["ln1_g"], p["ln1_b"] = ln_pair((nlayers, 1, d_model))
    p["ln2_g"], p["ln2_b"] = ln_pair((nlayers, 1, d_model))
    p["lnf_g"], p["lnf_b"] = ln_pair((1, d_model))
    return p


def reference_forward(src, params, pe, *, nhead, eps):
    """Pure-JAX mirror of ModelEncoder.forward (eval mode), f32-exact matmuls."""
    hi = lax.Precision.HIGHEST
    d_model = params["emb_w"].shape[1]
    nlayers = params["wq"].shape[0]
    d_k = d_model // nhead
    B, S, _ = src.shape

    def ln(v, g, b):
        mean = jnp.mean(v, axis=-1, keepdims=True)
        sigma = jnp.std(v, axis=-1, keepdims=True, ddof=1)   # torch .std(): unbiased
        return g * ((v - mean) / (sigma + eps)) + b

    x = (jnp.einsum("bsi,id->bsd", src, params["emb_w"], precision=hi)
         + params["emb_b"][0]) * math.sqrt(d_model)
    x = x + pe[None, :S, :]
    for l in range(nlayers):
        y = ln(x, params["ln1_g"][l, 0], params["ln1_b"][l, 0])
        q = jnp.einsum("bsd,de->bse", y, params["wq"][l], precision=hi) + params["bq"][l, 0]
        k = jnp.einsum("bsd,de->bse", y, params["wk"][l], precision=hi) + params["bk"][l, 0]
        v = k  # faithful to the torch module: v = w_k(value), value == key == query
        qh = q.reshape(B, S, nhead, d_k).transpose(0, 2, 1, 3)
        kh = k.reshape(B, S, nhead, d_k).transpose(0, 2, 1, 3)
        vh = v.reshape(B, S, nhead, d_k).transpose(0, 2, 1, 3)
        scores = jnp.einsum("bhqd,bhkd->bhqk", qh, kh, precision=hi) / math.sqrt(d_k)
        attn = jax.nn.softmax(scores, axis=-1)
        ctx = jnp.einsum("bhqk,bhkd->bhqd", attn, vh, precision=hi)
        ctx = ctx.transpose(0, 2, 1, 3).reshape(B, S, d_model)
        x = x + jnp.einsum("bsd,de->bse", ctx, params["wo"][l], precision=hi) + params["bo"][l, 0]
        y = ln(x, params["ln2_g"][l, 0], params["ln2_b"][l, 0])
        ff = jnp.maximum(
            jnp.einsum("bsd,df->bsf", y, params["w1"][l], precision=hi) + params["b1"][l, 0], 0.0)
        ff = jnp.einsum("bsf,fd->bsd", ff, params["w2"][l], precision=hi) + params["b2"][l, 0]
        x = x + ff
    return ln(x, params["lnf_g"][0], params["lnf_b"][0])


# --------------------------------------------------------------------------- #
if __name__ == "__main__":
    # Small config consistent with the module's args:
    # d_model=32, nhead=4, d_ff=64, nlayers=2, input_dim=8, LN_eps=1e-6; batch=2, seq=8.
    d_model, nhead, d_ff, nlayers = 32, 4, 64, 2
    input_dim, batch, seq, max_len = 8, 2, 8, 16
    ln_eps = 1e-6

    key = jax.random.PRNGKey(0)
    k_param, k_src = jax.random.split(key)
    params = init_params(k_param, input_dim=input_dim, d_model=d_model,
                         d_ff=d_ff, nlayers=nlayers)
    pe = make_positional_encoding(max_len, d_model)
    src = jax.random.normal(k_src, (batch, seq, input_dim), dtype=jnp.float32)

    out = jax.block_until_ready(
        model_encoder_forward(src, params, pe, nhead=nhead, eps=ln_eps))
    ref = reference_forward(src, params, pe, nhead=nhead, eps=ln_eps)

    assert out.shape == (batch, seq, d_model), out.shape
    max_err = float(jnp.max(jnp.abs(out - ref)))
    # Tolerance covers possible MXU f32 matmul pass-count differences vs. the
    # HIGHEST-precision XLA reference; structural bugs would be >> 1e-1.
    assert max_err < 5e-3, f"max |pallas - reference| = {max_err}"
    print("KERNEL_OK")
</pallas_src>

<mosaic_0001>
module attributes {stable_mosaic.version = 11 : i64} {
  func.func @_encoder_kernel(%arg0: i32, %arg1: memref<1x8x8xf32, #tpu.memory_space<vmem>>, %arg2: memref<8x32xf32, #tpu.memory_space<vmem>>, %arg3: memref<8x32xf32, #tpu.memory_space<vmem>>, %arg4: memref<1x32xf32, #tpu.memory_space<vmem>>, %arg5: memref<2x1x32xf32, #tpu.memory_space<vmem>>, %arg6: memref<2x1x32xf32, #tpu.memory_space<vmem>>, %arg7: memref<2x32x32xf32, #tpu.memory_space<vmem>>, %arg8: memref<2x1x32xf32, #tpu.memory_space<vmem>>, %arg9: memref<2x32x32xf32, #tpu.memory_space<vmem>>, %arg10: memref<2x1x32xf32, #tpu.memory_space<vmem>>, %arg11: memref<2x32x32xf32, #tpu.memory_space<vmem>>, %arg12: memref<2x1x32xf32, #tpu.memory_space<vmem>>, %arg13: memref<2x1x32xf32, #tpu.memory_space<vmem>>, %arg14: memref<2x1x32xf32, #tpu.memory_space<vmem>>, %arg15: memref<2x32x64xf32, #tpu.memory_space<vmem>>, %arg16: memref<2x1x64xf32, #tpu.memory_space<vmem>>, %arg17: memref<2x64x32xf32, #tpu.memory_space<vmem>>, %arg18: memref<2x1x32xf32, #tpu.memory_space<vmem>>, %arg19: memref<1x32xf32, #tpu.memory_space<vmem>>, %arg20: memref<1x32xf32, #tpu.memory_space<vmem>>, %arg21: memref<1x8x32xf32, #tpu.memory_space<vmem>>) attributes {dimension_semantics = [#tpu.dimension_semantics<parallel>], iteration_bounds = array<i64: 2>, scalar_prefetch = 0 : i64, scratch_operands = 0 : i64, tpu.core_type = #tpu.core_type<tc>, window_params = [{transform_indices = @transform_0, window_bounds = array<i64: 1, 8, 8>}, {pipeline_mode = #tpu.pipeline_mode<synchronous>, transform_indices = @transform_1, window_bounds = array<i64: 8, 32>}, {pipeline_mode = #tpu.pipeline_mode<synchronous>, transform_indices = @transform_2, window_bounds = array<i64: 8, 32>}, {pipeline_mode = #tpu.pipeline_mode<synchronous>, transform_indices = @transform_3, window_bounds = array<i64: 1, 32>}, {pipeline_mode = #tpu.pipeline_mode<synchronous>, transform_indices = @transform_4, window_bounds = array<i64: 2, 1, 32>}, {pipeline_mode = #tpu.pipeline_mode<synchronous>, transform_indices = @transform_5, window_bounds = array<i64: 2, 1, 32>}, {pipeline_mode = #tpu.pipeline_mode<synchronous>, transform_indices = @transform_6, window_bounds = array<i64: 2, 32, 32>}, {pipeline_mode = #tpu.pipeline_mode<synchronous>, transform_indices = @transform_7, window_bounds = array<i64: 2, 1, 32>}, {pipeline_mode = #tpu.pipeline_mode<synchronous>, transform_indices = @transform_8, window_bounds = array<i64: 2, 32, 32>}, {pipeline_mode = #tpu.pipeline_mode<synchronous>, transform_indices = @transform_9, window_bounds = array<i64: 2, 1, 32>}, {pipeline_mode = #tpu.pipeline_mode<synchronous>, transform_indices = @transform_10, window_bounds = array<i64: 2, 32, 32>}, {pipeline_mode = #tpu.pipeline_mode<synchronous>, transform_indices = @transform_11, window_bounds = array<i64: 2, 1, 32>}, {pipeline_mode = #tpu.pipeline_mode<synchronous>, transform_indices = @transform_12, window_bounds = array<i64: 2, 1, 32>}, {pipeline_mode = #tpu.pipeline_mode<synchronous>, transform_indices = @transform_13, window_bounds = array<i64: 2, 1, 32>}, {pipeline_mode = #tpu.pipeline_mode<synchronous>, transform_indices = @transform_14, window_bounds = array<i64: 2, 32, 64>}, {pipeline_mode = #tpu.pipeline_mode<synchronous>, transform_indices = @transform_15, window_bounds = array<i64: 2, 1, 64>}, {pipeline_mode = #tpu.pipeline_mode<synchronous>, transform_indices = @transform_16, window_bounds = array<i64: 2, 64, 32>}, {pipeline_mode = #tpu.pipeline_mode<synchronous>, transform_indices = @transform_17, window_bounds = array<i64: 2, 1, 32>}, {pipeline_mode = #tpu.pipeline_mode<synchronous>, transform_indices = @transform_18, window_bounds = array<i64: 1, 32>}, {pipeline_mode = #tpu.pipeline_mode<synchronous>, transform_indices = @transform_19, window_bounds = array<i64: 1, 32>}, {transform_indices = @transform_20, window_bounds = array<i64: 1, 8, 32>}]} {
    %c0 = arith.constant 0 : index
    %c0_0 = arith.constant 0 : index
    %c0_1 = arith.constant 0 : index
    %0 = vector.load %arg1[%c0, %c0_0, %c0_1] : memref<1x8x8xf32, #tpu.memory_space<vmem>>, vector<1x8x8xf32>
    %1 = vector.shape_cast %0 : vector<1x8x8xf32> to vector<8x8xf32>
    %c0_2 = arith.constant 0 : index
    %c0_3 = arith.constant 0 : index
    %2 = vector.load %arg3[%c0_2, %c0_3] : memref<8x32xf32, #tpu.memory_space<vmem>>, vector<8x32xf32>
    %cst = arith.constant dense<0.000000e+00> : vector<8x32xf32>
    %3 = tpu.matmul %1, %2, %cst {dimension_numbers = #tpu.dot_dimension_numbers<[1], [0], [0], [1], [0, 0, 1, 1], [], []>} : vector<8x8xf32>, vector<8x32xf32>, vector<8x32xf32> -> vector<8x32xf32>
    %c0_4 = arith.constant 0 : index
    %c0_5 = arith.constant 0 : index
    %4 = vector.load %arg4[%c0_4, %c0_5] : memref<1x32xf32, #tpu.memory_space<vmem>>, vector<1x32xf32>
    %5 = vector.broadcast %4 : vector<1x32xf32> to vector<8x32xf32>
    %6 = arith.addf %3, %5 : vector<8x32xf32>
    %cst_6 = arith.constant 5.65685415 : f32
    %7 = vector.broadcast %cst_6 : f32 to vector<8x32xf32>
    %8 = arith.mulf %6, %7 : vector<8x32xf32>
    %c0_7 = arith.constant 0 : index
    %c0_8 = arith.constant 0 : index
    %9 = vector.load %arg2[%c0_7, %c0_8] : memref<8x32xf32, #tpu.memory_space<vmem>>, vector<8x32xf32>
    %10 = arith.addf %8, %9 : vector<8x32xf32>
    %c0_9 = arith.constant 0 : index
    %c0_10 = arith.constant 0 : index
    %c0_11 = arith.constant 0 : index
    %11 = vector.load %arg5[%c0_9, %c0_10, %c0_11] : memref<2x1x32xf32, #tpu.memory_space<vmem>>, vector<1x1x32xf32>
    %12 = vector.shape_cast %11 : vector<1x1x32xf32> to vector<1x32xf32>
    %c0_12 = arith.constant 0 : index
    %c0_13 = arith.constant 0 : index
    %c0_14 = arith.constant 0 : index
    %13 = vector.load %arg6[%c0_12, %c0_13, %c0_14] : memref<2x1x32xf32, #tpu.memory_space<vmem>>, vector<1x1x32xf32>
    %14 = vector.shape_cast %13 : vector<1x1x32xf32> to vector<1x32xf32>
    %cst_15 = arith.constant dense<0.000000e+00> : vector<8xf32>
    %15 = vector.multi_reduction <add>, %10, %cst_15 [1] : vector<8x32xf32> to vector<8xf32>
    %16 = vector.shape_cast %15 : vector<8xf32> to vector<8x1xf32>
    %cst_16 = arith.constant 3.200000e+01 : f32
    %17 = vector.broadcast %cst_16 : f32 to vector<8x1xf32>
    %18 = arith.divf %16, %17 : vector<8x1xf32>
    %19 = vector.broadcast %18 : vector<8x1xf32> to vector<8x32xf32>
    %20 = arith.subf %10, %19 : vector<8x32xf32>
    %21 = arith.mulf %20, %20 : vector<8x32xf32>
    %cst_17 = arith.constant dense<0.000000e+00> : vector<8xf32>
    %22 = vector.multi_reduction <add>, %21, %cst_17 [1] : vector<8x32xf32> to vector<8xf32>
    %23 = vector.shape_cast %22 : vector<8xf32> to vector<8x1xf32>
    %cst_18 = arith.constant 0.0322580636 : f32
    %24 = vector.broadcast %cst_18 : f32 to vector<8x1xf32>
    %25 = arith.mulf %23, %24 : vector<8x1xf32>
    %26 = math.sqrt %25 : vector<8x1xf32>
    %cst_19 = arith.constant 9.99999997E-7 : f32
    %27 = vector.broadcast %cst_19 : f32 to vector<8x1xf32>
    %28 = arith.addf %26, %27 : vector<8x1xf32>
    %29 = vector.broadcast %28 : vector<8x1xf32> to vector<8x32xf32>
    %30 = arith.divf %20, %29 : vector<8x32xf32>
    %31 = vector.broadcast %12 : vector<1x32xf32> to vector<8x32xf32>
    %32 = arith.mulf %31, %30 : vector<8x32xf32>
    %33 = vector.broadcast %14 : vector<1x32xf32> to vector<8x32xf32>
    %34 = arith.addf %32, %33 : vector<8x32xf32>
    %c0_20 = arith.constant 0 : index
    %c0_21 = arith.constant 0 : index
    %c0_22 = arith.constant 0 : index
    %35 = vector.load %arg7[%c0_20, %c0_21, %c0_22] : memref<2x32x32xf32, #tpu.memory_space<vmem>>, vector<1x32x8xf32>
    %36 = vector.shape_cast %35 : vector<1x32x8xf32> to vector<32x8xf32>
    %cst_23 = arith.constant dense<0.000000e+00> : vector<8x8xf32>
    %37 = tpu.matmul %34, %36, %cst_23 {dimension_numbers = #tpu.dot_dimension_numbers<[1], [0], [0], [1], [0, 0, 1, 1], [], []>} : vector<8x32xf32>, vector<32x8xf32>, vector<8x8xf32> -> vector<8x8xf32>
    %c0_24 = arith.constant 0 : index
    %c0_25 = arith.constant 0 : index
    %c0_26 = arith.constant 0 : index
    %38 = vector.load %arg8[%c0_24, %c0_25, %c0_26] : memref<2x1x32xf32, #tpu.memory_space<vmem>>, vector<1x1x8xf32>
    %39 = vector.shape_cast %38 : vector<1x1x8xf32> to vector<1x8xf32>
    %40 = vector.broadcast %39 : vector<1x8xf32> to vector<8x8xf32>
    %41 = arith.addf %37, %40 : vector<8x8xf32>
    %c0_27 = arith.constant 0 : index
    %c0_28 = arith.constant 0 : index
    %c0_29 = arith.constant 0 : index
    %42 = vector.load %arg9[%c0_27, %c0_28, %c0_29] : memref<2x32x32xf32, #tpu.memory_space<vmem>>, vector<1x32x8xf32>
    %43 = vector.shape_cast %42 : vector<1x32x8xf32> to vector<32x8xf32>
    %cst_30 = arith.constant dense<0.000000e+00> : vector<8x8xf32>
    %44 = tpu.matmul %34, %43, %cst_30 {dimension_numbers = #tpu.dot_dimension_numbers<[1], [0], [0], [1], [0, 0, 1, 1], [], []>} : vector<8x32xf32>, vector<32x8xf32>, vector<8x8xf32> -> vector<8x8xf32>
    %c0_31 = arith.constant 0 : index
    %c0_32 = arith.constant 0 : index
    %c0_33 = arith.constant 0 : index
    %45 = vector.load %arg10[%c0_31, %c0_32, %c0_33] : memref<2x1x32xf32, #tpu.memory_space<vmem>>, vector<1x1x8xf32>
    %46 = vector.shape_cast %45 : vector<1x1x8xf32> to vector<1x8xf32>
    %47 = vector.broadcast %46 : vector<1x8xf32> to vector<8x8xf32>
    %48 = arith.addf %44, %47 : vector<8x8xf32>
    %cst_34 = arith.constant dense<0.000000e+00> : vector<8x8xf32>
    %49 = tpu.matmul %41, %48, %cst_34 {dimension_numbers = #tpu.dot_dimension_numbers<[1], [1], [0], [0], [0, 0, 1, 0], [], []>} : vector<8x8xf32>, vector<8x8xf32>, vector<8x8xf32> -> vector<8x8xf32>
    %cst_35 = arith.constant 0.353553385 : f32
    %50 = vector.broadcast %cst_35 : f32 to vector<8x8xf32>
    %51 = arith.mulf %49, %50 : vector<8x8xf32>
    %cst_36 = arith.constant dense<0xFF800000> : vector<8xf32>
    %52 = vector.multi_reduction <maximumf>, %51, %cst_36 [1] : vector<8x8xf32> to vector<8xf32>
    %53 = vector.shape_cast %52 : vector<8xf32> to vector<8x1xf32>
    %54 = vector.broadcast %53 : vector<8x1xf32> to vector<8x8xf32>
    %55 = arith.subf %51, %54 : vector<8x8xf32>
    %56 = math.exp %55 : vector<8x8xf32>
    %cst_37 = arith.constant dense<0.000000e+00> : vector<8xf32>
    %57 = vector.multi_reduction <add>, %56, %cst_37 [1] : vector<8x8xf32> to vector<8xf32>
    %58 = vector.shape_cast %57 : vector<8xf32> to vector<8x1xf32>
    %59 = vector.broadcast %58 : vector<8x1xf32> to vector<8x8xf32>
    %60 = arith.divf %56, %59 : vector<8x8xf32>
    %cst_38 = arith.constant dense<0.000000e+00> : vector<8x8xf32>
    %61 = tpu.matmul %60, %48, %cst_38 {dimension_numbers = #tpu.dot_dimension_numbers<[1], [0], [0], [1], [0, 0, 1, 1], [], []>} : vector<8x8xf32>, vector<8x8xf32>, vector<8x8xf32> -> vector<8x8xf32>
    %c0_39 = arith.constant 0 : index
    %c0_40 = arith.constant 0 : index
    %c0_41 = arith.constant 0 : index
    %62 = vector.load %arg11[%c0_39, %c0_40, %c0_41] : memref<2x32x32xf32, #tpu.memory_space<vmem>>, vector<1x8x32xf32>
    %63 = vector.shape_cast %62 : vector<1x8x32xf32> to vector<8x32xf32>
    %cst_42 = arith.constant dense<0.000000e+00> : vector<8x32xf32>
    %64 = tpu.matmul %61, %63, %cst_42 {dimension_numbers = #tpu.dot_dimension_numbers<[1], [0], [0], [1], [0, 0, 1, 1], [], []>} : vector<8x8xf32>, vector<8x32xf32>, vector<8x32xf32> -> vector<8x32xf32>
    %c0_43 = arith.constant 0 : index
    %c0_44 = arith.constant 0 : index
    %c8 = arith.constant 8 : index
    %65 = vector.load %arg7[%c0_43, %c0_44, %c8] : memref<2x32x32xf32, #tpu.memory_space<vmem>>, vector<1x32x8xf32>
    %66 = vector.shape_cast %65 : vector<1x32x8xf32> to vector<32x8xf32>
    %cst_45 = arith.constant dense<0.000000e+00> : vector<8x8xf32>
    %67 = tpu.matmul %34, %66, %cst_45 {dimension_numbers = #tpu.dot_dimension_numbers<[1], [0], [0], [1], [0, 0, 1, 1], [], []>} : vector<8x32xf32>, vector<32x8xf32>, vector<8x8xf32> -> vector<8x8xf32>
    %c0_46 = arith.constant 0 : index
    %c0_47 = arith.constant 0 : index
    %c8_48 = arith.constant 8 : index
    %68 = vector.load %arg8[%c0_46, %c0_47, %c8_48] : memref<2x1x32xf32, #tpu.memory_space<vmem>>, vector<1x1x8xf32>
    %69 = vector.shape_cast %68 : vector<1x1x8xf32> to vector<1x8xf32>
    %70 = vector.broadcast %69 : vector<1x8xf32> to vector<8x8xf32>
    %71 = arith.addf %67, %70 : vector<8x8xf32>
    %c0_49 = arith.constant 0 : index
    %c0_50 = arith.constant 0 : index
    %c8_51 = arith.constant 8 : index
    %72 = vector.load %arg9[%c0_49, %c0_50, %c8_51] : memref<2x32x32xf32, #tpu.memory_space<vmem>>, vector<1x32x8xf32>
    %73 = vector.shape_cast %72 : vector<1x32x8xf32> to vector<32x8xf32>
    %cst_52 = arith.constant dense<0.000000e+00> : vector<8x8xf32>
    %74 = tpu.matmul %34, %73, %cst_52 {dimension_numbers = #tpu.dot_dimension_numbers<[1], [0], [0], [1], [0, 0, 1, 1], [], []>} : vector<8x32xf32>, vector<32x8xf32>, vector<8x8xf32> -> vector<8x8xf32>
    %c0_53 = arith.constant 0 : index
    %c0_54 = arith.constant 0 : index
    %c8_55 = arith.constant 8 : index
    %75 = vector.load %arg10[%c0_53, %c0_54, %c8_55] : memref<2x1x32xf32, #tpu.memory_space<vmem>>, vector<1x1x8xf32>
    %76 = vector.shape_cast %75 : vector<1x1x8xf32> to vector<1x8xf32>
    %77 = vector.broadcast %76 : vector<1x8xf32> to vector<8x8xf32>
    %78 = arith.addf %74, %77 : vector<8x8xf32>
    %cst_56 = arith.constant dense<0.000000e+00> : vector<8x8xf32>
    %79 = tpu.matmul %71, %78, %cst_56 {dimension_numbers = #tpu.dot_dimension_numbers<[1], [1], [0], [0], [0, 0, 1, 0], [], []>} : vector<8x8xf32>, vector<8x8xf32>, vector<8x8xf32> -> vector<8x8xf32>
    %cst_57 = arith.constant 0.353553385 : f32
    %80 = vector.broadcast %cst_57 : f32 to vector<8x8xf32>
    %81 = arith.mulf %79, %80 : vector<8x8xf32>
    %cst_58 = arith.constant dense<0xFF800000> : vector<8xf32>
    %82 = vector.multi_reduction <maximumf>, %81, %cst_58 [1] : vector<8x8xf32> to vector<8xf32>
    %83 = vector.shape_cast %82 : vector<8xf32> to vector<8x1xf32>
    %84 = vector.broadcast %83 : vector<8x1xf32> to vector<8x8xf32>
    %85 = arith.subf %81, %84 : vector<8x8xf32>
    %86 = math.exp %85 : vector<8x8xf32>
    %cst_59 = arith.constant dense<0.000000e+00> : vector<8xf32>
    %87 = vector.multi_reduction <add>, %86, %cst_59 [1] : vector<8x8xf32> to vector<8xf32>
    %88 = vector.shape_cast %87 : vector<8xf32> to vector<8x1xf32>
    %89 = vector.broadcast %88 : vector<8x1xf32> to vector<8x8xf32>
    %90 = arith.divf %86, %89 : vector<8x8xf32>
    %cst_60 = arith.constant dense<0.000000e+00> : vector<8x8xf32>
    %91 = tpu.matmul %90, %78, %cst_60 {dimension_numbers = #tpu.dot_dimension_numbers<[1], [0], [0], [1], [0, 0, 1, 1], [], []>} : vector<8x8xf32>, vector<8x8xf32>, vector<8x8xf32> -> vector<8x8xf32>
    %c0_61 = arith.constant 0 : index
    %c8_62 = arith.constant 8 : index
    %c0_63 = arith.constant 0 : index
    %92 = vector.load %arg11[%c0_61, %c8_62, %c0_63] : memref<2x32x32xf32, #tpu.memory_space<vmem>>, vector<1x8x32xf32>
    %93 = vector.shape_cast %92 : vector<1x8x32xf32> to vector<8x32xf32>
    %cst_64 = arith.constant dense<0.000000e+00> : vector<8x32xf32>
    %94 = tpu.matmul %91, %93, %cst_64 {dimension_numbers = #tpu.dot_dimension_numbers<[1], [0], [0], [1], [0, 0, 1, 1], [], []>} : vector<8x8xf32>, vector<8x32xf32>, vector<8x32xf32> -> vector<8x32xf32>
    %95 = arith.addf %64, %94 : vector<8x32xf32>
    %c0_65 = arith.constant 0 : index
    %c0_66 = arith.constant 0 : index
    %c16 = arith.constant 16 : index
    %96 = vector.load %arg7[%c0_65, %c0_66, %c16] : memref<2x32x32xf32, #tpu.memory_space<vmem>>, vector<1x32x8xf32>
    %97 = vector.shape_cast %96 : vector<1x32x8xf32> to vector<32x8xf32>
    %cst_67 = arith.constant dense<0.000000e+00> : vector<8x8xf32>
    %98 = tpu.matmul %34, %97, %cst_67 {dimension_numbers = #tpu.dot_dimension_numbers<[1], [0], [0], [1], [0, 0, 1, 1], [], []>} : vector<8x32xf32>, vector<32x8xf32>, vector<8x8xf32> -> vector<8x8xf32>
    %c0_68 = arith.constant 0 : index
    %c0_69 = arith.constant 0 : index
    %c16_70 = arith.constant 16 : index
    %99 = vector.load %arg8[%c0_68, %c0_69, %c16_70] : memref<2x1x32xf32, #tpu.memory_space<vmem>>, vector<1x1x8xf32>
    %100 = vector.shape_cast %99 : vector<1x1x8xf32> to vector<1x8xf32>
    %101 = vector.broadcast %100 : vector<1x8xf32> to vector<8x8xf32>
    %102 = arith.addf %98, %101 : vector<8x8xf32>
    %c0_71 = arith.constant 0 : index
    %c0_72 = arith.constant 0 : index
    %c16_73 = arith.constant 16 : index
    %103 = vector.load %arg9[%c0_71, %c0_72, %c16_73] : memref<2x32x32xf32, #tpu.memory_space<vmem>>, vector<1x32x8xf32>
    %104 = vector.shape_cast %103 : vector<1x32x8xf32> to vector<32x8xf32>
    %cst_74 = arith.constant dense<0.000000e+00> : vector<8x8xf32>
    %105 = tpu.matmul %34, %104, %cst_74 {dimension_numbers = #tpu.dot_dimension_numbers<[1], [0], [0], [1], [0, 0, 1, 1], [], []>} : vector<8x32xf32>, vector<32x8xf32>, vector<8x8xf32> -> vector<8x8xf32>
    %c0_75 = arith.constant 0 : index
    %c0_76 = arith.constant 0 : index
    %c16_77 = arith.constant 16 : index
    %106 = vector.load %arg10[%c0_75, %c0_76, %c16_77] : memref<2x1x32xf32, #tpu.memory_space<vmem>>, vector<1x1x8xf32>
    %107 = vector.shape_cast %106 : vector<1x1x8xf32> to vector<1x8xf32>
    %108 = vector.broadcast %107 : vector<1x8xf32> to vector<8x8xf32>
    %109 = arith.addf %105, %108 : vector<8x8xf32>
    %cst_78 = arith.constant dense<0.000000e+00> : vector<8x8xf32>
    %110 = tpu.matmul %102, %109, %cst_78 {dimension_numbers = #tpu.dot_dimension_numbers<[1], [1], [0], [0], [0, 0, 1, 0], [], []>} : vector<8x8xf32>, vector<8x8xf32>, vector<8x8xf32> -> vector<8x8xf32>
    %cst_79 = arith.constant 0.353553385 : f32
    %111 = vector.broadcast %cst_79 : f32 to vector<8x8xf32>
    %112 = arith.mulf %110, %111 : vector<8x8xf32>
    %cst_80 = arith.constant dense<0xFF800000> : vector<8xf32>
    %113 = vector.multi_reduction <maximumf>, %112, %cst_80 [1] : vector<8x8xf32> to vector<8xf32>
    %114 = vector.shape_cast %113 : vector<8xf32> to vector<8x1xf32>
    %115 = vector.broadcast %114 : vector<8x1xf32> to vector<8x8xf32>
    %116 = arith.subf %112, %115 : vector<8x8xf32>
    %117 = math.exp %116 : vector<8x8xf32>
    %cst_81 = arith.constant dense<0.000000e+00> : vector<8xf32>
    %118 = vector.multi_reduction <add>, %117, %cst_81 [1] : vector<8x8xf32> to vector<8xf32>
    %119 = vector.shape_cast %118 : vector<8xf32> to vector<8x1xf32>
    %120 = vector.broadcast %119 : vector<8x1xf32> to vector<8x8xf32>
    %121 = arith.divf %117, %120 : vector<8x8xf32>
    %cst_82 = arith.constant dense<0.000000e+00> : vector<8x8xf32>
    %122 = tpu.matmul %121, %109, %cst_82 {dimension_numbers = #tpu.dot_dimension_numbers<[1], [0], [0], [1], [0, 0, 1, 1], [], []>} : vector<8x8xf32>, vector<8x8xf32>, vector<8x8xf32> -> vector<8x8xf32>
    %c0_83 = arith.constant 0 : index
    %c16_84 = arith.constant 16 : index
    %c0_85 = arith.constant 0 : index
    %123 = vector.load %arg11[%c0_83, %c16_84, %c0_85] : memref<2x32x32xf32, #tpu.memory_space<vmem>>, vector<1x8x32xf32>
    %124 = vector.shape_cast %123 : vector<1x8x32xf32> to vector<8x32xf32>
    %cst_86 = arith.constant dense<0.000000e+00> : vector<8x32xf32>
    %125 = tpu.matmul %122, %124, %cst_86 {dimension_numbers = #tpu.dot_dimension_numbers<[1], [0], [0], [1], [0, 0, 1, 1], [], []>} : vector<8x8xf32>, vector<8x32xf32>, vector<8x32xf32> -> vector<8x32xf32>
    %126 = arith.addf %95, %125 : vector<8x32xf32>
    %c0_87 = arith.constant 0 : index
    %c0_88 = arith.constant 0 : index
    %c24 = arith.constant 24 : index
    %127 = vector.load %arg7[%c0_87, %c0_88, %c24] : memref<2x32x32xf32, #tpu.memory_space<vmem>>, vector<1x32x8xf32>
    %128 = vector.shape_cast %127 : vector<1x32x8xf32> to vector<32x8xf32>
    %cst_89 = arith.constant dense<0.000000e+00> : vector<8x8xf32>
    %129 = tpu.matmul %34, %128, %cst_89 {dimension_numbers = #tpu.dot_dimension_numbers<[1], [0], [0], [1], [0, 0, 1, 1], [], []>} : vector<8x32xf32>, vector<32x8xf32>, vector<8x8xf32> -> vector<8x8xf32>
    %c0_90 = arith.constant 0 : index
    %c0_91 = arith.constant 0 : index
    %c24_92 = arith.constant 24 : index
    %130 = vector.load %arg8[%c0_90, %c0_91, %c24_92] : memref<2x1x32xf32, #tpu.memory_space<vmem>>, vector<1x1x8xf32>
    %131 = vector.shape_cast %130 : vector<1x1x8xf32> to vector<1x8xf32>
    %132 = vector.broadcast %131 : vector<1x8xf32> to vector<8x8xf32>
    %133 = arith.addf %129, %132 : vector<8x8xf32>
    %c0_93 = arith.constant 0 : index
    %c0_94 = arith.constant 0 : index
    %c24_95 = arith.constant 24 : index
    %134 = vector.load %arg9[%c0_93, %c0_94, %c24_95] : memref<2x32x32xf32, #tpu.memory_space<vmem>>, vector<1x32x8xf32>
    %135 = vector.shape_cast %134 : vector<1x32x8xf32> to vector<32x8xf32>
    %cst_96 = arith.constant dense<0.000000e+00> : vector<8x8xf32>
    %136 = tpu.matmul %34, %135, %cst_96 {dimension_numbers = #tpu.dot_dimension_numbers<[1], [0], [0], [1], [0, 0, 1, 1], [], []>} : vector<8x32xf32>, vector<32x8xf32>, vector<8x8xf32> -> vector<8x8xf32>
    %c0_97 = arith.constant 0 : index
    %c0_98 = arith.constant 0 : index
    %c24_99 = arith.constant 24 : index
    %137 = vector.load %arg10[%c0_97, %c0_98, %c24_99] : memref<2x1x32xf32, #tpu.memory_space<vmem>>, vector<1x1x8xf32>
    %138 = vector.shape_cast %137 : vector<1x1x8xf32> to vector<1x8xf32>
    %139 = vector.broadcast %138 : vector<1x8xf32> to vector<8x8xf32>
    %140 = arith.addf %136, %139 : vector<8x8xf32>
    %cst_100 = arith.constant dense<0.000000e+00> : vector<8x8xf32>
    %141 = tpu.matmul %133, %140, %cst_100 {dimension_numbers = #tpu.dot_dimension_numbers<[1], [1], [0], [0], [0, 0, 1, 0], [], []>} : vector<8x8xf32>, vector<8x8xf32>, vector<8x8xf32> -> vector<8x8xf32>
    %cst_101 = arith.constant 0.353553385 : f32
    %142 = vector.broadcast %cst_101 : f32 to vector<8x8xf32>
    %143 = arith.mulf %141, %142 : vector<8x8xf32>
    %cst_102 = arith.constant dense<0xFF800000> : vector<8xf32>
    %144 = vector.multi_reduction <maximumf>, %143, %cst_102 [1] : vector<8x8xf32> to vector<8xf32>
    %145 = vector.shape_cast %144 : vector<8xf32> to vector<8x1xf32>
    %146 = vector.broadcast %145 : vector<8x1xf32> to vector<8x8xf32>
    %147 = arith.subf %143, %146 : vector<8x8xf32>
    %148 = math.exp %147 : vector<8x8xf32>
    %cst_103 = arith.constant dense<0.000000e+00> : vector<8xf32>
    %149 = vector.multi_reduction <add>, %148, %cst_103 [1] : vector<8x8xf32> to vector<8xf32>
    %150 = vector.shape_cast %149 : vector<8xf32> to vector<8x1xf32>
    %151 = vector.broadcast %150 : vector<8x1xf32> to vector<8x8xf32>
    %152 = arith.divf %148, %151 : vector<8x8xf32>
    %cst_104 = arith.constant dense<0.000000e+00> : vector<8x8xf32>
    %153 = tpu.matmul %152, %140, %cst_104 {dimension_numbers = #tpu.dot_dimension_numbers<[1], [0], [0], [1], [0, 0, 1, 1], [], []>} : vector<8x8xf32>, vector<8x8xf32>, vector<8x8xf32> -> vector<8x8xf32>
    %c0_105 = arith.constant 0 : index
    %c24_106 = arith.constant 24 : index
    %c0_107 = arith.constant 0 : index
    %154 = vector.load %arg11[%c0_105, %c24_106, %c0_107] : memref<2x32x32xf32, #tpu.memory_space<vmem>>, vector<1x8x32xf32>
    %155 = vector.shape_cast %154 : vector<1x8x32xf32> to vector<8x32xf32>
    %cst_108 = arith.constant dense<0.000000e+00> : vector<8x32xf32>
    %156 = tpu.matmul %153, %155, %cst_108 {dimension_numbers = #tpu.dot_dimension_numbers<[1], [0], [0], [1], [0, 0, 1, 1], [], []>} : vector<8x8xf32>, vector<8x32xf32>, vector<8x32xf32> -> vector<8x32xf32>
    %157 = arith.addf %126, %156 : vector<8x32xf32>
    %158 = arith.addf %10, %157 : vector<8x32xf32>
    %c0_109 = arith.constant 0 : index
    %c0_110 = arith.constant 0 : index
    %c0_111 = arith.constant 0 : index
    %159 = vector.load %arg12[%c0_109, %c0_110, %c0_111] : memref<2x1x32xf32, #tpu.memory_space<vmem>>, vector<1x1x32xf32>
    %160 = vector.shape_cast %159 : vector<1x1x32xf32> to vector<1x32xf32>
    %161 = vector.broadcast %160 : vector<1x32xf32> to vector<8x32xf32>
    %162 = arith.addf %158, %161 : vector<8x32xf32>
    %c0_112 = arith.constant 0 : index
    %c0_113 = arith.constant 0 : index
    %c0_114 = arith.constant 0 : index
    %163 = vector.load %arg13[%c0_112, %c0_113, %c0_114] : memref<2x1x32xf32, #tpu.memory_space<vmem>>, vector<1x1x32xf32>
    %164 = vector.shape_cast %163 : vector<1x1x32xf32> to vector<1x32xf32>
    %c0_115 = arith.constant 0 : index
    %c0_116 = arith.constant 0 : index
    %c0_117 = arith.constant 0 : index
    %165 = vector.load %arg14[%c0_115, %c0_116, %c0_117] : memref<2x1x32xf32, #tpu.memory_space<vmem>>, vector<1x1x32xf32>
    %166 = vector.shape_cast %165 : vector<1x1x32xf32> to vector<1x32xf32>
    %cst_118 = arith.constant dense<0.000000e+00> : vector<8xf32>
    %167 = vector.multi_reduction <add>, %162, %cst_118 [1] : vector<8x32xf32> to vector<8xf32>
    %168 = vector.shape_cast %167 : vector<8xf32> to vector<8x1xf32>
    %cst_119 = arith.constant 3.200000e+01 : f32
    %169 = vector.broadcast %cst_119 : f32 to vector<8x1xf32>
    %170 = arith.divf %168, %169 : vector<8x1xf32>
    %171 = vector.broadcast %170 : vector<8x1xf32> to vector<8x32xf32>
    %172 = arith.subf %162, %171 : vector<8x32xf32>
    %173 = arith.mulf %172, %172 : vector<8x32xf32>
    %cst_120 = arith.constant dense<0.000000e+00> : vector<8xf32>
    %174 = vector.multi_reduction <add>, %173, %cst_120 [1] : vector<8x32xf32> to vector<8xf32>
    %175 = vector.shape_cast %174 : vector<8xf32> to vector<8x1xf32>
    %cst_121 = arith.constant 0.0322580636 : f32
    %176 = vector.broadcast %cst_121 : f32 to vector<8x1xf32>
    %177 = arith.mulf %175, %176 : vector<8x1xf32>
    %178 = math.sqrt %177 : vector<8x1xf32>
    %cst_122 = arith.constant 9.99999997E-7 : f32
    %179 = vector.broadcast %cst_122 : f32 to vector<8x1xf32>
    %180 = arith.addf %178, %179 : vector<8x1xf32>
    %181 = vector.broadcast %180 : vector<8x1xf32> to vector<8x32xf32>
    %182 = arith.divf %172, %181 : vector<8x32xf32>
    %183 = vector.broadcast %164 : vector<1x32xf32> to vector<8x32xf32>
    %184 = arith.mulf %183, %182 : vector<8x32xf32>
    %185 = vector.broadcast %166 : vector<1x32xf32> to vector<8x32xf32>
    %186 = arith.addf %184, %185 : vector<8x32xf32>
    %c0_123 = arith.constant 0 : index
    %c0_124 = arith.constant 0 : index
    %c0_125 = arith.constant 0 : index
    %187 = vector.load %arg15[%c0_123, %c0_124, %c0_125] : memref<2x32x64xf32, #tpu.memory_space<vmem>>, vector<1x32x64xf32>
    %188 = vector.shape_cast %187 : vector<1x32x64xf32> to vector<32x64xf32>
    %cst_126 = arith.constant dense<0.000000e+00> : vector<8x64xf32>
    %189 = tpu.matmul %186, %188, %cst_126 {dimension_numbers = #tpu.dot_dimension_numbers<[1], [0], [0], [1], [0, 0, 1, 1], [], []>} : vector<8x32xf32>, vector<32x64xf32>, vector<8x64xf32> -> vector<8x64xf32>
    %c0_127 = arith.constant 0 : index
    %c0_128 = arith.constant 0 : index
    %c0_129 = arith.constant 0 : index
    %190 = vector.load %arg16[%c0_127, %c0_128, %c0_129] : memref<2x1x64xf32, #tpu.memory_space<vmem>>, vector<1x1x64xf32>
    %191 = vector.shape_cast %190 : vector<1x1x64xf32> to vector<1x64xf32>
    %192 = vector.broadcast %191 : vector<1x64xf32> to vector<8x64xf32>
    %193 = arith.addf %189, %192 : vector<8x64xf32>
    %cst_130 = arith.constant 0.000000e+00 : f32
    %194 = vector.broadcast %cst_130 : f32 to vector<8x64xf32>
    %195 = arith.maximumf %193, %194 : vector<8x64xf32>
    %c0_131 = arith.constant 0 : index
    %c0_132 = arith.constant 0 : index
    %c0_133 = arith.constant 0 : index
    %196 = vector.load %arg17[%c0_131, %c0_132, %c0_133] : memref<2x64x32xf32, #tpu.memory_space<vmem>>, vector<1x64x32xf32>
    %197 = vector.shape_cast %196 : vector<1x64x32xf32> to vector<64x32xf32>
    %cst_134 = arith.constant dense<0.000000e+00> : vector<8x32xf32>
    %198 = tpu.matmul %195, %197, %cst_134 {dimension_numbers = #tpu.dot_dimension_numbers<[1], [0], [0], [1], [0, 0, 1, 1], [], []>} : vector<8x64xf32>, vector<64x32xf32>, vector<8x32xf32> -> vector<8x32xf32>
    %c0_135 = arith.constant 0 : index
    %c0_136 = arith.constant 0 : index
    %c0_137 = arith.constant 0 : index
    %199 = vector.load %arg18[%c0_135, %c0_136, %c0_137] : memref<2x1x32xf32, #tpu.memory_space<vmem>>, vector<1x1x32xf32>
    %200 = vector.shape_cast %199 : vector<1x1x32xf32> to vector<1x32xf32>
    %201 = vector.broadcast %200 : vector<1x32xf32> to vector<8x32xf32>
    %202 = arith.addf %198, %201 : vector<8x32xf32>
    %203 = arith.addf %162, %202 : vector<8x32xf32>
    %c1 = arith.constant 1 : index
    %c0_138 = arith.constant 0 : index
    %c0_139 = arith.constant 0 : index
    %204 = vector.load %arg5[%c1, %c0_138, %c0_139] : memref<2x1x32xf32, #tpu.memory_space<vmem>>, vector<1x1x32xf32>
    %205 = vector.shape_cast %204 : vector<1x1x32xf32> to vector<1x32xf32>
    %c1_140 = arith.constant 1 : index
    %c0_141 = arith.constant 0 : index
    %c0_142 = arith.constant 0 : index
    %206 = vector.load %arg6[%c1_140, %c0_141, %c0_142] : memref<2x1x32xf32, #tpu.memory_space<vmem>>, vector<1x1x32xf32>
    %207 = vector.shape_cast %206 : vector<1x1x32xf32> to vector<1x32xf32>
    %cst_143 = arith.constant dense<0.000000e+00> : vector<8xf32>
    %208 = vector.multi_reduction <add>, %203, %cst_143 [1] : vector<8x32xf32> to vector<8xf32>
    %209 = vector.shape_cast %208 : vector<8xf32> to vector<8x1xf32>
    %cst_144 = arith.constant 3.200000e+01 : f32
    %210 = vector.broadcast %cst_144 : f32 to vector<8x1xf32>
    %211 = arith.divf %209, %210 : vector<8x1xf32>
    %212 = vector.broadcast %211 : vector<8x1xf32> to vector<8x32xf32>
    %213 = arith.subf %203, %212 : vector<8x32xf32>
    %214 = arith.mulf %213, %213 : vector<8x32xf32>
    %cst_145 = arith.constant dense<0.000000e+00> : vector<8xf32>
    %215 = vector.multi_reduction <add>, %214, %cst_145 [1] : vector<8x32xf32> to vector<8xf32>
    %216 = vector.shape_cast %215 : vector<8xf32> to vector<8x1xf32>
    %cst_146 = arith.constant 0.0322580636 : f32
    %217 = vector.broadcast %cst_146 : f32 to vector<8x1xf32>
    %218 = arith.mulf %216, %217 : vector<8x1xf32>
    %219 = math.sqrt %218 : vector<8x1xf32>
    %cst_147 = arith.constant 9.99999997E-7 : f32
    %220 = vector.broadcast %cst_147 : f32 to vector<8x1xf32>
    %221 = arith.addf %219, %220 : vector<8x1xf32>
    %222 = vector.broadcast %221 : vector<8x1xf32> to vector<8x32xf32>
    %223 = arith.divf %213, %222 : vector<8x32xf32>
    %224 = vector.broadcast %205 : vector<1x32xf32> to vector<8x32xf32>
    %225 = arith.mulf %224, %223 : vector<8x32xf32>
    %226 = vector.broadcast %207 : vector<1x32xf32> to vector<8x32xf32>
    %227 = arith.addf %225, %226 : vector<8x32xf32>
    %c1_148 = arith.constant 1 : index
    %c0_149 = arith.constant 0 : index
    %c0_150 = arith.constant 0 : index
    %228 = vector.load %arg7[%c1_148, %c0_149, %c0_150] : memref<2x32x32xf32, #tpu.memory_space<vmem>>, vector<1x32x8xf32>
    %229 = vector.shape_cast %228 : vector<1x32x8xf32> to vector<32x8xf32>
    %cst_151 = arith.constant dense<0.000000e+00> : vector<8x8xf32>
    %230 = tpu.matmul %227, %229, %cst_151 {dimension_numbers = #tpu.dot_dimension_numbers<[1], [0], [0], [1], [0, 0, 1, 1], [], []>} : vector<8x32xf32>, vector<32x8xf32>, vector<8x8xf32> -> vector<8x8xf32>
    %c1_152 = arith.constant 1 : index
    %c0_153 = arith.constant 0 : index
    %c0_154 = arith.constant 0 : index
    %231 = vector.load %arg8[%c1_152, %c0_153, %c0_154] : memref<2x1x32xf32, #tpu.memory_space<vmem>>, vector<1x1x8xf32>
    %232 = vector.shape_cast %231 : vector<1x1x8xf32> to vector<1x8xf32>
    %233 = vector.broadcast %232 : vector<1x8xf32> to vector<8x8xf32>
    %234 = arith.addf %230, %233 : vector<8x8xf32>
    %c1_155 = arith.constant 1 : index
    %c0_156 = arith.constant 0 : index
    %c0_157 = arith.constant 0 : index
    %235 = vector.load %arg9[%c1_155, %c0_156, %c0_157] : memref<2x32x32xf32, #tpu.memory_space<vmem>>, vector<1x32x8xf32>
    %236 = vector.shape_cast %235 : vector<1x32x8xf32> to vector<32x8xf32>
    %cst_158 = arith.constant dense<0.000000e+00> : vector<8x8xf32>
    %237 = tpu.matmul %227, %236, %cst_158 {dimension_numbers = #tpu.dot_dimension_numbers<[1], [0], [0], [1], [0, 0, 1, 1], [], []>} : vector<8x32xf32>, vector<32x8xf32>, vector<8x8xf32> -> vector<8x8xf32>
    %c1_159 = arith.constant 1 : index
    %c0_160 = arith.constant 0 : index
    %c0_161 = arith.constant 0 : index
    %238 = vector.load %arg10[%c1_159, %c0_160, %c0_161] : memref<2x1x32xf32, #tpu.memory_space<vmem>>, vector<1x1x8xf32>
    %239 = vector.shape_cast %238 : vector<1x1x8xf32> to vector<1x8xf32>
    %240 = vector.broadcast %239 : vector<1x8xf32> to vector<8x8xf32>
    %241 = arith.addf %237, %240 : vector<8x8xf32>
    %cst_162 = arith.constant dense<0.000000e+00> : vector<8x8xf32>
    %242 = tpu.matmul %234, %241, %cst_162 {dimension_numbers = #tpu.dot_dimension_numbers<[1], [1], [0], [0], [0, 0, 1, 0], [], []>} : vector<8x8xf32>, vector<8x8xf32>, vector<8x8xf32> -> vector<8x8xf32>
    %cst_163 = arith.constant 0.353553385 : f32
    %243 = vector.broadcast %cst_163 : f32 to vector<8x8xf32>
    %244 = arith.mulf %242, %243 : vector<8x8xf32>
    %cst_164 = arith.constant dense<0xFF800000> : vector<8xf32>
    %245 = vector.multi_reduction <maximumf>, %244, %cst_164 [1] : vector<8x8xf32> to vector<8xf32>
    %246 = vector.shape_cast %245 : vector<8xf32> to vector<8x1xf32>
    %247 = vector.broadcast %246 : vector<8x1xf32> to vector<8x8xf32>
    %248 = arith.subf %244, %247 : vector<8x8xf32>
    %249 = math.exp %248 : vector<8x8xf32>
    %cst_165 = arith.constant dense<0.000000e+00> : vector<8xf32>
    %250 = vector.multi_reduction <add>, %249, %cst_165 [1] : vector<8x8xf32> to vector<8xf32>
    %251 = vector.shape_cast %250 : vector<8xf32> to vector<8x1xf32>
    %252 = vector.broadcast %251 : vector<8x1xf32> to vector<8x8xf32>
    %253 = arith.divf %249, %252 : vector<8x8xf32>
    %cst_166 = arith.constant dense<0.000000e+00> : vector<8x8xf32>
    %254 = tpu.matmul %253, %241, %cst_166 {dimension_numbers = #tpu.dot_dimension_numbers<[1], [0], [0], [1], [0, 0, 1, 1], [], []>} : vector<8x8xf32>, vector<8x8xf32>, vector<8x8xf32> -> vector<8x8xf32>
    %c1_167 = arith.constant 1 : index
    %c0_168 = arith.constant 0 : index
    %c0_169 = arith.constant 0 : index
    %255 = vector.load %arg11[%c1_167, %c0_168, %c0_169] : memref<2x32x32xf32, #tpu.memory_space<vmem>>, vector<1x8x32xf32>
    %256 = vector.shape_cast %255 : vector<1x8x32xf32> to vector<8x32xf32>
    %cst_170 = arith.constant dense<0.000000e+00> : vector<8x32xf32>
    %257 = tpu.matmul %254, %256, %cst_170 {dimension_numbers = #tpu.dot_dimension_numbers<[1], [0], [0], [1], [0, 0, 1, 1], [], []>} : vector<8x8xf32>, vector<8x32xf32>, vector<8x32xf32> -> vector<8x32xf32>
    %c1_171 = arith.constant 1 : index
    %c0_172 = arith.constant 0 : index
    %c8_173 = arith.constant 8 : index
    %258 = vector.load %arg7[%c1_171, %c0_172, %c8_173] : memref<2x32x32xf32, #tpu.memory_space<vmem>>, vector<1x32x8xf32>
    %259 = vector.shape_cast %258 : vector<1x32x8xf32> to vector<32x8xf32>
    %cst_174 = arith.constant dense<0.000000e+00> : vector<8x8xf32>
    %260 = tpu.matmul %227, %259, %cst_174 {dimension_numbers = #tpu.dot_dimension_numbers<[1], [0], [0], [1], [0, 0, 1, 1], [], []>} : vector<8x32xf32>, vector<32x8xf32>, vector<8x8xf32> -> vector<8x8xf32>
    %c1_175 = arith.constant 1 : index
    %c0_176 = arith.constant 0 : index
    %c8_177 = arith.constant 8 : index
    %261 = vector.load %arg8[%c1_175, %c0_176, %c8_177] : memref<2x1x32xf32, #tpu.memory_space<vmem>>, vector<1x1x8xf32>
    %262 = vector.shape_cast %261 : vector<1x1x8xf32> to vector<1x8xf32>
    %263 = vector.broadcast %262 : vector<1x8xf32> to vector<8x8xf32>
    %264 = arith.addf %260, %263 : vector<8x8xf32>
    %c1_178 = arith.constant 1 : index
    %c0_179 = arith.constant 0 : index
    %c8_180 = arith.constant 8 : index
    %265 = vector.load %arg9[%c1_178, %c0_179, %c8_180] : memref<2x32x32xf32, #tpu.memory_space<vmem>>, vector<1x32x8xf32>
    %266 = vector.shape_cast %265 : vector<1x32x8xf32> to vector<32x8xf32>
    %cst_181 = arith.constant dense<0.000000e+00> : vector<8x8xf32>
    %267 = tpu.matmul %227, %266, %cst_181 {dimension_numbers = #tpu.dot_dimension_numbers<[1], [0], [0], [1], [0, 0, 1, 1], [], []>} : vector<8x32xf32>, vector<32x8xf32>, vector<8x8xf32> -> vector<8x8xf32>
    %c1_182 = arith.constant 1 : index
    %c0_183 = arith.constant 0 : index
    %c8_184 = arith.constant 8 : index
    %268 = vector.load %arg10[%c1_182, %c0_183, %c8_184] : memref<2x1x32xf32, #tpu.memory_space<vmem>>, vector<1x1x8xf32>
    %269 = vector.shape_cast %268 : vector<1x1x8xf32> to vector<1x8xf32>
    %270 = vector.broadcast %269 : vector<1x8xf32> to vector<8x8xf32>
    %271 = arith.addf %267, %270 : vector<8x8xf32>
    %cst_185 = arith.constant dense<0.000000e+00> : vector<8x8xf32>
    %272 = tpu.matmul %264, %271, %cst_185 {dimension_numbers = #tpu.dot_dimension_numbers<[1], [1], [0], [0], [0, 0, 1, 0], [], []>} : vector<8x8xf32>, vector<8x8xf32>, vector<8x8xf32> -> vector<8x8xf32>
    %cst_186 = arith.constant 0.353553385 : f32
    %273 = vector.broadcast %cst_186 : f32 to vector<8x8xf32>
    %274 = arith.mulf %272, %273 : vector<8x8xf32>
    %cst_187 = arith.constant dense<0xFF800000> : vector<8xf32>
    %275 = vector.multi_reduction <maximumf>, %274, %cst_187 [1] : vector<8x8xf32> to vector<8xf32>
    %276 = vector.shape_cast %275 : vector<8xf32> to vector<8x1xf32>
    %277 = vector.broadcast %276 : vector<8x1xf32> to vector<8x8xf32>
    %278 = arith.subf %274, %277 : vector<8x8xf32>
    %279 = math.exp %278 : vector<8x8xf32>
    %cst_188 = arith.constant dense<0.000000e+00> : vector<8xf32>
    %280 = vector.multi_reduction <add>, %279, %cst_188 [1] : vector<8x8xf32> to vector<8xf32>
    %281 = vector.shape_cast %280 : vector<8xf32> to vector<8x1xf32>
    %282 = vector.broadcast %281 : vector<8x1xf32> to vector<8x8xf32>
    %283 = arith.divf %279, %282 : vector<8x8xf32>
    %cst_189 = arith.constant dense<0.000000e+00> : vector<8x8xf32>
    %284 = tpu.matmul %283, %271, %cst_189 {dimension_numbers = #tpu.dot_dimension_numbers<[1], [0], [0], [1], [0, 0, 1, 1], [], []>} : vector<8x8xf32>, vector<8x8xf32>, vector<8x8xf32> -> vector<8x8xf32>
    %c1_190 = arith.constant 1 : index
    %c8_191 = arith.constant 8 : index
    %c0_192 = arith.constant 0 : index
    %285 = vector.load %arg11[%c1_190, %c8_191, %c0_192] : memref<2x32x32xf32, #tpu.memory_space<vmem>>, vector<1x8x32xf32>
    %286 = vector.shape_cast %285 : vector<1x8x32xf32> to vector<8x32xf32>
    %cst_193 = arith.constant dense<0.000000e+00> : vector<8x32xf32>
    %287 = tpu.matmul %284, %286, %cst_193 {dimension_numbers = #tpu.dot_dimension_numbers<[1], [0], [0], [1], [0, 0, 1, 1], [], []>} : vector<8x8xf32>, vector<8x32xf32>, vector<8x32xf32> -> vector<8x32xf32>
    %288 = arith.addf %257, %287 : vector<8x32xf32>
    %c1_194 = arith.constant 1 : index
    %c0_195 = arith.constant 0 : index
    %c16_196 = arith.constant 16 : index
    %289 = vector.load %arg7[%c1_194, %c0_195, %c16_196] : memref<2x32x32xf32, #tpu.memory_space<vmem>>, vector<1x32x8xf32>
    %290 = vector.shape_cast %289 : vector<1x32x8xf32> to vector<32x8xf32>
    %cst_197 = arith.constant dense<0.000000e+00> : vector<8x8xf32>
    %291 = tpu.matmul %227, %290, %cst_197 {dimension_numbers = #tpu.dot_dimension_numbers<[1], [0], [0], [1], [0, 0, 1, 1], [], []>} : vector<8x32xf32>, vector<32x8xf32>, vector<8x8xf32> -> vector<8x8xf32>
    %c1_198 = arith.constant 1 : index
    %c0_199 = arith.constant 0 : index
    %c16_200 = arith.constant 16 : index
    %292 = vector.load %arg8[%c1_198, %c0_199, %c16_200] : memref<2x1x32xf32, #tpu.memory_space<vmem>>, vector<1x1x8xf32>
    %293 = vector.shape_cast %292 : vector<1x1x8xf32> to vector<1x8xf32>
    %294 = vector.broadcast %293 : vector<1x8xf32> to vector<8x8xf32>
    %295 = arith.addf %291, %294 : vector<8x8xf32>
    %c1_201 = arith.constant 1 : index
    %c0_202 = arith.constant 0 : index
    %c16_203 = arith.constant 16 : index
    %296 = vector.load %arg9[%c1_201, %c0_202, %c16_203] : memref<2x32x32xf32, #tpu.memory_space<vmem>>, vector<1x32x8xf32>
    %297 = vector.shape_cast %296 : vector<1x32x8xf32> to vector<32x8xf32>
    %cst_204 = arith.constant dense<0.000000e+00> : vector<8x8xf32>
    %298 = tpu.matmul %227, %297, %cst_204 {dimension_numbers = #tpu.dot_dimension_numbers<[1], [0], [0], [1], [0, 0, 1, 1], [], []>} : vector<8x32xf32>, vector<32x8xf32>, vector<8x8xf32> -> vector<8x8xf32>
    %c1_205 = arith.constant 1 : index
    %c0_206 = arith.constant 0 : index
    %c16_207 = arith.constant 16 : index
    %299 = vector.load %arg10[%c1_205, %c0_206, %c16_207] : memref<2x1x32xf32, #tpu.memory_space<vmem>>, vector<1x1x8xf32>
    %300 = vector.shape_cast %299 : vector<1x1x8xf32> to vector<1x8xf32>
    %301 = vector.broadcast %300 : vector<1x8xf32> to vector<8x8xf32>
    %302 = arith.addf %298, %301 : vector<8x8xf32>
    %cst_208 = arith.constant dense<0.000000e+00> : vector<8x8xf32>
    %303 = tpu.matmul %295, %302, %cst_208 {dimension_numbers = #tpu.dot_dimension_numbers<[1], [1], [0], [0], [0, 0, 1, 0], [], []>} : vector<8x8xf32>, vector<8x8xf32>, vector<8x8xf32> -> vector<8x8xf32>
    %cst_209 = arith.constant 0.353553385 : f32
    %304 = vector.broadcast %cst_209 : f32 to vector<8x8xf32>
    %305 = arith.mulf %303, %304 : vector<8x8xf32>
    %cst_210 = arith.constant dense<0xFF800000> : vector<8xf32>
    %306 = vector.multi_reduction <maximumf>, %305, %cst_210 [1] : vector<8x8xf32> to vector<8xf32>
    %307 = vector.shape_cast %306 : vector<8xf32> to vector<8x1xf32>
    %308 = vector.broadcast %307 : vector<8x1xf32> to vector<8x8xf32>
    %309 = arith.subf %305, %308 : vector<8x8xf32>
    %310 = math.exp %309 : vector<8x8xf32>
    %cst_211 = arith.constant dense<0.000000e+00> : vector<8xf32>
    %311 = vector.multi_reduction <add>, %310, %cst_211 [1] : vector<8x8xf32> to vector<8xf32>
    %312 = vector.shape_cast %311 : vector<8xf32> to vector<8x1xf32>
    %313 = vector.broadcast %312 : vector<8x1xf32> to vector<8x8xf32>
    %314 = arith.divf %310, %313 : vector<8x8xf32>
    %cst_212 = arith.constant dense<0.000000e+00> : vector<8x8xf32>
    %315 = tpu.matmul %314, %302, %cst_212 {dimension_numbers = #tpu.dot_dimension_numbers<[1], [0], [0], [1], [0, 0, 1, 1], [], []>} : vector<8x8xf32>, vector<8x8xf32>, vector<8x8xf32> -> vector<8x8xf32>
    %c1_213 = arith.constant 1 : index
    %c16_214 = arith.constant 16 : index
    %c0_215 = arith.constant 0 : index
    %316 = vector.load %arg11[%c1_213, %c16_214, %c0_215] : memref<2x32x32xf32, #tpu.memory_space<vmem>>, vector<1x8x32xf32>
    %317 = vector.shape_cast %316 : vector<1x8x32xf32> to vector<8x32xf32>
    %cst_216 = arith.constant dense<0.000000e+00> : vector<8x32xf32>
    %318 = tpu.matmul %315, %317, %cst_216 {dimension_numbers = #tpu.dot_dimension_numbers<[1], [0], [0], [1], [0, 0, 1, 1], [], []>} : vector<8x8xf32>, vector<8x32xf32>, vector<8x32xf32> -> vector<8x32xf32>
    %319 = arith.addf %288, %318 : vector<8x32xf32>
    %c1_217 = arith.constant 1 : index
    %c0_218 = arith.constant 0 : index
    %c24_219 = arith.constant 24 : index
    %320 = vector.load %arg7[%c1_217, %c0_218, %c24_219] : memref<2x32x32xf32, #tpu.memory_space<vmem>>, vector<1x32x8xf32>
    %321 = vector.shape_cast %320 : vector<1x32x8xf32> to vector<32x8xf32>
    %cst_220 = arith.constant dense<0.000000e+00> : vector<8x8xf32>
    %322 = tpu.matmul %227, %321, %cst_220 {dimension_numbers = #tpu.dot_dimension_numbers<[1], [0], [0], [1], [0, 0, 1, 1], [], []>} : vector<8x32xf32>, vector<32x8xf32>, vector<8x8xf32> -> vector<8x8xf32>
    %c1_221 = arith.constant 1 : index
    %c0_222 = arith.constant 0 : index
    %c24_223 = arith.constant 24 : index
    %323 = vector.load %arg8[%c1_221, %c0_222, %c24_223] : memref<2x1x32xf32, #tpu.memory_space<vmem>>, vector<1x1x8xf32>
    %324 = vector.shape_cast %323 : vector<1x1x8xf32> to vector<1x8xf32>
    %325 = vector.broadcast %324 : vector<1x8xf32> to vector<8x8xf32>
    %326 = arith.addf %322, %325 : vector<8x8xf32>
    %c1_224 = arith.constant 1 : index
    %c0_225 = arith.constant 0 : index
    %c24_226 = arith.constant 24 : index
    %327 = vector.load %arg9[%c1_224, %c0_225, %c24_226] : memref<2x32x32xf32, #tpu.memory_space<vmem>>, vector<1x32x8xf32>
    %328 = vector.shape_cast %327 : vector<1x32x8xf32> to vector<32x8xf32>
    %cst_227 = arith.constant dense<0.000000e+00> : vector<8x8xf32>
    %329 = tpu.matmul %227, %328, %cst_227 {dimension_numbers = #tpu.dot_dimension_numbers<[1], [0], [0], [1], [0, 0, 1, 1], [], []>} : vector<8x32xf32>, vector<32x8xf32>, vector<8x8xf32> -> vector<8x8xf32>
    %c1_228 = arith.constant 1 : index
    %c0_229 = arith.constant 0 : index
    %c24_230 = arith.constant 24 : index
    %330 = vector.load %arg10[%c1_228, %c0_229, %c24_230] : memref<2x1x32xf32, #tpu.memory_space<vmem>>, vector<1x1x8xf32>
    %331 = vector.shape_cast %330 : vector<1x1x8xf32> to vector<1x8xf32>
    %332 = vector.broadcast %331 : vector<1x8xf32> to vector<8x8xf32>
    %333 = arith.addf %329, %332 : vector<8x8xf32>
    %cst_231 = arith.constant dense<0.000000e+00> : vector<8x8xf32>
    %334 = tpu.matmul %326, %333, %cst_231 {dimension_numbers = #tpu.dot_dimension_numbers<[1], [1], [0], [0], [0, 0, 1, 0], [], []>} : vector<8x8xf32>, vector<8x8xf32>, vector<8x8xf32> -> vector<8x8xf32>
    %cst_232 = arith.constant 0.353553385 : f32
    %335 = vector.broadcast %cst_232 : f32 to vector<8x8xf32>
    %336 = arith.mulf %334, %335 : vector<8x8xf32>
    %cst_233 = arith.constant dense<0xFF800000> : vector<8xf32>
    %337 = vector.multi_reduction <maximumf>, %336, %cst_233 [1] : vector<8x8xf32> to vector<8xf32>
    %338 = vector.shape_cast %337 : vector<8xf32> to vector<8x1xf32>
    %339 = vector.broadcast %338 : vector<8x1xf32> to vector<8x8xf32>
    %340 = arith.subf %336, %339 : vector<8x8xf32>
    %341 = math.exp %340 : vector<8x8xf32>
    %cst_234 = arith.constant dense<0.000000e+00> : vector<8xf32>
    %342 = vector.multi_reduction <add>, %341, %cst_234 [1] : vector<8x8xf32> to vector<8xf32>
    %343 = vector.shape_cast %342 : vector<8xf32> to vector<8x1xf32>
    %344 = vector.broadcast %343 : vector<8x1xf32> to vector<8x8xf32>
    %345 = arith.divf %341, %344 : vector<8x8xf32>
    %cst_235 = arith.constant dense<0.000000e+00> : vector<8x8xf32>
    %346 = tpu.matmul %345, %333, %cst_235 {dimension_numbers = #tpu.dot_dimension_numbers<[1], [0], [0], [1], [0, 0, 1, 1], [], []>} : vector<8x8xf32>, vector<8x8xf32>, vector<8x8xf32> -> vector<8x8xf32>
    %c1_236 = arith.constant 1 : index
    %c24_237 = arith.constant 24 : index
    %c0_238 = arith.constant 0 : index
    %347 = vector.load %arg11[%c1_236, %c24_237, %c0_238] : memref<2x32x32xf32, #tpu.memory_space<vmem>>, vector<1x8x32xf32>
    %348 = vector.shape_cast %347 : vector<1x8x32xf32> to vector<8x32xf32>
    %cst_239 = arith.constant dense<0.000000e+00> : vector<8x32xf32>
    %349 = tpu.matmul %346, %348, %cst_239 {dimension_numbers = #tpu.dot_dimension_numbers<[1], [0], [0], [1], [0, 0, 1, 1], [], []>} : vector<8x8xf32>, vector<8x32xf32>, vector<8x32xf32> -> vector<8x32xf32>
    %350 = arith.addf %319, %349 : vector<8x32xf32>
    %351 = arith.addf %203, %350 : vector<8x32xf32>
    %c1_240 = arith.constant 1 : index
    %c0_241 = arith.constant 0 : index
    %c0_242 = arith.constant 0 : index
    %352 = vector.load %arg12[%c1_240, %c0_241, %c0_242] : memref<2x1x32xf32, #tpu.memory_space<vmem>>, vector<1x1x32xf32>
    %353 = vector.shape_cast %352 : vector<1x1x32xf32> to vector<1x32xf32>
    %354 = vector.broadcast %353 : vector<1x32xf32> to vector<8x32xf32>
    %355 = arith.addf %351, %354 : vector<8x32xf32>
    %c1_243 = arith.constant 1 : index
    %c0_244 = arith.constant 0 : index
    %c0_245 = arith.constant 0 : index
    %356 = vector.load %arg13[%c1_243, %c0_244, %c0_245] : memref<2x1x32xf32, #tpu.memory_space<vmem>>, vector<1x1x32xf32>
    %357 = vector.shape_cast %356 : vector<1x1x32xf32> to vector<1x32xf32>
    %c1_246 = arith.constant 1 : index
    %c0_247 = arith.constant 0 : index
    %c0_248 = arith.constant 0 : index
    %358 = vector.load %arg14[%c1_246, %c0_247, %c0_248] : memref<2x1x32xf32, #tpu.memory_space<vmem>>, vector<1x1x32xf32>
    %359 = vector.shape_cast %358 : vector<1x1x32xf32> to vector<1x32xf32>
    %cst_249 = arith.constant dense<0.000000e+00> : vector<8xf32>
    %360 = vector.multi_reduction <add>, %355, %cst_249 [1] : vector<8x32xf32> to vector<8xf32>
    %361 = vector.shape_cast %360 : vector<8xf32> to vector<8x1xf32>
    %cst_250 = arith.constant 3.200000e+01 : f32
    %362 = vector.broadcast %cst_250 : f32 to vector<8x1xf32>
    %363 = arith.divf %361, %362 : vector<8x1xf32>
    %364 = vector.broadcast %363 : vector<8x1xf32> to vector<8x32xf32>
    %365 = arith.subf %355, %364 : vector<8x32xf32>
    %366 = arith.mulf %365, %365 : vector<8x32xf32>
    %cst_251 = arith.constant dense<0.000000e+00> : vector<8xf32>
    %367 = vector.multi_reduction <add>, %366, %cst_251 [1] : vector<8x32xf32> to vector<8xf32>
    %368 = vector.shape_cast %367 : vector<8xf32> to vector<8x1xf32>
    %cst_252 = arith.constant 0.0322580636 : f32
    %369 = vector.broadcast %cst_252 : f32 to vector<8x1xf32>
    %370 = arith.mulf %368, %369 : vector<8x1xf32>
    %371 = math.sqrt %370 : vector<8x1xf32>
    %cst_253 = arith.constant 9.99999997E-7 : f32
    %372 = vector.broadcast %cst_253 : f32 to vector<8x1xf32>
    %373 = arith.addf %371, %372 : vector<8x1xf32>
    %374 = vector.broadcast %373 : vector<8x1xf32> to vector<8x32xf32>
    %375 = arith.divf %365, %374 : vector<8x32xf32>
    %376 = vector.broadcast %357 : vector<1x32xf32> to vector<8x32xf32>
    %377 = arith.mulf %376, %375 : vector<8x32xf32>
    %378 = vector.broadcast %359 : vector<1x32xf32> to vector<8x32xf32>
    %379 = arith.addf %377, %378 : vector<8x32xf32>
    %c1_254 = arith.constant 1 : index
    %c0_255 = arith.constant 0 : index
    %c0_256 = arith.constant 0 : index
    %380 = vector.load %arg15[%c1_254, %c0_255, %c0_256] : memref<2x32x64xf32, #tpu.memory_space<vmem>>, vector<1x32x64xf32>
    %381 = vector.shape_cast %380 : vector<1x32x64xf32> to vector<32x64xf32>
    %cst_257 = arith.constant dense<0.000000e+00> : vector<8x64xf32>
    %382 = tpu.matmul %379, %381, %cst_257 {dimension_numbers = #tpu.dot_dimension_numbers<[1], [0], [0], [1], [0, 0, 1, 1], [], []>} : vector<8x32xf32>, vector<32x64xf32>, vector<8x64xf32> -> vector<8x64xf32>
    %c1_258 = arith.constant 1 : index
    %c0_259 = arith.constant 0 : index
    %c0_260 = arith.constant 0 : index
    %383 = vector.load %arg16[%c1_258, %c0_259, %c0_260] : memref<2x1x64xf32, #tpu.memory_space<vmem>>, vector<1x1x64xf32>
    %384 = vector.shape_cast %383 : vector<1x1x64xf32> to vector<1x64xf32>
    %385 = vector.broadcast %384 : vector<1x64xf32> to vector<8x64xf32>
    %386 = arith.addf %382, %385 : vector<8x64xf32>
    %cst_261 = arith.constant 0.000000e+00 : f32
    %387 = vector.broadcast %cst_261 : f32 to vector<8x64xf32>
    %388 = arith.maximumf %386, %387 : vector<8x64xf32>
    %c1_262 = arith.constant 1 : index
    %c0_263 = arith.constant 0 : index
    %c0_264 = arith.constant 0 : index
    %389 = vector.load %arg17[%c1_262, %c0_263, %c0_264] : memref<2x64x32xf32, #tpu.memory_space<vmem>>, vector<1x64x32xf32>
    %390 = vector.shape_cast %389 : vector<1x64x32xf32> to vector<64x32xf32>
    %cst_265 = arith.constant dense<0.000000e+00> : vector<8x32xf32>
    %391 = tpu.matmul %388, %390, %cst_265 {dimension_numbers = #tpu.dot_dimension_numbers<[1], [0], [0], [1], [0, 0, 1, 1], [], []>} : vector<8x64xf32>, vector<64x32xf32>, vector<8x32xf32> -> vector<8x32xf32>
    %c1_266 = arith.constant 1 : index
    %c0_267 = arith.constant 0 : index
    %c0_268 = arith.constant 0 : index
    %392 = vector.load %arg18[%c1_266, %c0_267, %c0_268] : memref<2x1x32xf32, #tpu.memory_space<vmem>>, vector<1x1x32xf32>
    %393 = vector.shape_cast %392 : vector<1x1x32xf32> to vector<1x32xf32>
    %394 = vector.broadcast %393 : vector<1x32xf32> to vector<8x32xf32>
    %395 = arith.addf %391, %394 : vector<8x32xf32>
    %396 = arith.addf %355, %395 : vector<8x32xf32>
    %c0_269 = arith.constant 0 : index
    %c0_270 = arith.constant 0 : index
    %397 = vector.load %arg19[%c0_269, %c0_270] : memref<1x32xf32, #tpu.memory_space<vmem>>, vector<1x32xf32>
    %c0_271 = arith.constant 0 : index
    %c0_272 = arith.constant 0 : index
    %398 = vector.load %arg20[%c0_271, %c0_272] : memref<1x32xf32, #tpu.memory_space<vmem>>, vector<1x32xf32>
    %cst_273 = arith.constant dense<0.000000e+00> : vector<8xf32>
    %399 = vector.multi_reduction <add>, %396, %cst_273 [1] : vector<8x32xf32> to vector<8xf32>
    %400 = vector.shape_cast %399 : vector<8xf32> to vector<8x1xf32>
    %cst_274 = arith.constant 3.200000e+01 : f32
    %401 = vector.broadcast %cst_274 : f32 to vector<8x1xf32>
    %402 = arith.divf %400, %401 : vector<8x1xf32>
    %403 = vector.broadcast %402 : vector<8x1xf32> to vector<8x32xf32>
    %404 = arith.subf %396, %403 : vector<8x32xf32>
    %405 = arith.mulf %404, %404 : vector<8x32xf32>
    %cst_275 = arith.constant dense<0.000000e+00> : vector<8xf32>
    %406 = vector.multi_reduction <add>, %405, %cst_275 [1] : vector<8x32xf32> to vector<8xf32>
    %407 = vector.shape_cast %406 : vector<8xf32> to vector<8x1xf32>
    %cst_276 = arith.constant 0.0322580636 : f32
    %408 = vector.broadcast %cst_276 : f32 to vector<8x1xf32>
    %409 = arith.mulf %407, %408 : vector<8x1xf32>
    %410 = math.sqrt %409 : vector<8x1xf32>
    %cst_277 = arith.constant 9.99999997E-7 : f32
    %411 = vector.broadcast %cst_277 : f32 to vector<8x1xf32>
    %412 = arith.addf %410, %411 : vector<8x1xf32>
    %413 = vector.broadcast %412 : vector<8x1xf32> to vector<8x32xf32>
    %414 = arith.divf %404, %413 : vector<8x32xf32>
    %415 = vector.broadcast %397 : vector<1x32xf32> to vector<8x32xf32>
    %416 = arith.mulf %415, %414 : vector<8x32xf32>
    %417 = vector.broadcast %398 : vector<1x32xf32> to vector<8x32xf32>
    %418 = arith.addf %416, %417 : vector<8x32xf32>
    %c0_278 = arith.constant 0 : index
    %c0_279 = arith.constant 0 : index
    %c0_280 = arith.constant 0 : index
    %419 = vector.load %arg21[%c0_278, %c0_279, %c0_280] : memref<1x8x32xf32, #tpu.memory_space<vmem>>, vector<1x8x32xf32>
    %420 = vector.shape_cast %419 : vector<1x8x32xf32> to vector<8x32xf32>
    %421 = vector.shape_cast %418 : vector<8x32xf32> to vector<1x8x32xf32>
    tpu.vector_store %arg21[%c0_278, %c0_279, %c0_280], %421 {strides = array<i32>} : memref<1x8x32xf32, #tpu.memory_space<vmem>>, vector<1x8x32xf32>,
    return
  }
  func.func @transform_0(%arg0: i32) -> (i32, i32, i32) {
    %c0_i32 = arith.constant 0 : i32
    %c0_i32_0 = arith.constant 0 : i32
    %c0_i32_1 = arith.constant 0 : i32
    return %arg0, %c0_i32, %c0_i32_0 : i32, i32, i32
  }
  func.func @transform_1(%arg0: i32) -> (i32, i32) {
    %c0_i32 = arith.constant 0 : i32
    %c0_i32_0 = arith.constant 0 : i32
    %c0_i32_1 = arith.constant 0 : i32
    return %c0_i32, %c0_i32_0 : i32, i32
  }
  func.func @transform_2(%arg0: i32) -> (i32, i32) {
    %c0_i32 = arith.constant 0 : i32
    %c0_i32_0 = arith.constant 0 : i32
    %c0_i32_1 = arith.constant 0 : i32
    return %c0_i32, %c0_i32_0 : i32, i32
  }
  func.func @transform_3(%arg0: i32) -> (i32, i32) {
    %c0_i32 = arith.constant 0 : i32
    %c0_i32_0 = arith.constant 0 : i32
    %c0_i32_1 = arith.constant 0 : i32
    return %c0_i32, %c0_i32_0 : i32, i32
  }
  func.func @transform_4(%arg0: i32) -> (i32, i32, i32) {
    %c0_i32 = arith.constant 0 : i32
    %c0_i32_0 = arith.constant 0 : i32
    %c0_i32_1 = arith.constant 0 : i32
    %c0_i32_2 = arith.constant 0 : i32
    return %c0_i32, %c0_i32_0, %c0_i32_1 : i32, i32, i32
  }
  func.func @transform_5(%arg0: i32) -> (i32, i32, i32) {
    %c0_i32 = arith.constant 0 : i32
    %c0_i32_0 = arith.constant 0 : i32
    %c0_i32_1 = arith.constant 0 : i32
    %c0_i32_2 = arith.constant 0 : i32
    return %c0_i32, %c0_i32_0, %c0_i32_1 : i32, i32, i32
  }
  func.func @transform_6(%arg0: i32) -> (i32, i32, i32) {
    %c0_i32 = arith.constant 0 : i32
    %c0_i32_0 = arith.constant 0 : i32
    %c0_i32_1 = arith.constant 0 : i32
    %c0_i32_2 = arith.constant 0 : i32
    return %c0_i32, %c0_i32_0, %c0_i32_1 : i32, i32, i32
  }
  func.func @transform_7(%arg0: i32) -> (i32, i32, i32) {
    %c0_i32 = arith.constant 0 : i32
    %c0_i32_0 = arith.constant 0 : i32
    %c0_i32_1 = arith.constant 0 : i32
    %c0_i32_2 = arith.constant 0 : i32
    return %c0_i32, %c0_i32_0, %c0_i32_1 : i32, i32, i32
  }
  func.func @transform_8(%arg0: i32) -> (i32, i32, i32) {
    %c0_i32 = arith.constant 0 : i32
    %c0_i32_0 = arith.constant 0 : i32
    %c0_i32_1 = arith.constant 0 : i32
    %c0_i32_2 = arith.constant 0 : i32
    return %c0_i32, %c0_i32_0, %c0_i32_1 : i32, i32, i32
  }
  func.func @transform_9(%arg0: i32) -> (i32, i32, i32) {
    %c0_i32 = arith.constant 0 : i32
    %c0_i32_0 = arith.constant 0 : i32
    %c0_i32_1 = arith.constant 0 : i32
    %c0_i32_2 = arith.constant 0 : i32
    return %c0_i32, %c0_i32_0, %c0_i32_1 : i32, i32, i32
  }
  func.func @transform_10(%arg0: i32) -> (i32, i32, i32) {
    %c0_i32 = arith.constant 0 : i32
    %c0_i32_0 = arith.constant 0 : i32
    %c0_i32_1 = arith.constant 0 : i32
    %c0_i32_2 = arith.constant 0 : i32
    return %c0_i32, %c0_i32_0, %c0_i32_1 : i32, i32, i32
  }
  func.func @transform_11(%arg0: i32) -> (i32, i32, i32) {
    %c0_i32 = arith.constant 0 : i32
    %c0_i32_0 = arith.constant 0 : i32
    %c0_i32_1 = arith.constant 0 : i32
    %c0_i32_2 = arith.constant 0 : i32
    return %c0_i32, %c0_i32_0, %c0_i32_1 : i32, i32, i32
  }
  func.func @transform_12(%arg0: i32) -> (i32, i32, i32) {
    %c0_i32 = arith.constant 0 : i32
    %c0_i32_0 = arith.constant 0 : i32
    %c0_i32_1 = arith.constant 0 : i32
    %c0_i32_2 = arith.constant 0 : i32
    return %c0_i32, %c0_i32_0, %c0_i32_1 : i32, i32, i32
  }
  func.func @transform_13(%arg0: i32) -> (i32, i32, i32) {
    %c0_i32 = arith.constant 0 : i32
    %c0_i32_0 = arith.constant 0 : i32
    %c0_i32_1 = arith.constant 0 : i32
    %c0_i32_2 = arith.constant 0 : i32
    return %c0_i32, %c0_i32_0, %c0_i32_1 : i32, i32, i32
  }
  func.func @transform_14(%arg0: i32) -> (i32, i32, i32) {
    %c0_i32 = arith.constant 0 : i32
    %c0_i32_0 = arith.constant 0 : i32
    %c0_i32_1 = arith.constant 0 : i32
    %c0_i32_2 = arith.constant 0 : i32
    return %c0_i32, %c0_i32_0, %c0_i32_1 : i32, i32, i32
  }
  func.func @transform_15(%arg0: i32) -> (i32, i32, i32) {
    %c0_i32 = arith.constant 0 : i32
    %c0_i32_0 = arith.constant 0 : i32
    %c0_i32_1 = arith.constant 0 : i32
    %c0_i32_2 = arith.constant 0 : i32
    return %c0_i32, %c0_i32_0, %c0_i32_1 : i32, i32, i32
  }
  func.func @transform_16(%arg0: i32) -> (i32, i32, i32) {
    %c0_i32 = arith.constant 0 : i32
    %c0_i32_0 = arith.constant 0 : i32
    %c0_i32_1 = arith.constant 0 : i32
    %c0_i32_2 = arith.constant 0 : i32
    return %c0_i32, %c0_i32_0, %c0_i32_1 : i32, i32, i32
  }
  func.func @transform_17(%arg0: i32) -> (i32, i32, i32) {
    %c0_i32 = arith.constant 0 : i32
    %c0_i32_0 = arith.constant 0 : i32
    %c0_i32_1 = arith.constant 0 : i32
    %c0_i32_2 = arith.constant 0 : i32
    return %c0_i32, %c0_i32_0, %c0_i32_1 : i32, i32, i32
  }
  func.func @transform_18(%arg0: i32) -> (i32, i32) {
    %c0_i32 = arith.constant 0 : i32
    %c0_i32_0 = arith.constant 0 : i32
    %c0_i32_1 = arith.constant 0 : i32
    return %c0_i32, %c0_i32_0 : i32, i32
  }
  func.func @transform_19(%arg0: i32) -> (i32, i32) {
    %c0_i32 = arith.constant 0 : i32
    %c0_i32_0 = arith.constant 0 : i32
    %c0_i32_1 = arith.constant 0 : i32
    return %c0_i32, %c0_i32_0 : i32, i32
  }
  func.func @transform_20(%arg0: i32) -> (i32, i32, i32) {
    %c0_i32 = arith.constant 0 : i32
    %c0_i32_0 = arith.constant 0 : i32
    %c0_i32_1 = arith.constant 0 : i32
    return %arg0, %c0_i32, %c0_i32_0 : i32, i32, i32
  }
}

</mosaic_0001>

<llo_original>
// kernel: tpu_custom_call.1
$region0: #{tpu_custom_call.1}
  #allocation0 [shape = 'u32[]', space=smem, size = 0x4, offset = 0x4, fixed_abs, tag = 'smem constant byte address 0x4 - core index']
  #allocation1 [shape = 'u32[144,128]{1,0:T(1,128)}', space=vmem, size = 0x12000, scoped, tag = 'internal scratch']
  %s0 = inlined_call_operand.hbm [shape: f32[2,8,8], index: 0, kind: input, shape index: {}]
  %s1 = inlined_call_operand.hbm [shape: f32[8,32], index: 1, kind: input, shape index: {}]
  %s2 = inlined_call_operand.hbm [shape: f32[8,32], index: 2, kind: input, shape index: {}]
  %s3 = inlined_call_operand.hbm [shape: f32[1,32], index: 3, kind: input, shape index: {}]
  %s4 = inlined_call_operand.vmem [shape: f32[2,1,32], index: 4, kind: input, shape index: {}]
  %s5 = inlined_call_operand.vmem [shape: f32[2,1,32], index: 5, kind: input, shape index: {}]
  %s6 = inlined_call_operand.vmem [shape: f32[2,32,32], index: 6, kind: input, shape index: {}]
  %s7 = inlined_call_operand.vmem [shape: f32[2,1,32], index: 7, kind: input, shape index: {}]
  %s8 = inlined_call_operand.vmem [shape: f32[2,32,32], index: 8, kind: input, shape index: {}]
  %s9 = inlined_call_operand.vmem [shape: f32[2,1,32], index: 9, kind: input, shape index: {}]
  %s10 = inlined_call_operand.vmem [shape: f32[2,32,32], index: 10, kind: input, shape index: {}]
  %s11 = inlined_call_operand.vmem [shape: f32[2,1,32], index: 11, kind: input, shape index: {}]
  %s12 = inlined_call_operand.vmem [shape: f32[2,1,32], index: 12, kind: input, shape index: {}]
  %s13 = inlined_call_operand.vmem [shape: f32[2,1,32], index: 13, kind: input, shape index: {}]
  %s14 = inlined_call_operand.hbm [shape: f32[2,32,64], index: 14, kind: input, shape index: {}]
  %s15 = inlined_call_operand.vmem [shape: f32[2,1,64], index: 15, kind: input, shape index: {}]
  %s16 = inlined_call_operand.vmem [shape: f32[2,64,32], index: 16, kind: input, shape index: {}]
  %s17 = inlined_call_operand.vmem [shape: f32[2,1,32], index: 17, kind: input, shape index: {}]
  %s18 = inlined_call_operand.vmem [shape: f32[1,32], index: 18, kind: input, shape index: {}]
  %s19 = inlined_call_operand.vmem [shape: f32[1,32], index: 19, kind: input, shape index: {}]
  %s20 = inlined_call_operand.hbm [shape: f32[2,8,32], index: 20, kind: output, shape index: {}]
  %s21 = sld [smem:[#allocation0]]
  $region133: #{tpu_custom_call.1} parent=0
    _
  %s23 = ssub.s32 1, %s21
  %s24 = scalar_select 0, %s23, %s21
  $region1: #{tpu_custom_call.1} parent=0
    #allocation2 [shape = 'u8[8192]{0}', space=vmem, size = 0x2000, scoped, tag = 'input window, operand 0']
    #allocation3 [shape = 's32[2]{0}', space=sflag, size = 0x8, scoped, tag = 'scoped memory for tpu_custom_call.1']
    #allocation4 [shape = 's32[2]{0}', space=sflag, size = 0x8, scoped, tag = 'scoped memory for tpu_custom_call.1']
    #allocation5 [shape = 'u8[4096]{0}', space=vmem, size = 0x1000, scoped, tag = 'input window, operand 1, single buffered']
    #allocation6 [shape = 's32[1]{0}', space=sflag, size = 0x4, scoped, tag = 'scoped memory for tpu_custom_call.1']
    #allocation7 [shape = 'u8[4096]{0}', space=vmem, size = 0x1000, scoped, tag = 'input window, operand 2, single buffered']
    #allocation8 [shape = 'u8[512]{0}', space=vmem, size = 0x400, scoped, tag = 'input window, operand 3, single buffered']
    #allocation9 [shape = 's32[1]{0}', space=sflag, size = 0x4, scoped, tag = 'scoped memory for tpu_custom_call.1']
    #allocation10 [shape = 'u8[32768]{0}', space=vmem, size = 0x8000, scoped, tag = 'input window, operand 14, single buffered']
    #allocation11 [shape = 'u8[8192]{0}', space=vmem, size = 0x2000, scoped, tag = 'output window, operand 0']
    %25 = vsyncpa [#allocation3], 0
    %s26 = scalar_lea.sflag [#allocation3], 1
    %27 = vsyncpa %s26, 0
    %28 = vsyncpa [#allocation6], 0
    %29 = vsyncpa [#allocation9], 0
    %30 = vsyncpa [#allocation4], 0
    %s31 = scalar_lea.sflag [#allocation4], 1
    %32 = vsyncpa %s31, 0
    loop: start=0, step=1, limit=4
    $region2: #{tpu_custom_call.1} parent=1 // loop_pre_header
      _
    $region3: #{tpu_custom_call.1} parent=1 // loop_header
      %s34 = sphi 0, %s38
      %p35 = scmp.ge.s32.totalorder %s34, 4
      %s44 = sphi 0, %s46
      %s47 = sphi 0, %s44
      %s48 = sphi 0, %s47
      %s64 = sphi 0, %s48
      %s68 = sphi 0, %s68
      %s70 = sphi 0, %s68
      %s71 = sphi 0, %s70
      %s85 = sphi 0, %s71
      %s89 = sphi 0, %s89
      %s91 = sphi 0, %s89
      %s92 = sphi 0, %s91
      %s106 = sphi 0, %s92
      %s110 = sphi 0, %s110
      %s112 = sphi 0, %s110
      %s113 = sphi 0, %s112
      %s127 = sphi 0, %s113
      %s131 = sphi 0, %s131
      %s133 = sphi 0, %s131
      %s134 = sphi 0, %s133
      %s148 = sphi 0, %s134
      %s152 = sphi 0, %s152
      %s154 = sphi 0, %s152
      %s155 = sphi 0, %s154
      %s169 = sphi 0, %s155
      %s173 = sphi 0, %s173
      %s175 = sphi 0, %s173
      %s176 = sphi 0, %s175
      %s190 = sphi 0, %s176
      %s194 = sphi 0, %s194
      %s196 = sphi 0, %s194
      %s197 = sphi 0, %s196
      %s211 = sphi 0, %s197
      %s215 = sphi 0, %s215
      %s217 = sphi 0, %s215
      %s218 = sphi 0, %s217
      %s232 = sphi 0, %s218
      %s236 = sphi 0, %s236
      %s238 = sphi 0, %s236
      %s239 = sphi 0, %s238
      %s253 = sphi 0, %s239
      %s257 = sphi 0, %s257
      %s259 = sphi 0, %s257
      %s260 = sphi 0, %s259
      %s274 = sphi 0, %s260
      %s278 = sphi 0, %s278
      %s280 = sphi 0, %s278
      %s281 = sphi 0, %s280
      %s295 = sphi 0, %s281
      %s299 = sphi 0, %s299
      %s301 = sphi 0, %s299
      %s302 = sphi 0, %s301
      %s316 = sphi 0, %s302
      %s320 = sphi 0, %s320
      %s322 = sphi 0, %s320
      %s323 = sphi 0, %s322
      %s337 = sphi 0, %s323
      %s341 = sphi 0, %s341
      %s343 = sphi 0, %s341
      %s344 = sphi 0, %s343
      %s358 = sphi 0, %s344
      %s362 = sphi 0, %s362
      %s364 = sphi 0, %s362
      %s365 = sphi 0, %s364
      %s379 = sphi 0, %s365
      %s383 = sphi 0, %s383
      %s385 = sphi 0, %s383
      %s386 = sphi 0, %s385
      %s400 = sphi 0, %s386
      %s404 = sphi 0, %s404
      %s406 = sphi 0, %s404
      %s407 = sphi 0, %s406
      %s421 = sphi 0, %s407
      %s425 = sphi 0, %s425
      %s427 = sphi 0, %s425
      %s428 = sphi 0, %s427
      %s442 = sphi 0, %s428
      %s446 = sphi 0, %s446
      %s448 = sphi 0, %s446
      %s449 = sphi 0, %s448
      %s463 = sphi 0, %s449
      %s469 = sphi 0, %s471
      %s472 = sphi 0, %s469
      %s473 = sphi 0, %s472
      %s489 = sphi 0, %s473
    $region4: #{tpu_custom_call.1} parent=1 // loop_header_branch
      %37 = sbr.rel (%p35) target = $region8
    $region5: #{tpu_custom_call.1} parent=1 // loop_body
      %s39 = ssub.s32 %s34, 1
      %s40 = ssub.s32 %s34, 2
      %s41 = sadd.s32 %s34, 1
      %s42 = ssub.s32 %s34, %s41
      %p43 = scmp.eq.s32.totalorder %s42, 0
      %s45 = sadd.s32 %s44, 1
      %s46 = scalar_select %p43, %s44, %s45
      %p49 = pneg %p43
      %p50 = scmp.eq.s32.totalorder %s34, 1
      %p51 = por %p49, %p50
      %p52 = scmp.ne.s32.totalorder %s44, %s47
      %p53 = scmp.eq.s32.totalorder %s34, 0
      %p54 = por %p52, %p53
      %p55 = scmp.ne.s32.totalorder %s44, %s47
      %p56 = scmp.eq.s32.totalorder %s39, 1
      %p57 = por %p55, %p56
      %p58 = scmp.ne.s32.totalorder %s47, %s48
      %p59 = scmp.eq.s32.totalorder %s39, 0
      %p60 = por %p58, %p59
      %p61 = scmp.ne.s32.totalorder %s47, %s48
      %p62 = scmp.eq.s32.totalorder %s40, 1
      %p63 = por %p61, %p62
      %p65 = scmp.ne.s32.totalorder %s48, %s64
      %p66 = scmp.eq.s32.totalorder %s40, 0
      %p67 = por %p65, %p66
      %s69 = sadd.s32 %s68, 1
      %p72 = scmp.eq.s32.totalorder %s34, 1
      %p73 = scmp.ne.s32.totalorder %s68, %s70
      %p74 = scmp.eq.s32.totalorder %s34, 0
      %p75 = por %p73, %p74
      %p76 = scmp.ne.s32.totalorder %s68, %s70
      %p77 = scmp.eq.s32.totalorder %s39, 1
      %p78 = por %p76, %p77
      %p79 = scmp.ne.s32.totalorder %s70, %s71
      %p80 = scmp.eq.s32.totalorder %s39, 0
      %p81 = por %p79, %p80
      %p82 = scmp.ne.s32.totalorder %s70, %s71
      %p83 = scmp.eq.s32.totalorder %s40, 1
      %p84 = por %p82, %p83
      %p86 = scmp.ne.s32.totalorder %s71, %s85
      %p87 = scmp.eq.s32.totalorder %s40, 0
      %p88 = por %p86, %p87
      %s90 = sadd.s32 %s89, 1
      %p93 = scmp.eq.s32.totalorder %s34, 1
      %p94 = scmp.ne.s32.totalorder %s89, %s91
      %p95 = scmp.eq.s32.totalorder %s34, 0
      %p96 = por %p94, %p95
      %p97 = scmp.ne.s32.totalorder %s89, %s91
      %p98 = scmp.eq.s32.totalorder %s39, 1
      %p99 = por %p97, %p98
      %p100 = scmp.ne.s32.totalorder %s91, %s92
      %p101 = scmp.eq.s32.totalorder %s39, 0
      %p102 = por %p100, %p101
      %p103 = scmp.ne.s32.totalorder %s91, %s92
      %p104 = scmp.eq.s32.totalorder %s40, 1
      %p105 = por %p103, %p104
      %p107 = scmp.ne.s32.totalorder %s92, %s106
      %p108 = scmp.eq.s32.totalorder %s40, 0
      %p109 = por %p107, %p108
      %s111 = sadd.s32 %s110, 1
      %p114 = scmp.eq.s32.totalorder %s34, 1
      %p115 = scmp.ne.s32.totalorder %s110, %s112
      %p116 = scmp.eq.s32.totalorder %s34, 0
      %p117 = por %p115, %p116
      %p118 = scmp.ne.s32.totalorder %s110, %s112
      %p119 = scmp.eq.s32.totalorder %s39, 1
      %p120 = por %p118, %p119
      %p121 = scmp.ne.s32.totalorder %s112, %s113
      %p122 = scmp.eq.s32.totalorder %s39, 0
      %p123 = por %p121, %p122
      %p124 = scmp.ne.s32.totalorder %s112, %s113
      %p125 = scmp.eq.s32.totalorder %s40, 1
      %p126 = por %p124, %p125
      %p128 = scmp.ne.s32.totalorder %s113, %s127
      %p129 = scmp.eq.s32.totalorder %s40, 0
      %p130 = por %p128, %p129
      %s132 = sadd.s32 %s131, 1
      %p135 = scmp.eq.s32.totalorder %s34, 1
      %p136 = scmp.ne.s32.totalorder %s131, %s133
      %p137 = scmp.eq.s32.totalorder %s34, 0
      %p138 = por %p136, %p137
      %p139 = scmp.ne.s32.totalorder %s131, %s133
      %p140 = scmp.eq.s32.totalorder %s39, 1
      %p141 = por %p139, %p140
      %p142 = scmp.ne.s32.totalorder %s133, %s134
      %p143 = scmp.eq.s32.totalorder %s39, 0
      %p144 = por %p142, %p143
      %p145 = scmp.ne.s32.totalorder %s133, %s134
      %p146 = scmp.eq.s32.totalorder %s40, 1
      %p147 = por %p145, %p146
      %p149 = scmp.ne.s32.totalorder %s134, %s148
      %p150 = scmp.eq.s32.totalorder %s40, 0
      %p151 = por %p149, %p150
      %s153 = sadd.s32 %s152, 1
      %p156 = scmp.eq.s32.totalorder %s34, 1
      %p157 = scmp.ne.s32.totalorder %s152, %s154
      %p158 = scmp.eq.s32.totalorder %s34, 0
      %p159 = por %p157, %p158
      %p160 = scmp.ne.s32.totalorder %s152, %s154
      %p161 = scmp.eq.s32.totalorder %s39, 1
      %p162 = por %p160, %p161
      %p163 = scmp.ne.s32.totalorder %s154, %s155
      %p164 = scmp.eq.s32.totalorder %s39, 0
      %p165 = por %p163, %p164
      %p166 = scmp.ne.s32.totalorder %s154, %s155
      %p167 = scmp.eq.s32.totalorder %s40, 1
      %p168 = por %p166, %p167
      %p170 = scmp.ne.s32.totalorder %s155, %s169
      %p171 = scmp.eq.s32.totalorder %s40, 0
      %p172 = por %p170, %p171
      %s174 = sadd.s32 %s173, 1
      %p177 = scmp.eq.s32.totalorder %s34, 1
      %p178 = scmp.ne.s32.totalorder %s173, %s175
      %p179 = scmp.eq.s32.totalorder %s34, 0
      %p180 = por %p178, %p179
      %p181 = scmp.ne.s32.totalorder %s173, %s175
      %p182 = scmp.eq.s32.totalorder %s39, 1
      %p183 = por %p181, %p182
      %p184 = scmp.ne.s32.totalorder %s175, %s176
      %p185 = scmp.eq.s32.totalorder %s39, 0
      %p186 = por %p184, %p185
      %p187 = scmp.ne.s32.totalorder %s175, %s176
      %p188 = scmp.eq.s32.totalorder %s40, 1
      %p189 = por %p187, %p188
      %p191 = scmp.ne.s32.totalorder %s176, %s190
      %p192 = scmp.eq.s32.totalorder %s40, 0
      %p193 = por %p191, %p192
      %s195 = sadd.s32 %s194, 1
      %p198 = scmp.eq.s32.totalorder %s34, 1
      %p199 = scmp.ne.s32.totalorder %s194, %s196
      %p200 = scmp.eq.s32.totalorder %s34, 0
      %p201 = por %p199, %p200
      %p202 = scmp.ne.s32.totalorder %s194, %s196
      %p203 = scmp.eq.s32.totalorder %s39, 1
      %p204 = por %p202, %p203
      %p205 = scmp.ne.s32.totalorder %s196, %s197
      %p206 = scmp.eq.s32.totalorder %s39, 0
      %p207 = por %p205, %p206
      %p208 = scmp.ne.s32.totalorder %s196, %s197
      %p209 = scmp.eq.s32.totalorder %s40, 1
      %p210 = por %p208, %p209
      %p212 = scmp.ne.s32.totalorder %s197, %s211
      %p213 = scmp.eq.s32.totalorder %s40, 0
      %p214 = por %p212, %p213
      %s216 = sadd.s32 %s215, 1
      %p219 = scmp.eq.s32.totalorder %s34, 1
      %p220 = scmp.ne.s32.totalorder %s215, %s217
      %p221 = scmp.eq.s32.totalorder %s34, 0
      %p222 = por %p220, %p221
      %p223 = scmp.ne.s32.totalorder %s215, %s217
      %p224 = scmp.eq.s32.totalorder %s39, 1
      %p225 = por %p223, %p224
      %p226 = scmp.ne.s32.totalorder %s217, %s218
      %p227 = scmp.eq.s32.totalorder %s39, 0
      %p228 = por %p226, %p227
      %p229 = scmp.ne.s32.totalorder %s217, %s218
      %p230 = scmp.eq.s32.totalorder %s40, 1
      %p231 = por %p229, %p230
      %p233 = scmp.ne.s32.totalorder %s218, %s232
      %p234 = scmp.eq.s32.totalorder %s40, 0
      %p235 = por %p233, %p234
      %s237 = sadd.s32 %s236, 1
      %p240 = scmp.eq.s32.totalorder %s34, 1
      %p241 = scmp.ne.s32.totalorder %s236, %s238
      %p242 = scmp.eq.s32.totalorder %s34, 0
      %p243 = por %p241, %p242
      %p244 = scmp.ne.s32.totalorder %s236, %s238
      %p245 = scmp.eq.s32.totalorder %s39, 1
      %p246 = por %p244, %p245
      %p247 = scmp.ne.s32.totalorder %s238, %s239
      %p248 = scmp.eq.s32.totalorder %s39, 0
      %p249 = por %p247, %p248
      %p250 = scmp.ne.s32.totalorder %s238, %s239
      %p251 = scmp.eq.s32.totalorder %s40, 1
      %p252 = por %p250, %p251
      %p254 = scmp.ne.s32.totalorder %s239, %s253
      %p255 = scmp.eq.s32.totalorder %s40, 0
      %p256 = por %p254, %p255
      %s258 = sadd.s32 %s257, 1
      %p261 = scmp.eq.s32.totalorder %s34, 1
      %p262 = scmp.ne.s32.totalorder %s257, %s259
      %p263 = scmp.eq.s32.totalorder %s34, 0
      %p264 = por %p262, %p263
      %p265 = scmp.ne.s32.totalorder %s257, %s259
      %p266 = scmp.eq.s32.totalorder %s39, 1
      %p267 = por %p265, %p266
      %p268 = scmp.ne.s32.totalorder %s259, %s260
      %p269 = scmp.eq.s32.totalorder %s39, 0
      %p270 = por %p268, %p269
      %p271 = scmp.ne.s32.totalorder %s259, %s260
      %p272 = scmp.eq.s32.totalorder %s40, 1
      %p273 = por %p271, %p272
      %p275 = scmp.ne.s32.totalorder %s260, %s274
      %p276 = scmp.eq.s32.totalorder %s40, 0
      %p277 = por %p275, %p276
      %s279 = sadd.s32 %s278, 1
      %p282 = scmp.eq.s32.totalorder %s34, 1
      %p283 = scmp.ne.s32.totalorder %s278, %s280
      %p284 = scmp.eq.s32.totalorder %s34, 0
      %p285 = por %p283, %p284
      %p286 = scmp.ne.s32.totalorder %s278, %s280
      %p287 = scmp.eq.s32.totalorder %s39, 1
      %p288 = por %p286, %p287
      %p289 = scmp.ne.s32.totalorder %s280, %s281
      %p290 = scmp.eq.s32.totalorder %s39, 0
      %p291 = por %p289, %p290
      %p292 = scmp.ne.s32.totalorder %s280, %s281
      %p293 = scmp.eq.s32.totalorder %s40, 1
      %p294 = por %p292, %p293
      %p296 = scmp.ne.s32.totalorder %s281, %s295
      %p297 = scmp.eq.s32.totalorder %s40, 0
      %p298 = por %p296, %p297
      %s300 = sadd.s32 %s299, 1
      %p303 = scmp.eq.s32.totalorder %s34, 1
      %p304 = scmp.ne.s32.totalorder %s299, %s301
      %p305 = scmp.eq.s32.totalorder %s34, 0
      %p306 = por %p304, %p305
      %p307 = scmp.ne.s32.totalorder %s299, %s301
      %p308 = scmp.eq.s32.totalorder %s39, 1
      %p309 = por %p307, %p308
      %p310 = scmp.ne.s32.totalorder %s301, %s302
      %p311 = scmp.eq.s32.totalorder %s39, 0
      %p312 = por %p310, %p311
      %p313 = scmp.ne.s32.totalorder %s301, %s302
      %p314 = scmp.eq.s32.totalorder %s40, 1
      %p315 = por %p313, %p314
      %p317 = scmp.ne.s32.totalorder %s302, %s316
      %p318 = scmp.eq.s32.totalorder %s40, 0
      %p319 = por %p317, %p318
      %s321 = sadd.s32 %s320, 1
      %p324 = scmp.eq.s32.totalorder %s34, 1
      %p325 = scmp.ne.s32.totalorder %s320, %s322
      %p326 = scmp.eq.s32.totalorder %s34, 0
      %p327 = por %p325, %p326
      %p328 = scmp.ne.s32.totalorder %s320, %s322
      %p329 = scmp.eq.s32.totalorder %s39, 1
      %p330 = por %p328, %p329
      %p331 = scmp.ne.s32.totalorder %s322, %s323
      %p332 = scmp.eq.s32.totalorder %s39, 0
      %p333 = por %p331, %p332
      %p334 = scmp.ne.s32.totalorder %s322, %s323
      %p335 = scmp.eq.s32.totalorder %s40, 1
      %p336 = por %p334, %p335
      %p338 = scmp.ne.s32.totalorder %s323, %s337
      %p339 = scmp.eq.s32.totalorder %s40, 0
      %p340 = por %p338, %p339
      %s342 = sadd.s32 %s341, 1
      %p345 = scmp.eq.s32.totalorder %s34, 1
      %p346 = scmp.ne.s32.totalorder %s341, %s343
      %p347 = scmp.eq.s32.totalorder %s34, 0
      %p348 = por %p346, %p347
      %p349 = scmp.ne.s32.totalorder %s341, %s343
      %p350 = scmp.eq.s32.totalorder %s39, 1
      %p351 = por %p349, %p350
      %p352 = scmp.ne.s32.totalorder %s343, %s344
      %p353 = scmp.eq.s32.totalorder %s39, 0
      %p354 = por %p352, %p353
      %p355 = scmp.ne.s32.totalorder %s343, %s344
      %p356 = scmp.eq.s32.totalorder %s40, 1
      %p357 = por %p355, %p356
      %p359 = scmp.ne.s32.totalorder %s344, %s358
      %p360 = scmp.eq.s32.totalorder %s40, 0
      %p361 = por %p359, %p360
      %s363 = sadd.s32 %s362, 1
      %p366 = scmp.eq.s32.totalorder %s34, 1
      %p367 = scmp.ne.s32.totalorder %s362, %s364
      %p368 = scmp.eq.s32.totalorder %s34, 0
      %p369 = por %p367, %p368
      %p370 = scmp.ne.s32.totalorder %s362, %s364
      %p371 = scmp.eq.s32.totalorder %s39, 1
      %p372 = por %p370, %p371
      %p373 = scmp.ne.s32.totalorder %s364, %s365
      %p374 = scmp.eq.s32.totalorder %s39, 0
      %p375 = por %p373, %p374
      %p376 = scmp.ne.s32.totalorder %s364, %s365
      %p377 = scmp.eq.s32.totalorder %s40, 1
      %p378 = por %p376, %p377
      %p380 = scmp.ne.s32.totalorder %s365, %s379
      %p381 = scmp.eq.s32.totalorder %s40, 0
      %p382 = por %p380, %p381
      %s384 = sadd.s32 %s383, 1
      %p387 = scmp.eq.s32.totalorder %s34, 1
      %p388 = scmp.ne.s32.totalorder %s383, %s385
      %p389 = scmp.eq.s32.totalorder %s34, 0
      %p390 = por %p388, %p389
      %p391 = scmp.ne.s32.totalorder %s383, %s385
      %p392 = scmp.eq.s32.totalorder %s39, 1
      %p393 = por %p391, %p392
      %p394 = scmp.ne.s32.totalorder %s385, %s386
      %p395 = scmp.eq.s32.totalorder %s39, 0
      %p396 = por %p394, %p395
      %p397 = scmp.ne.s32.totalorder %s385, %s386
      %p398 = scmp.eq.s32.totalorder %s40, 1
      %p399 = por %p397, %p398
      %p401 = scmp.ne.s32.totalorder %s386, %s400
      %p402 = scmp.eq.s32.totalorder %s40, 0
      %p403 = por %p401, %p402
      %s405 = sadd.s32 %s404, 1
      %p408 = scmp.eq.s32.totalorder %s34, 1
      %p409 = scmp.ne.s32.totalorder %s404, %s406
      %p410 = scmp.eq.s32.totalorder %s34, 0
      %p411 = por %p409, %p410
      %p412 = scmp.ne.s32.totalorder %s404, %s406
      %p413 = scmp.eq.s32.totalorder %s39, 1
      %p414 = por %p412, %p413
      %p415 = scmp.ne.s32.totalorder %s406, %s407
      %p416 = scmp.eq.s32.totalorder %s39, 0
      %p417 = por %p415, %p416
      %p418 = scmp.ne.s32.totalorder %s406, %s407
      %p419 = scmp.eq.s32.totalorder %s40, 1
      %p420 = por %p418, %p419
      %p422 = scmp.ne.s32.totalorder %s407, %s421
      %p423 = scmp.eq.s32.totalorder %s40, 0
      %p424 = por %p422, %p423
      %s426 = sadd.s32 %s425, 1
      %p429 = scmp.eq.s32.totalorder %s34, 1
      %p430 = scmp.ne.s32.totalorder %s425, %s427
      %p431 = scmp.eq.s32.totalorder %s34, 0
      %p432 = por %p430, %p431
      %p433 = scmp.ne.s32.totalorder %s425, %s427
      %p434 = scmp.eq.s32.totalorder %s39, 1
      %p435 = por %p433, %p434
      %p436 = scmp.ne.s32.totalorder %s427, %s428
      %p437 = scmp.eq.s32.totalorder %s39, 0
      %p438 = por %p436, %p437
      %p439 = scmp.ne.s32.totalorder %s427, %s428
      %p440 = scmp.eq.s32.totalorder %s40, 1
      %p441 = por %p439, %p440
      %p443 = scmp.ne.s32.totalorder %s428, %s442
      %p444 = scmp.eq.s32.totalorder %s40, 0
      %p445 = por %p443, %p444
      %s447 = sadd.s32 %s446, 1
      %p450 = scmp.eq.s32.totalorder %s34, 1
      %p451 = scmp.ne.s32.totalorder %s446, %s448
      %p452 = scmp.eq.s32.totalorder %s34, 0
      %p453 = por %p451, %p452
      %p454 = scmp.ne.s32.totalorder %s446, %s448
      %p455 = scmp.eq.s32.totalorder %s39, 1
      %p456 = por %p454, %p455
      %p457 = scmp.ne.s32.totalorder %s448, %s449
      %p458 = scmp.eq.s32.totalorder %s39, 0
      %p459 = por %p457, %p458
      %p460 = scmp.ne.s32.totalorder %s448, %s449
      %p461 = scmp.eq.s32.totalorder %s40, 1
      %p462 = por %p460, %p461
      %p464 = scmp.ne.s32.totalorder %s449, %s463
      %p465 = scmp.eq.s32.totalorder %s40, 0
      %p466 = por %p464, %p465
      %s467 = ssub.s32 %s34, %s41
      %p468 = scmp.eq.s32.totalorder %s467, 0
      %s470 = sadd.s32 %s469, 1
      %s471 = scalar_select %p468, %s469, %s470
      %p474 = pneg %p468
      %p475 = scmp.eq.s32.totalorder %s34, 1
      %p476 = por %p474, %p475
      %p477 = scmp.ne.s32.totalorder %s469, %s472
      %p478 = scmp.eq.s32.totalorder %s34, 0
      %p479 = por %p477, %p478
      %p480 = scmp.ne.s32.totalorder %s469, %s472
      %p481 = scmp.eq.s32.totalorder %s39, 1
      %p482 = por %p480, %p481
      %p483 = scmp.ne.s32.totalorder %s472, %s473
      %p484 = scmp.eq.s32.totalorder %s39, 0
      %p485 = por %p483, %p484
      %p486 = scmp.ne.s32.totalorder %s472, %s473
      %p487 = scmp.eq.s32.totalorder %s40, 1
      %p488 = por %p486, %p487
      %p490 = scmp.ne.s32.totalorder %s473, %s489
      %p491 = scmp.eq.s32.totalorder %s40, 0
      %p492 = por %p490, %p491
      %p493 = scmp.le.s32.totalorder 1, %s34
      %p494 = scmp.lt.s32.totalorder %s34, 3
      %p495 = pnand %p493, %p494
      %p496 = pneg %p495
      // Predicated region
      $region9: #{tpu_custom_call.1} parent=5 // pred_check
        _
      $region10: #{tpu_custom_call.1} parent=5 // pred_check_branch
        %498 = sbr.rel (%p495) target = $region12
      $region11: #{tpu_custom_call.1} parent=5 // pred_region
        %s499 = ssub.s32 %s34, 1
        // Predicated region
        $region13: #{tpu_custom_call.1} parent=11 // pred_check
          %p500 = pneg %p81
        $region14: #{tpu_custom_call.1} parent=11 // pred_check_branch
          %502 = sbr.rel (%p500) target = $region16
        $region15: #{tpu_custom_call.1} parent=11 // pred_region
          %s504 = ssub.s32 128, 128
          %505 = vsyncadd [#allocation6], %s504
          %s507 = sshll.u32 [#allocation5], 4
          %s508 = int_to_ptr.vmem [resolvable:$true] %s507
          %510 = dma.hbm_to_vmem [thread:$0]  %s1, 128, %s508, [#allocation6]
        $region16: #{tpu_custom_call.1} parent=11 // pred_fallthru
          _
        // Predicated region
        $region17: #{tpu_custom_call.1} parent=11 // pred_check
          %p511 = pneg %p102
        $region18: #{tpu_custom_call.1} parent=11 // pred_check_branch
          %513 = sbr.rel (%p511) target = $region20
        $region19: #{tpu_custom_call.1} parent=11 // pred_region
          %s515 = ssub.s32 128, 128
          %516 = vsyncadd [#allocation6], %s515
          %s518 = sshll.u32 [#allocation7], 4
          %s519 = int_to_ptr.vmem [resolvable:$true] %s518
          %521 = dma.hbm_to_vmem [thread:$0]  %s2, 128, %s519, [#allocation6]
        $region20: #{tpu_custom_call.1} parent=11 // pred_fallthru
          _
        // Predicated region
        $region21: #{tpu_custom_call.1} parent=11 // pred_check
          %p522 = pneg %p123
        $region22: #{tpu_custom_call.1} parent=11 // pred_check_branch
          %524 = sbr.rel (%p522) target = $region24
        $region23: #{tpu_custom_call.1} parent=11 // pred_region
          %s526 = ssub.s32 16, 16
          %527 = vsyncadd [#allocation9], %s526
          %s529 = sshll.u32 [#allocation8], 4
          %s530 = int_to_ptr.vmem [resolvable:$true] %s529
          %532 = dma.hbm_to_vmem [thread:$0]  %s3, 16, %s530, [#allocation9]
        $region24: #{tpu_custom_call.1} parent=11 // pred_fallthru
          _
        // Predicated region
        $region25: #{tpu_custom_call.1} parent=11 // pred_check
          %p533 = pneg %p144
        $region26: #{tpu_custom_call.1} parent=11 // pred_check_branch
          %535 = sbr.rel (%p533) target = $region28
        $region27: #{tpu_custom_call.1} parent=11 // pred_region
          _
        $region28: #{tpu_custom_call.1} parent=11 // pred_fallthru
          _
        // Predicated region
        $region29: #{tpu_custom_call.1} parent=11 // pred_check
          %p536 = pneg %p165
        $region30: #{tpu_custom_call.1} parent=11 // pred_check_branch
          %538 = sbr.rel (%p536) target = $region32
        $region31: #{tpu_custom_call.1} parent=11 // pred_region
          _
        $region32: #{tpu_custom_call.1} parent=11 // pred_fallthru
          _
        // Predicated region
        $region33: #{tpu_custom_call.1} parent=11 // pred_check
          %p539 = pneg %p186
        $region34: #{tpu_custom_call.1} parent=11 // pred_check_branch
          %541 = sbr.rel (%p539) target = $region36
        $region35: #{tpu_custom_call.1} parent=11 // pred_region
          _
        $region36: #{tpu_custom_call.1} parent=11 // pred_fallthru
          _
        // Predicated region
        $region37: #{tpu_custom_call.1} parent=11 // pred_check
          %p542 = pneg %p207
        $region38: #{tpu_custom_call.1} parent=11 // pred_check_branch
          %544 = sbr.rel (%p542) target = $region40
        $region39: #{tpu_custom_call.1} parent=11 // pred_region
          _
        $region40: #{tpu_custom_call.1} parent=11 // pred_fallthru
          _
        // Predicated region
        $region41: #{tpu_custom_call.1} parent=11 // pred_check
          %p545 = pneg %p228
        $region42: #{tpu_custom_call.1} parent=11 // pred_check_branch
          %547 = sbr.rel (%p545) target = $region44
        $region43: #{tpu_custom_call.1} parent=11 // pred_region
          _
        $region44: #{tpu_custom_call.1} parent=11 // pred_fallthru
          _
        // Predicated region
        $region45: #{tpu_custom_call.1} parent=11 // pred_check
          %p548 = pneg %p249
        $region46: #{tpu_custom_call.1} parent=11 // pred_check_branch
          %550 = sbr.rel (%p548) target = $region48
        $region47: #{tpu_custom_call.1} parent=11 // pred_region
          _
        $region48: #{tpu_custom_call.1} parent=11 // pred_fallthru
          _
        // Predicated region
        $region49: #{tpu_custom_call.1} parent=11 // pred_check
          %p551 = pneg %p270
        $region50: #{tpu_custom_call.1} parent=11 // pred_check_branch
          %553 = sbr.rel (%p551) target = $region52
        $region51: #{tpu_custom_call.1} parent=11 // pred_region
          _
        $region52: #{tpu_custom_call.1} parent=11 // pred_fallthru
          _
        // Predicated region
        $region53: #{tpu_custom_call.1} parent=11 // pred_check
          %p554 = pneg %p291
        $region54: #{tpu_custom_call.1} parent=11 // pred_check_branch
          %556 = sbr.rel (%p554) target = $region56
        $region55: #{tpu_custom_call.1} parent=11 // pred_region
          _
        $region56: #{tpu_custom_call.1} parent=11 // pred_fallthru
          _
        // Predicated region
        $region57: #{tpu_custom_call.1} parent=11 // pred_check
          %p557 = pneg %p312
        $region58: #{tpu_custom_call.1} parent=11 // pred_check_branch
          %559 = sbr.rel (%p557) target = $region60
        $region59: #{tpu_custom_call.1} parent=11 // pred_region
          _
        $region60: #{tpu_custom_call.1} parent=11 // pred_fallthru
          _
        // Predicated region
        $region61: #{tpu_custom_call.1} parent=11 // pred_check
          %p560 = pneg %p333
        $region62: #{tpu_custom_call.1} parent=11 // pred_check_branch
          %562 = sbr.rel (%p560) target = $region64
        $region63: #{tpu_custom_call.1} parent=11 // pred_region
          _
        $region64: #{tpu_custom_call.1} parent=11 // pred_fallthru
          _
        // Predicated region
        $region65: #{tpu_custom_call.1} parent=11 // pred_check
          %p563 = pneg %p354
        $region66: #{tpu_custom_call.1} parent=11 // pred_check_branch
          %565 = sbr.rel (%p563) target = $region68
        $region67: #{tpu_custom_call.1} parent=11 // pred_region
          %s567 = ssub.s32 1024, 1024
          %568 = vsyncadd [#allocation9], %s567
          %s569 = sshll.u32 [#allocation10], 4
          %s570 = int_to_ptr.vmem [resolvable:$true] %s569
          %575 = dma.hbm_to_vmem [thread:$0]  %s14, 1024, %s570, [#allocation9], 128, 128, 8
        $region68: #{tpu_custom_call.1} parent=11 // pred_fallthru
          _
        // Predicated region
        $region69: #{tpu_custom_call.1} parent=11 // pred_check
          %p576 = pneg %p375
        $region70: #{tpu_custom_call.1} parent=11 // pred_check_branch
          %578 = sbr.rel (%p576) target = $region72
        $region71: #{tpu_custom_call.1} parent=11 // pred_region
          _
        $region72: #{tpu_custom_call.1} parent=11 // pred_fallthru
          _
        // Predicated region
        $region73: #{tpu_custom_call.1} parent=11 // pred_check
          %p579 = pneg %p396
        $region74: #{tpu_custom_call.1} parent=11 // pred_check_branch
          %581 = sbr.rel (%p579) target = $region76
        $region75: #{tpu_custom_call.1} parent=11 // pred_region
          _
        $region76: #{tpu_custom_call.1} parent=11 // pred_fallthru
          _
        // Predicated region
        $region77: #{tpu_custom_call.1} parent=11 // pred_check
          %p582 = pneg %p417
        $region78: #{tpu_custom_call.1} parent=11 // pred_check_branch
          %584 = sbr.rel (%p582) target = $region80
        $region79: #{tpu_custom_call.1} parent=11 // pred_region
          _
        $region80: #{tpu_custom_call.1} parent=11 // pred_fallthru
          _
        // Predicated region
        $region81: #{tpu_custom_call.1} parent=11 // pred_check
          %p585 = pneg %p438
        $region82: #{tpu_custom_call.1} parent=11 // pred_check_branch
          %587 = sbr.rel (%p585) target = $region84
        $region83: #{tpu_custom_call.1} parent=11 // pred_region
          _
        $region84: #{tpu_custom_call.1} parent=11 // pred_fallthru
          _
        // Predicated region
        $region85: #{tpu_custom_call.1} parent=11 // pred_check
          %p588 = pneg %p459
        $region86: #{tpu_custom_call.1} parent=11 // pred_check_branch
          %590 = sbr.rel (%p588) target = $region88
        $region87: #{tpu_custom_call.1} parent=11 // pred_region
          _
        $region88: #{tpu_custom_call.1} parent=11 // pred_fallthru
          _
      $region12: #{tpu_custom_call.1} parent=5 // pred_fallthru
        _
      %p591 = scmp.lt.s32.totalorder %s34, 2
      // Predicated region
      $region89: #{tpu_custom_call.1} parent=5 // pred_check
        %p592 = pneg %p591
      $region90: #{tpu_custom_call.1} parent=5 // pred_check_branch
        %594 = sbr.rel (%p592) target = $region92
      $region91: #{tpu_custom_call.1} parent=5 // pred_region
        // Predicated region
        $region93: #{tpu_custom_call.1} parent=91 // pred_check
          %p595 = pneg %p54
        $region94: #{tpu_custom_call.1} parent=91 // pred_check_branch
          %597 = sbr.rel (%p595) target = $region96
        $region95: #{tpu_custom_call.1} parent=91 // pred_region
          %s598 = sand.u32 %s44, 1
          %s599 = scalar_lea.sflag [#allocation3], %s598
          %s600 = sand.u32 %s44, 1
          %s601 = smul.addr %s600, 8
          %s602 = scalar_lea.vmem [#allocation2], %s601
          %s604 = ssub.s32 128, 128
          %605 = vsyncadd %s599, %s604
          %s606 = smul.addr %s34, 128
          %s607 = scalar_lea.hbm %s0, %s606
          %s609 = sshll.u32 %s602, 4
          %s610 = int_to_ptr.vmem [resolvable:$true] %s609
          %612 = dma.hbm_to_vmem [thread:$0]  %s607, 128, %s610, %s599
        $region96: #{tpu_custom_call.1} parent=91 // pred_fallthru
          _
      $region92: #{tpu_custom_call.1} parent=5 // pred_fallthru
        _
      %p613 = scmp.le.s32.totalorder 1, %s34
      %p614 = scmp.lt.s32.totalorder %s34, 3
      %p615 = pnand %p613, %p614
      %p616 = pneg %p615
      // Predicated region
      $region97: #{tpu_custom_call.1} parent=5 // pred_check
        _
      $region98: #{tpu_custom_call.1} parent=5 // pred_check_branch
        %618 = sbr.rel (%p615) target = $region100
      $region99: #{tpu_custom_call.1} parent=5 // pred_region
        %s619 = ssub.s32 %s34, 1
        %s620 = sand.u32 %s47, 1
        %s621 = scalar_lea.sflag [#allocation3], %s620
        %s622 = sand.u32 %s47, 1
        %s623 = smul.addr %s622, 8
        %s624 = scalar_lea.vmem [#allocation2], %s623
        // Predicated region
        $region101: #{tpu_custom_call.1} parent=99 // pred_check
          %p625 = pneg %p60
        $region102: #{tpu_custom_call.1} parent=99 // pred_check_branch
          %627 = sbr.rel (%p625) target = $region104
        $region103: #{tpu_custom_call.1} parent=99 // pred_region
          %628 = dma.done %s621, 128
        $region104: #{tpu_custom_call.1} parent=99 // pred_fallthru
          _
        // Predicated region
        $region105: #{tpu_custom_call.1} parent=99 // pred_check
          %p629 = pneg %p81
        $region106: #{tpu_custom_call.1} parent=99 // pred_check_branch
          %631 = sbr.rel (%p629) target = $region108
        $region107: #{tpu_custom_call.1} parent=99 // pred_region
          %632 = dma.done [#allocation6], 128
        $region108: #{tpu_custom_call.1} parent=99 // pred_fallthru
          _
        // Predicated region
        $region109: #{tpu_custom_call.1} parent=99 // pred_check
          %p633 = pneg %p102
        $region110: #{tpu_custom_call.1} parent=99 // pred_check_branch
          %635 = sbr.rel (%p633) target = $region112
        $region111: #{tpu_custom_call.1} parent=99 // pred_region
          %636 = dma.done [#allocation6], 128
        $region112: #{tpu_custom_call.1} parent=99 // pred_fallthru
          _
        // Predicated region
        $region113: #{tpu_custom_call.1} parent=99 // pred_check
          %p637 = pneg %p123
        $region114: #{tpu_custom_call.1} parent=99 // pred_check_branch
          %639 = sbr.rel (%p637) target = $region116
        $region115: #{tpu_custom_call.1} parent=99 // pred_region
          %640 = dma.done [#allocation9], 16
        $region116: #{tpu_custom_call.1} parent=99 // pred_fallthru
          _
        // Predicated region
        $region117: #{tpu_custom_call.1} parent=99 // pred_check
          %p641 = pneg %p354
        $region118: #{tpu_custom_call.1} parent=99 // pred_check_branch
          %643 = sbr.rel (%p641) target = $region120
        $region119: #{tpu_custom_call.1} parent=99 // pred_region
          %644 = dma.done [#allocation9], 1024
        $region120: #{tpu_custom_call.1} parent=99 // pred_fallthru
          _
        %s645 = sand.u32 %s47, 1
        %s646 = scalar_lea.sflag [#allocation3], %s645
        %s647 = sand.u32 %s47, 1
        %s648 = smul.addr %s647, 8
        %s649 = scalar_lea.vmem [#allocation2], %s648
        %p650 = pneg %p60
        %p651 = pneg %p57
        %p652 = pneg %p81
        %p653 = pneg %p78
        %p654 = pneg %p102
        %p655 = pneg %p99
        %p656 = pneg %p123
        %p657 = pneg %p120
        %p658 = pneg %p144
        %p659 = pneg %p141
        %p660 = pneg %p165
        %p661 = pneg %p162
        %p662 = pneg %p186
        %p663 = pneg %p183
        %p664 = pneg %p207
        %p665 = pneg %p204
        %p666 = pneg %p228
        %p667 = pneg %p225
        %p668 = pneg %p249
        %p669 = pneg %p246
        %p670 = pneg %p270
        %p671 = pneg %p267
        %p672 = pneg %p291
        %p673 = pneg %p288
        %p674 = pneg %p312
        %p675 = pneg %p309
        %p676 = pneg %p333
        %p677 = pneg %p330
        %p678 = pneg %p354
        %p679 = pneg %p351
        %p680 = pneg %p375
        %p681 = pneg %p372
        %p682 = pneg %p396
        %p683 = pneg %p393
        %p684 = pneg %p417
        %p685 = pneg %p414
        %p686 = pneg %p438
        %p687 = pneg %p435
        %p688 = pneg %p459
        %p689 = pneg %p456
        %p690 = pneg %p485
        %p691 = pneg %p482
        %s692 = sand.u32 %s472, 1
        %s693 = scalar_lea.sflag [#allocation4], %s692
        %s694 = sand.u32 %s472, 1
        %s695 = smul.addr %s694, 8
        %s696 = scalar_lea.vmem [#allocation11], %s695
        %v697 = vld [vmem:[%s624] sm:$0xff]
        %v698 = vld [vmem:[#allocation7] sm:$0xff]
        %v699 = vld [vmem:[#allocation8] sm:$0x1]
        %v701 = vlaneseq
        %v702 = vshrl.u32 %v701, 7
        %v703 = vsub.s32 0, %v702
        %v704 = vrot.slane %v699, %v703
        %vm706 = vcmask 64512
        %v708 = vsel %vm706, %v697, 0
        %710 = vmatprep.subr.mxu0 0.0
        %711 = vmatpush1.msra.mxu0 %v698
        %712 = vmatprep.subr.mxu0 0.0
        %713 = vmatpush1.msra.mxu0 0.0
        %714 = vmatprep.subr.mxu0 0.0
        %715 = vmatpush1.msra.mxu0 0.0
        %716 = vmatprep.subr.mxu0 0.0
        %717 = vmatpush1.msra.mxu0 0.0
        %718 = vmatprep.subr.mxu0 0.0
        %719 = vmatpush1.msra.mxu0 0.0
        %720 = vmatprep.subr.mxu0 0.0
        %721 = vmatpush1.msra.mxu0 0.0
        %722 = vmatprep.subr.mxu0 0.0
        %723 = vmatpush1.msra.mxu0 0.0
        %724 = vmatprep.subr.mxu0 0.0
        %725 = vmatpush1.msra.mxu0 0.0
        %726 = vmatprep.subr.mxu0 0.0
        %727 = vmatpush1.msra.mxu0 0.0
        %728 = vmatprep.subr.mxu0 0.0
        %729 = vmatpush1.msra.mxu0 0.0
        %730 = vmatprep.subr.mxu0 0.0
        %731 = vmatpush1.msra.mxu0 0.0
        %732 = vmatprep.subr.mxu0 0.0
        %733 = vmatpush1.msra.mxu0 0.0
        %734 = vmatprep.subr.mxu0 0.0
        %735 = vmatpush1.msra.mxu0 0.0
        %736 = vmatprep.subr.mxu0 0.0
        %737 = vmatpush1.msra.mxu0 0.0
        %738 = vmatprep.subr.mxu0 0.0
        %739 = vmatpush1.msra.mxu0 0.0
        %740 = vmatprep.subr.mxu0 0.0
        %741 = vmatpush1.msra.mxu0 0.0
        %742 = vmatprep.subr.mxu0 0.0
        %743 = vmatpush1.msra.mxu0 0.0
        %744 = vmatprep.subr.mxu0 0.0
        %745 = vmatpush1.msra.mxu0 0.0
        %746 = vmatprep.subr.mxu0 0.0
        %747 = vmatpush1.msra.mxu0 0.0
        %748 = vmatprep.subr.mxu0 0.0
        %749 = vmatpush1.msra.mxu0 0.0
        %750 = vmatprep.subr.mxu0 0.0
        %751 = vmatpush1.msra.mxu0 0.0
        %752 = vmatprep.subr.mxu0 0.0
        %753 = vmatpush1.msra.mxu0 0.0
        %754 = vmatprep.subr.mxu0 0.0
        %755 = vmatpush1.msra.mxu0 0.0
        %756 = vmatprep.subr.mxu0 0.0
        %757 = vmatpush1.msra.mxu0 0.0
        %758 = vmatprep.subr.mxu0 0.0
        %759 = vmatpush1.msra.mxu0 0.0
        %760 = vmatprep.subr.mxu0 0.0
        %761 = vmatpush1.msra.mxu0 0.0
        %762 = vmatprep.subr.mxu0 0.0
        %763 = vmatpush1.msra.mxu0 0.0
        %764 = vmatprep.subr.mxu0 0.0
        %765 = vmatpush1.msra.mxu0 0.0
        %766 = vmatprep.subr.mxu0 0.0
        %767 = vmatpush1.msra.mxu0 0.0
        %768 = vmatprep.subr.mxu0 0.0
        %769 = vmatpush1.msra.mxu0 0.0
        %770 = vmatprep.subr.mxu0 0.0
        %771 = vmatpush1.msra.mxu0 0.0
        %772 = vmatprep.subr.mxu0 0.0
        %773 = vmatpush1.msra.mxu0 0.0
        %774 = vmatprep.mubr.f32.mxu0 0.0
        %775 = vmatmul.mubr.f32.gmra.mrb[0].mxu0 %v708
        %v776 = vpop.f32.mrb[0].mxu0
        %v777 = vadd.f32 %v704, %v776
        %v778 = vpop.f32.mrb[0].mxu0
        %779 = vdwg.mxu0
        %v780 = vmul.f32 %v777, 5.656854
        %v781 = vld [vmem:[#allocation5] sm:$0xff]
        %v782 = vadd.f32 %v780, %v781
        %v783 = vld [vmem:[%s4] sm:$0x1]
        %v784 = vld [vmem:[%s5] sm:$0x1]
        %vm785 = vcmask 261120
        %v786 = vsel %vm785, %v782, 0.0
        %787 = vadd.xlane.f32.xlu0 %v786
        %v788 = vpop.xlane.xlu0 %787
        %v789 = vrcp.pop 32.0
        %v790 = vmul.f32 %v788, %v789
        %v791 = vsub.f32 %v782, %v790
        %v792 = vmul.f32 %v791, %v791
        %v793 = vsel %vm785, %v792, 0.0
        %794 = vadd.xlane.f32.xlu0 %v793
        %v795 = vpop.xlane.xlu0 %794
        %v796 = vmul.f32 %v795, 0.032258064
        %v797 = vrsqrt.pop %v796
        %v798 = vmul.f32 %v796, %v797
        %vm799 = vcmp.eq.f32.partialorder %v796, inf
        %v800 = vsel %vm799, %v796, %v798
        %vm801 = vcmp.eq.f32.partialorder %v796, 0.0
        %v802 = vand.u32 %v796, 2147483648
        %v803 = vsel %vm801, %v802, %v800
        %v804 = vadd.f32 %v803, 1e-06
        %v805 = vrcp.pop %v804
        %v806 = vmul.f32 %v791, %v805
        %v808 = vlaneseq
        %v809 = vshrl.u32 %v808, 7
        %v810 = vsub.s32 0, %v809
        %v811 = vrot.slane %v783, %v810
        %v813 = vmul.f32 %v811, %v806
        %v815 = vlaneseq
        %v816 = vshrl.u32 %v815, 7
        %v817 = vsub.s32 0, %v816
        %v818 = vrot.slane %v784, %v817
        %v820 = vadd.f32 %v813, %v818
        %v821 = vld [vmem:[%s6] sm:$0xff]
        %v822 = vld [vmem:[%s6 + $0x8] sm:$0xff]
        %v823 = vld [vmem:[%s6 + $0x10] sm:$0xff]
        %v824 = vld [vmem:[%s6 + $0x18] sm:$0xff]
        %v825 = vld [vmem:[%s7] sm:$0x1]
        %v827 = vlaneseq
        %v828 = vshrl.u32 %v827, 7
        %v829 = vsub.s32 0, %v828
        %v830 = vrot.slane %v825, %v829
        %v833 = vsel %vm785, %v820, 0
        %835 = vmatprep.subr.mxu0 0.0
        %836 = vmatpush1.msra.mxu0 %v821
        %837 = vmatprep.subr.mxu0 0.0
        %838 = vmatpush1.msra.mxu0 %v822
        %839 = vmatprep.subr.mxu0 0.0
        %840 = vmatpush1.msra.mxu0 %v823
        %841 = vmatprep.subr.mxu0 0.0
        %842 = vmatpush1.msra.mxu0 %v824
        %843 = vmatprep.subr.mxu0 0.0
        %844 = vmatpush1.msra.mxu0 0.0
        %845 = vmatprep.subr.mxu0 0.0
        %846 = vmatpush1.msra.mxu0 0.0
        %847 = vmatprep.subr.mxu0 0.0
        %848 = vmatpush1.msra.mxu0 0.0
        %849 = vmatprep.subr.mxu0 0.0
        %850 = vmatpush1.msra.mxu0 0.0
        %851 = vmatprep.subr.mxu0 0.0
        %852 = vmatpush1.msra.mxu0 0.0
        %853 = vmatprep.subr.mxu0 0.0
        %854 = vmatpush1.msra.mxu0 0.0
        %855 = vmatprep.subr.mxu0 0.0
        %856 = vmatpush1.msra.mxu0 0.0
        %857 = vmatprep.subr.mxu0 0.0
        %858 = vmatpush1.msra.mxu0 0.0
        %859 = vmatprep.subr.mxu0 0.0
        %860 = vmatpush1.msra.mxu0 0.0
        %861 = vmatprep.subr.mxu0 0.0
        %862 = vmatpush1.msra.mxu0 0.0
        %863 = vmatprep.subr.mxu0 0.0
        %864 = vmatpush1.msra.mxu0 0.0
        %865 = vmatprep.subr.mxu0 0.0
        %866 = vmatpush1.msra.mxu0 0.0
        %867 = vmatprep.subr.mxu0 0.0
        %868 = vmatpush1.msra.mxu0 0.0
        %869 = vmatprep.subr.mxu0 0.0
        %870 = vmatpush1.msra.mxu0 0.0
        %871 = vmatprep.subr.mxu0 0.0
        %872 = vmatpush1.msra.mxu0 0.0
        %873 = vmatprep.subr.mxu0 0.0
        %874 = vmatpush1.msra.mxu0 0.0
        %875 = vmatprep.subr.mxu0 0.0
        %876 = vmatpush1.msra.mxu0 0.0
        %877 = vmatprep.subr.mxu0 0.0
        %878 = vmatpush1.msra.mxu0 0.0
        %879 = vmatprep.subr.mxu0 0.0
        %880 = vmatpush1.msra.mxu0 0.0
        %881 = vmatprep.subr.mxu0 0.0
        %882 = vmatpush1.msra.mxu0 0.0
        %883 = vmatprep.subr.mxu0 0.0
        %884 = vmatpush1.msra.mxu0 0.0
        %885 = vmatprep.subr.mxu0 0.0
        %886 = vmatpush1.msra.mxu0 0.0
        %887 = vmatprep.subr.mxu0 0.0
        %888 = vmatpush1.msra.mxu0 0.0
        %889 = vmatprep.subr.mxu0 0.0
        %890 = vmatpush1.msra.mxu0 0.0
        %891 = vmatprep.subr.mxu0 0.0
        %892 = vmatpush1.msra.mxu0 0.0
        %893 = vmatprep.subr.mxu0 0.0
        %894 = vmatpush1.msra.mxu0 0.0
        %895 = vmatprep.subr.mxu0 0.0
        %896 = vmatpush1.msra.mxu0 0.0
        %897 = vmatprep.subr.mxu0 0.0
        %898 = vmatpush1.msra.mxu0 0.0
        %899 = vmatprep.mubr.f32.mxu0 0.0
        %900 = vmatmul.mubr.f32.gmra.mrb[0].mxu0 %v833
        %v901 = vpop.f32.mrb[0].mxu0
        %v902 = vadd.f32 %v830, %v901
        %v903 = vpop.f32.mrb[0].mxu0
        %904 = vdwg.mxu0
        %v905 = vld [vmem:[%s8] sm:$0xff]
        %v906 = vld [vmem:[%s8 + $0x8] sm:$0xff]
        %v907 = vld [vmem:[%s8 + $0x10] sm:$0xff]
        %v908 = vld [vmem:[%s8 + $0x18] sm:$0xff]
        %v909 = vld [vmem:[%s9] sm:$0x1]
        %v911 = vlaneseq
        %v912 = vshrl.u32 %v911, 7
        %v913 = vsub.s32 0, %v912
        %v914 = vrot.slane %v909, %v913
        %916 = vmatprep.subr.mxu0 0.0
        %917 = vmatpush1.msra.mxu0 %v905
        %918 = vmatprep.subr.mxu0 0.0
        %919 = vmatpush1.msra.mxu0 %v906
        %920 = vmatprep.subr.mxu0 0.0
        %921 = vmatpush1.msra.mxu0 %v907
        %922 = vmatprep.subr.mxu0 0.0
        %923 = vmatpush1.msra.mxu0 %v908
        %924 = vmatprep.subr.mxu0 0.0
        %925 = vmatpush1.msra.mxu0 0.0
        %926 = vmatprep.subr.mxu0 0.0
        %927 = vmatpush1.msra.mxu0 0.0
        %928 = vmatprep.subr.mxu0 0.0
        %929 = vmatpush1.msra.mxu0 0.0
        %930 = vmatprep.subr.mxu0 0.0
        %931 = vmatpush1.msra.mxu0 0.0
        %932 = vmatprep.subr.mxu0 0.0
        %933 = vmatpush1.msra.mxu0 0.0
        %934 = vmatprep.subr.mxu0 0.0
        %935 = vmatpush1.msra.mxu0 0.0
        %936 = vmatprep.subr.mxu0 0.0
        %937 = vmatpush1.msra.mxu0 0.0
        %938 = vmatprep.subr.mxu0 0.0
        %939 = vmatpush1.msra.mxu0 0.0
        %940 = vmatprep.subr.mxu0 0.0
        %941 = vmatpush1.msra.mxu0 0.0
        %942 = vmatprep.subr.mxu0 0.0
        %943 = vmatpush1.msra.mxu0 0.0
        %944 = vmatprep.subr.mxu0 0.0
        %945 = vmatpush1.msra.mxu0 0.0
        %946 = vmatprep.subr.mxu0 0.0
        %947 = vmatpush1.msra.mxu0 0.0
        %948 = vmatprep.subr.mxu0 0.0
        %949 = vmatpush1.msra.mxu0 0.0
        %950 = vmatprep.subr.mxu0 0.0
        %951 = vmatpush1.msra.mxu0 0.0
        %952 = vmatprep.subr.mxu0 0.0
        %953 = vmatpush1.msra.mxu0 0.0
        %954 = vmatprep.subr.mxu0 0.0
        %955 = vmatpush1.msra.mxu0 0.0
        %956 = vmatprep.subr.mxu0 0.0
        %957 = vmatpush1.msra.mxu0 0.0
        %958 = vmatprep.subr.mxu0 0.0
        %959 = vmatpush1.msra.mxu0 0.0
        %960 = vmatprep.subr.mxu0 0.0
        %961 = vmatpush1.msra.mxu0 0.0
        %962 = vmatprep.subr.mxu0 0.0
        %963 = vmatpush1.msra.mxu0 0.0
        %964 = vmatprep.subr.mxu0 0.0
        %965 = vmatpush1.msra.mxu0 0.0
        %966 = vmatprep.subr.mxu0 0.0
        %967 = vmatpush1.msra.mxu0 0.0
        %968 = vmatprep.subr.mxu0 0.0
        %969 = vmatpush1.msra.mxu0 0.0
        %970 = vmatprep.subr.mxu0 0.0
        %971 = vmatpush1.msra.mxu0 0.0
        %972 = vmatprep.subr.mxu0 0.0
        %973 = vmatpush1.msra.mxu0 0.0
        %974 = vmatprep.subr.mxu0 0.0
        %975 = vmatpush1.msra.mxu0 0.0
        %976 = vmatprep.subr.mxu0 0.0
        %977 = vmatpush1.msra.mxu0 0.0
        %978 = vmatprep.subr.mxu0 0.0
        %979 = vmatpush1.msra.mxu0 0.0
        %980 = vmatprep.mubr.f32.mxu0 0.0
        %981 = vmatmul.mubr.f32.gmra.mrb[0].mxu0 %v833
        %v982 = vpop.f32.mrb[0].mxu0
        %v983 = vadd.f32 %v914, %v982
        %v984 = vpop.f32.mrb[0].mxu0
        %985 = vdwg.mxu0
        %v987 = vsel %vm706, %v902, 0
        %v990 = vsel %vm706, %v983, 0
        %992 = vmatprep.subr.mxu0 0.0
        %993 = vmatpush1.xpose.msra.mxu0 %v990
        %994 = vmatprep.subr.mxu0 0.0
        %995 = vmatpush1.xpose.msra.mxu0 0.0
        %996 = vmatprep.subr.mxu0 0.0
        %997 = vmatpush1.xpose.msra.mxu0 0.0
        %998 = vmatprep.subr.mxu0 0.0
        %999 = vmatpush1.xpose.msra.mxu0 0.0
        %1000 = vmatprep.subr.mxu0 0.0
        %1001 = vmatpush1.xpose.msra.mxu0 0.0
        %1002 = vmatprep.subr.mxu0 0.0
        %1003 = vmatpush1.xpose.msra.mxu0 0.0
        %1004 = vmatprep.subr.mxu0 0.0
        %1005 = vmatpush1.xpose.msra.mxu0 0.0
        %1006 = vmatprep.subr.mxu0 0.0
        %1007 = vmatpush1.xpose.msra.mxu0 0.0
        %1008 = vmatprep.subr.mxu0 0.0
        %1009 = vmatpush1.xpose.msra.mxu0 0.0
        %1010 = vmatprep.subr.mxu0 0.0
        %1011 = vmatpush1.xpose.msra.mxu0 0.0
        %1012 = vmatprep.subr.mxu0 0.0
        %1013 = vmatpush1.xpose.msra.mxu0 0.0
        %1014 = vmatprep.subr.mxu0 0.0
        %1015 = vmatpush1.xpose.msra.mxu0 0.0
        %1016 = vmatprep.subr.mxu0 0.0
        %1017 = vmatpush1.xpose.msra.mxu0 0.0
        %1018 = vmatprep.subr.mxu0 0.0
        %1019 = vmatpush1.xpose.msra.mxu0 0.0
        %1020 = vmatprep.subr.mxu0 0.0
        %1021 = vmatpush1.xpose.msra.mxu0 0.0
        %1022 = vmatprep.subr.mxu0 0.0
        %1023 = vmatpush1.xpose.msra.mxu0 0.0
        %1024 = vmatprep.subr.mxu0 0.0
        %1025 = vmatpush1.xpose.msra.mxu0 0.0
        %1026 = vmatprep.subr.mxu0 0.0
        %1027 = vmatpush1.xpose.msra.mxu0 0.0
        %1028 = vmatprep.subr.mxu0 0.0
        %1029 = vmatpush1.xpose.msra.mxu0 0.0
        %1030 = vmatprep.subr.mxu0 0.0
        %1031 = vmatpush1.xpose.msra.mxu0 0.0
        %1032 = vmatprep.subr.mxu0 0.0
        %1033 = vmatpush1.xpose.msra.mxu0 0.0
        %1034 = vmatprep.subr.mxu0 0.0
        %1035 = vmatpush1.xpose.msra.mxu0 0.0
        %1036 = vmatprep.subr.mxu0 0.0
        %1037 = vmatpush1.xpose.msra.mxu0 0.0
        %1038 = vmatprep.subr.mxu0 0.0
        %1039 = vmatpush1.xpose.msra.mxu0 0.0
        %1040 = vmatprep.subr.mxu0 0.0
        %1041 = vmatpush1.xpose.msra.mxu0 0.0
        %1042 = vmatprep.subr.mxu0 0.0
        %1043 = vmatpush1.xpose.msra.mxu0 0.0
        %1044 = vmatprep.subr.mxu0 0.0
        %1045 = vmatpush1.xpose.msra.mxu0 0.0
        %1046 = vmatprep.subr.mxu0 0.0
        %1047 = vmatpush1.xpose.msra.mxu0 0.0
        %1048 = vmatprep.subr.mxu0 0.0
        %1049 = vmatpush1.xpose.msra.mxu0 0.0
        %1050 = vmatprep.subr.mxu0 0.0
        %1051 = vmatpush1.xpose.msra.mxu0 0.0
        %1052 = vmatprep.subr.mxu0 0.0
        %1053 = vmatpush1.xpose.msra.mxu0 0.0
        %1054 = vmatprep.subr.mxu0 0.0
        %1055 = vmatpush1.xpose.msra.mxu0 0.0
        %1056 = vmatprep.mubr.f32.mxu0 0.0
        %1057 = vmatmul.mubr.f32.gmra.mrb[0].mxu0 %v987
        %v1058 = vpop.f32.mrb[0].mxu0
        %v1059 = vadd.f32 0.0, %v1058
        %v1060 = vpop.f32.mrb[0].mxu0
        %1061 = vdwg.mxu0
        %v1062 = vmul.f32 %v1059, 0.35355338
        %v1063 = vsel %vm706, %v1062, -inf
        %1064 = vmax.xlane.f32.xlu0 %v1063
        %v1065 = vpop.xlane.xlu0 %1064
        %v1066 = vsub.f32 %v1062, %v1065
        %v1067 = vmul.f32 %v1066, 1.442695
        %v1068 = vpow.pop %v1067
        %v1069 = vsel %vm706, %v1068, 0.0
        %1070 = vadd.xlane.f32.xlu0 %v1069
        %v1071 = vpop.xlane.xlu0 %1070
        %v1072 = vrcp.pop %v1071
        %v1073 = vmul.f32 %v1068, %v1072
        %v1075 = vsel %vm706, %v1073, 0
        %1077 = vmatprep.subr.mxu0 0.0
        %1078 = vmatpush1.msra.mxu0 %v983
        %1079 = vmatprep.subr.mxu0 0.0
        %1080 = vmatpush1.msra.mxu0 0.0
        %1081 = vmatprep.subr.mxu0 0.0
        %1082 = vmatpush1.msra.mxu0 0.0
        %1083 = vmatprep.subr.mxu0 0.0
        %1084 = vmatpush1.msra.mxu0 0.0
        %1085 = vmatprep.subr.mxu0 0.0
        %1086 = vmatpush1.msra.mxu0 0.0
        %1087 = vmatprep.subr.mxu0 0.0
        %1088 = vmatpush1.msra.mxu0 0.0
        %1089 = vmatprep.subr.mxu0 0.0
        %1090 = vmatpush1.msra.mxu0 0.0
        %1091 = vmatprep.subr.mxu0 0.0
        %1092 = vmatpush1.msra.mxu0 0.0
        %1093 = vmatprep.subr.mxu0 0.0
        %1094 = vmatpush1.msra.mxu0 0.0
        %1095 = vmatprep.subr.mxu0 0.0
        %1096 = vmatpush1.msra.mxu0 0.0
        %1097 = vmatprep.subr.mxu0 0.0
        %1098 = vmatpush1.msra.mxu0 0.0
        %1099 = vmatprep.subr.mxu0 0.0
        %1100 = vmatpush1.msra.mxu0 0.0
        %1101 = vmatprep.subr.mxu0 0.0
        %1102 = vmatpush1.msra.mxu0 0.0
        %1103 = vmatprep.subr.mxu0 0.0
        %1104 = vmatpush1.msra.mxu0 0.0
        %1105 = vmatprep.subr.mxu0 0.0
        %1106 = vmatpush1.msra.mxu0 0.0
        %1107 = vmatprep.subr.mxu0 0.0
        %1108 = vmatpush1.msra.mxu0 0.0
        %1109 = vmatprep.subr.mxu0 0.0
        %1110 = vmatpush1.msra.mxu0 0.0
        %1111 = vmatprep.subr.mxu0 0.0
        %1112 = vmatpush1.msra.mxu0 0.0
        %1113 = vmatprep.subr.mxu0 0.0
        %1114 = vmatpush1.msra.mxu0 0.0
        %1115 = vmatprep.subr.mxu0 0.0
        %1116 = vmatpush1.msra.mxu0 0.0
        %1117 = vmatprep.subr.mxu0 0.0
        %1118 = vmatpush1.msra.mxu0 0.0
        %1119 = vmatprep.subr.mxu0 0.0
        %1120 = vmatpush1.msra.mxu0 0.0
        %1121 = vmatprep.subr.mxu0 0.0
        %1122 = vmatpush1.msra.mxu0 0.0
        %1123 = vmatprep.subr.mxu0 0.0
        %1124 = vmatpush1.msra.mxu0 0.0
        %1125 = vmatprep.subr.mxu0 0.0
        %1126 = vmatpush1.msra.mxu0 0.0
        %1127 = vmatprep.subr.mxu0 0.0
        %1128 = vmatpush1.msra.mxu0 0.0
        %1129 = vmatprep.subr.mxu0 0.0
        %1130 = vmatpush1.msra.mxu0 0.0
        %1131 = vmatprep.subr.mxu0 0.0
        %1132 = vmatpush1.msra.mxu0 0.0
        %1133 = vmatprep.subr.mxu0 0.0
        %1134 = vmatpush1.msra.mxu0 0.0
        %1135 = vmatprep.subr.mxu0 0.0
        %1136 = vmatpush1.msra.mxu0 0.0
        %1137 = vmatprep.subr.mxu0 0.0
        %1138 = vmatpush1.msra.mxu0 0.0
        %1139 = vmatprep.subr.mxu0 0.0
        %1140 = vmatpush1.msra.mxu0 0.0
        %1141 = vmatprep.mubr.f32.mxu0 0.0
        %1142 = vmatmul.mubr.f32.gmra.mrb[0].mxu0 %v1075
        %v1143 = vpop.f32.mrb[0].mxu0
        %v1144 = vadd.f32 0.0, %v1143
        %v1145 = vpop.f32.mrb[0].mxu0
        %1146 = vdwg.mxu0
        %v1147 = vld [vmem:[%s10] sm:$0xff]
        %1152 = vrot.lane.b32.xlu0 %v821, 120
        %v1153 = vpop.permute.xlu0 %1152
        %1154 = vrot.lane.b32.xlu0 %v822, 120
        %v1155 = vpop.permute.xlu0 %1154
        %1156 = vrot.lane.b32.xlu0 %v823, 120
        %v1157 = vpop.permute.xlu0 %1156
        %1158 = vrot.lane.b32.xlu0 %v824, 120
        %v1159 = vpop.permute.xlu0 %1158
        %1164 = vrot.lane.b32.xlu0 %v830, 120
        %v1165 = vpop.permute.xlu0 %1164
        %1167 = vmatprep.subr.mxu0 0.0
        %1168 = vmatpush1.msra.mxu0 %v1153
        %1169 = vmatprep.subr.mxu0 0.0
        %1170 = vmatpush1.msra.mxu0 %v1155
        %1171 = vmatprep.subr.mxu0 0.0
        %1172 = vmatpush1.msra.mxu0 %v1157
        %1173 = vmatprep.subr.mxu0 0.0
        %1174 = vmatpush1.msra.mxu0 %v1159
        %1175 = vmatprep.subr.mxu0 0.0
        %1176 = vmatpush1.msra.mxu0 0.0
        %1177 = vmatprep.subr.mxu0 0.0
        %1178 = vmatpush1.msra.mxu0 0.0
        %1179 = vmatprep.subr.mxu0 0.0
        %1180 = vmatpush1.msra.mxu0 0.0
        %1181 = vmatprep.subr.mxu0 0.0
        %1182 = vmatpush1.msra.mxu0 0.0
        %1183 = vmatprep.subr.mxu0 0.0
        %1184 = vmatpush1.msra.mxu0 0.0
        %1185 = vmatprep.subr.mxu0 0.0
        %1186 = vmatpush1.msra.mxu0 0.0
        %1187 = vmatprep.subr.mxu0 0.0
        %1188 = vmatpush1.msra.mxu0 0.0
        %1189 = vmatprep.subr.mxu0 0.0
        %1190 = vmatpush1.msra.mxu0 0.0
        %1191 = vmatprep.subr.mxu0 0.0
        %1192 = vmatpush1.msra.mxu0 0.0
        %1193 = vmatprep.subr.mxu0 0.0
        %1194 = vmatpush1.msra.mxu0 0.0
        %1195 = vmatprep.subr.mxu0 0.0
        %1196 = vmatpush1.msra.mxu0 0.0
        %1197 = vmatprep.subr.mxu0 0.0
        %1198 = vmatpush1.msra.mxu0 0.0
        %1199 = vmatprep.subr.mxu0 0.0
        %1200 = vmatpush1.msra.mxu0 0.0
        %1201 = vmatprep.subr.mxu0 0.0
        %1202 = vmatpush1.msra.mxu0 0.0
        %1203 = vmatprep.subr.mxu0 0.0
        %1204 = vmatpush1.msra.mxu0 0.0
        %1205 = vmatprep.subr.mxu0 0.0
        %1206 = vmatpush1.msra.mxu0 0.0
        %1207 = vmatprep.subr.mxu0 0.0
        %1208 = vmatpush1.msra.mxu0 0.0
        %1209 = vmatprep.subr.mxu0 0.0
        %1210 = vmatpush1.msra.mxu0 0.0
        %1211 = vmatprep.subr.mxu0 0.0
        %1212 = vmatpush1.msra.mxu0 0.0
        %1213 = vmatprep.subr.mxu0 0.0
        %1214 = vmatpush1.msra.mxu0 0.0
        %1215 = vmatprep.subr.mxu0 0.0
        %1216 = vmatpush1.msra.mxu0 0.0
        %1217 = vmatprep.subr.mxu0 0.0
        %1218 = vmatpush1.msra.mxu0 0.0
        %1219 = vmatprep.subr.mxu0 0.0
        %1220 = vmatpush1.msra.mxu0 0.0
        %1221 = vmatprep.subr.mxu0 0.0
        %1222 = vmatpush1.msra.mxu0 0.0
        %1223 = vmatprep.subr.mxu0 0.0
        %1224 = vmatpush1.msra.mxu0 0.0
        %1225 = vmatprep.subr.mxu0 0.0
        %1226 = vmatpush1.msra.mxu0 0.0
        %1227 = vmatprep.subr.mxu0 0.0
        %1228 = vmatpush1.msra.mxu0 0.0
        %1229 = vmatprep.subr.mxu0 0.0
        %1230 = vmatpush1.msra.mxu0 0.0
        %1231 = vmatprep.mubr.f32.mxu0 0.0
        %1232 = vmatmul.mubr.f32.gmra.mrb[0].mxu0 %v833
        %v1233 = vpop.f32.mrb[0].mxu0
        %v1234 = vadd.f32 %v1165, %v1233
        %v1235 = vpop.f32.mrb[0].mxu0
        %1236 = vdwg.mxu0
        %1241 = vrot.lane.b32.xlu0 %v905, 120
        %v1242 = vpop.permute.xlu0 %1241
        %1243 = vrot.lane.b32.xlu0 %v906, 120
        %v1244 = vpop.permute.xlu0 %1243
        %1245 = vrot.lane.b32.xlu0 %v907, 120
        %v1246 = vpop.permute.xlu0 %1245
        %1247 = vrot.lane.b32.xlu0 %v908, 120
        %v1248 = vpop.permute.xlu0 %1247
        %1253 = vrot.lane.b32.xlu0 %v914, 120
        %v1254 = vpop.permute.xlu0 %1253
        %1256 = vmatprep.subr.mxu0 0.0
        %1257 = vmatpush1.msra.mxu0 %v1242
        %1258 = vmatprep.subr.mxu0 0.0
        %1259 = vmatpush1.msra.mxu0 %v1244
        %1260 = vmatprep.subr.mxu0 0.0
        %1261 = vmatpush1.msra.mxu0 %v1246
        %1262 = vmatprep.subr.mxu0 0.0
        %1263 = vmatpush1.msra.mxu0 %v1248
        %1264 = vmatprep.subr.mxu0 0.0
        %1265 = vmatpush1.msra.mxu0 0.0
        %1266 = vmatprep.subr.mxu0 0.0
        %1267 = vmatpush1.msra.mxu0 0.0
        %1268 = vmatprep.subr.mxu0 0.0
        %1269 = vmatpush1.msra.mxu0 0.0
        %1270 = vmatprep.subr.mxu0 0.0
        %1271 = vmatpush1.msra.mxu0 0.0
        %1272 = vmatprep.subr.mxu0 0.0
        %1273 = vmatpush1.msra.mxu0 0.0
        %1274 = vmatprep.subr.mxu0 0.0
        %1275 = vmatpush1.msra.mxu0 0.0
        %1276 = vmatprep.subr.mxu0 0.0
        %1277 = vmatpush1.msra.mxu0 0.0
        %1278 = vmatprep.subr.mxu0 0.0
        %1279 = vmatpush1.msra.mxu0 0.0
        %1280 = vmatprep.subr.mxu0 0.0
        %1281 = vmatpush1.msra.mxu0 0.0
        %1282 = vmatprep.subr.mxu0 0.0
        %1283 = vmatpush1.msra.mxu0 0.0
        %1284 = vmatprep.subr.mxu0 0.0
        %1285 = vmatpush1.msra.mxu0 0.0
        %1286 = vmatprep.subr.mxu0 0.0
        %1287 = vmatpush1.msra.mxu0 0.0
        %1288 = vmatprep.subr.mxu0 0.0
        %1289 = vmatpush1.msra.mxu0 0.0
        %1290 = vmatprep.subr.mxu0 0.0
        %1291 = vmatpush1.msra.mxu0 0.0
        %1292 = vmatprep.subr.mxu0 0.0
        %1293 = vmatpush1.msra.mxu0 0.0
        %1294 = vmatprep.subr.mxu0 0.0
        %1295 = vmatpush1.msra.mxu0 0.0
        %1296 = vmatprep.subr.mxu0 0.0
        %1297 = vmatpush1.msra.mxu0 0.0
        %1298 = vmatprep.subr.mxu0 0.0
        %1299 = vmatpush1.msra.mxu0 0.0
        %1300 = vmatprep.subr.mxu0 0.0
        %1301 = vmatpush1.msra.mxu0 0.0
        %1302 = vmatprep.subr.mxu0 0.0
        %1303 = vmatpush1.msra.mxu0 0.0
        %1304 = vmatprep.subr.mxu0 0.0
        %1305 = vmatpush1.msra.mxu0 0.0
        %1306 = vmatprep.subr.mxu0 0.0
        %1307 = vmatpush1.msra.mxu0 0.0
        %1308 = vmatprep.subr.mxu0 0.0
        %1309 = vmatpush1.msra.mxu0 0.0
        %1310 = vmatprep.subr.mxu0 0.0
        %1311 = vmatpush1.msra.mxu0 0.0
        %1312 = vmatprep.subr.mxu0 0.0
        %1313 = vmatpush1.msra.mxu0 0.0
        %1314 = vmatprep.subr.mxu0 0.0
        %1315 = vmatpush1.msra.mxu0 0.0
        %1316 = vmatprep.subr.mxu0 0.0
        %1317 = vmatpush1.msra.mxu0 0.0
        %1318 = vmatprep.subr.mxu0 0.0
        %1319 = vmatpush1.msra.mxu0 0.0
        %1320 = vmatprep.mubr.f32.mxu0 0.0
        %1321 = vmatmul.mubr.f32.gmra.mrb[0].mxu0 %v833
        %v1322 = vpop.f32.mrb[0].mxu0
        %v1323 = vadd.f32 %v1254, %v1322
        %v1324 = vpop.f32.mrb[0].mxu0
        %1325 = vdwg.mxu0
        %v1327 = vsel %vm706, %v1234, 0
        %v1330 = vsel %vm706, %v1323, 0
        %1332 = vmatprep.subr.mxu0 0.0
        %1333 = vmatpush1.xpose.msra.mxu0 %v1330
        %1334 = vmatprep.subr.mxu0 0.0
        %1335 = vmatpush1.xpose.msra.mxu0 0.0
        %1336 = vmatprep.subr.mxu0 0.0
        %1337 = vmatpush1.xpose.msra.mxu0 0.0
        %1338 = vmatprep.subr.mxu0 0.0
        %1339 = vmatpush1.xpose.msra.mxu0 0.0
        %1340 = vmatprep.subr.mxu0 0.0
        %1341 = vmatpush1.xpose.msra.mxu0 0.0
        %1342 = vmatprep.subr.mxu0 0.0
        %1343 = vmatpush1.xpose.msra.mxu0 0.0
        %1344 = vmatprep.subr.mxu0 0.0
        %1345 = vmatpush1.xpose.msra.mxu0 0.0
        %1346 = vmatprep.subr.mxu0 0.0
        %1347 = vmatpush1.xpose.msra.mxu0 0.0
        %1348 = vmatprep.subr.mxu0 0.0
        %1349 = vmatpush1.xpose.msra.mxu0 0.0
        %1350 = vmatprep.subr.mxu0 0.0
        %1351 = vmatpush1.xpose.msra.mxu0 0.0
        %1352 = vmatprep.subr.mxu0 0.0
        %1353 = vmatpush1.xpose.msra.mxu0 0.0
        %1354 = vmatprep.subr.mxu0 0.0
        %1355 = vmatpush1.xpose.msra.mxu0 0.0
        %1356 = vmatprep.subr.mxu0 0.0
        %1357 = vmatpush1.xpose.msra.mxu0 0.0
        %1358 = vmatprep.subr.mxu0 0.0
        %1359 = vmatpush1.xpose.msra.mxu0 0.0
        %1360 = vmatprep.subr.mxu0 0.0
        %1361 = vmatpush1.xpose.msra.mxu0 0.0
        %1362 = vmatprep.subr.mxu0 0.0
        %1363 = vmatpush1.xpose.msra.mxu0 0.0
        %1364 = vmatprep.subr.mxu0 0.0
        %1365 = vmatpush1.xpose.msra.mxu0 0.0
        %1366 = vmatprep.subr.mxu0 0.0
        %1367 = vmatpush1.xpose.msra.mxu0 0.0
        %1368 = vmatprep.subr.mxu0 0.0
        %1369 = vmatpush1.xpose.msra.mxu0 0.0
        %1370 = vmatprep.subr.mxu0 0.0
        %1371 = vmatpush1.xpose.msra.mxu0 0.0
        %1372 = vmatprep.subr.mxu0 0.0
        %1373 = vmatpush1.xpose.msra.mxu0 0.0
        %1374 = vmatprep.subr.mxu0 0.0
        %1375 = vmatpush1.xpose.msra.mxu0 0.0
        %1376 = vmatprep.subr.mxu0 0.0
        %1377 = vmatpush1.xpose.msra.mxu0 0.0
        %1378 = vmatprep.subr.mxu0 0.0
        %1379 = vmatpush1.xpose.msra.mxu0 0.0
        %1380 = vmatprep.subr.mxu0 0.0
        %1381 = vmatpush1.xpose.msra.mxu0 0.0
        %1382 = vmatprep.subr.mxu0 0.0
        %1383 = vmatpush1.xpose.msra.mxu0 0.0
        %1384 = vmatprep.subr.mxu0 0.0
        %1385 = vmatpush1.xpose.msra.mxu0 0.0
        %1386 = vmatprep.subr.mxu0 0.0
        %1387 = vmatpush1.xpose.msra.mxu0 0.0
        %1388 = vmatprep.subr.mxu0 0.0
        %1389 = vmatpush1.xpose.msra.mxu0 0.0
        %1390 = vmatprep.subr.mxu0 0.0
        %1391 = vmatpush1.xpose.msra.mxu0 0.0
        %1392 = vmatprep.subr.mxu0 0.0
        %1393 = vmatpush1.xpose.msra.mxu0 0.0
        %1394 = vmatprep.subr.mxu0 0.0
        %1395 = vmatpush1.xpose.msra.mxu0 0.0
        %1396 = vmatprep.mubr.f32.mxu0 0.0
        %1397 = vmatmul.mubr.f32.gmra.mrb[0].mxu0 %v1327
        %v1398 = vpop.f32.mrb[0].mxu0
        %v1399 = vadd.f32 0.0, %v1398
        %v1400 = vpop.f32.mrb[0].mxu0
        %1401 = vdwg.mxu0
        %v1402 = vmul.f32 %v1399, 0.35355338
        %v1403 = vsel %vm706, %v1402, -inf
        %1404 = vmax.xlane.f32.xlu0 %v1403
        %v1405 = vpop.xlane.xlu0 %1404
        %v1406 = vsub.f32 %v1402, %v1405
        %v1407 = vmul.f32 %v1406, 1.442695
        %v1408 = vpow.pop %v1407
        %v1409 = vsel %vm706, %v1408, 0.0
        %1410 = vadd.xlane.f32.xlu0 %v1409
        %v1411 = vpop.xlane.xlu0 %1410
        %v1412 = vrcp.pop %v1411
        %v1413 = vmul.f32 %v1408, %v1412
        %v1415 = vsel %vm706, %v1413, 0
        %1417 = vmatprep.subr.mxu0 0.0
        %1418 = vmatpush1.msra.mxu0 %v1323
        %1419 = vmatprep.subr.mxu0 0.0
        %1420 = vmatpush1.msra.mxu0 0.0
        %1421 = vmatprep.subr.mxu0 0.0
        %1422 = vmatpush1.msra.mxu0 0.0
        %1423 = vmatprep.subr.mxu0 0.0
        %1424 = vmatpush1.msra.mxu0 0.0
        %1425 = vmatprep.subr.mxu0 0.0
        %1426 = vmatpush1.msra.mxu0 0.0
        %1427 = vmatprep.subr.mxu0 0.0
        %1428 = vmatpush1.msra.mxu0 0.0
        %1429 = vmatprep.subr.mxu0 0.0
        %1430 = vmatpush1.msra.mxu0 0.0
        %1431 = vmatprep.subr.mxu0 0.0
        %1432 = vmatpush1.msra.mxu0 0.0
        %1433 = vmatprep.subr.mxu0 0.0
        %1434 = vmatpush1.msra.mxu0 0.0
        %1435 = vmatprep.subr.mxu0 0.0
        %1436 = vmatpush1.msra.mxu0 0.0
        %1437 = vmatprep.subr.mxu0 0.0
        %1438 = vmatpush1.msra.mxu0 0.0
        %1439 = vmatprep.subr.mxu0 0.0
        %1440 = vmatpush1.msra.mxu0 0.0
        %1441 = vmatprep.subr.mxu0 0.0
        %1442 = vmatpush1.msra.mxu0 0.0
        %1443 = vmatprep.subr.mxu0 0.0
        %1444 = vmatpush1.msra.mxu0 0.0
        %1445 = vmatprep.subr.mxu0 0.0
        %1446 = vmatpush1.msra.mxu0 0.0
        %1447 = vmatprep.subr.mxu0 0.0
        %1448 = vmatpush1.msra.mxu0 0.0
        %1449 = vmatprep.subr.mxu0 0.0
        %1450 = vmatpush1.msra.mxu0 0.0
        %1451 = vmatprep.subr.mxu0 0.0
        %1452 = vmatpush1.msra.mxu0 0.0
        %1453 = vmatprep.subr.mxu0 0.0
        %1454 = vmatpush1.msra.mxu0 0.0
        %1455 = vmatprep.subr.mxu0 0.0
        %1456 = vmatpush1.msra.mxu0 0.0
        %1457 = vmatprep.subr.mxu0 0.0
        %1458 = vmatpush1.msra.mxu0 0.0
        %1459 = vmatprep.subr.mxu0 0.0
        %1460 = vmatpush1.msra.mxu0 0.0
        %1461 = vmatprep.subr.mxu0 0.0
        %1462 = vmatpush1.msra.mxu0 0.0
        %1463 = vmatprep.subr.mxu0 0.0
        %1464 = vmatpush1.msra.mxu0 0.0
        %1465 = vmatprep.subr.mxu0 0.0
        %1466 = vmatpush1.msra.mxu0 0.0
        %1467 = vmatprep.subr.mxu0 0.0
        %1468 = vmatpush1.msra.mxu0 0.0
        %1469 = vmatprep.subr.mxu0 0.0
        %1470 = vmatpush1.msra.mxu0 0.0
        %1471 = vmatprep.subr.mxu0 0.0
        %1472 = vmatpush1.msra.mxu0 0.0
        %1473 = vmatprep.subr.mxu0 0.0
        %1474 = vmatpush1.msra.mxu0 0.0
        %1475 = vmatprep.subr.mxu0 0.0
        %1476 = vmatpush1.msra.mxu0 0.0
        %1477 = vmatprep.subr.mxu0 0.0
        %1478 = vmatpush1.msra.mxu0 0.0
        %1479 = vmatprep.subr.mxu0 0.0
        %1480 = vmatpush1.msra.mxu0 0.0
        %1481 = vmatprep.mubr.f32.mxu0 0.0
        %1482 = vmatmul.mubr.f32.gmra.mrb[0].mxu0 %v1415
        %v1483 = vpop.f32.mrb[0].mxu0
        %v1484 = vadd.f32 0.0, %v1483
        %v1485 = vpop.f32.mrb[0].mxu0
        %1486 = vdwg.mxu0
        %v1487 = vld [vmem:[%s10 + $0x8] sm:$0xff]
        %v1489 = vsel %vm706, %v1484, 0
        %1491 = vmatprep.subr.mxu0 0.0
        %1492 = vmatpush1.msra.mxu0 %v1487
        %1493 = vmatprep.subr.mxu0 0.0
        %1494 = vmatpush1.msra.mxu0 0.0
        %1495 = vmatprep.subr.mxu0 0.0
        %1496 = vmatpush1.msra.mxu0 0.0
        %1497 = vmatprep.subr.mxu0 0.0
        %1498 = vmatpush1.msra.mxu0 0.0
        %1499 = vmatprep.subr.mxu0 0.0
        %1500 = vmatpush1.msra.mxu0 0.0
        %1501 = vmatprep.subr.mxu0 0.0
        %1502 = vmatpush1.msra.mxu0 0.0
        %1503 = vmatprep.subr.mxu0 0.0
        %1504 = vmatpush1.msra.mxu0 0.0
        %1505 = vmatprep.subr.mxu0 0.0
        %1506 = vmatpush1.msra.mxu0 0.0
        %1507 = vmatprep.subr.mxu0 0.0
        %1508 = vmatpush1.msra.mxu0 0.0
        %1509 = vmatprep.subr.mxu0 0.0
        %1510 = vmatpush1.msra.mxu0 0.0
        %1511 = vmatprep.subr.mxu0 0.0
        %1512 = vmatpush1.msra.mxu0 0.0
        %1513 = vmatprep.subr.mxu0 0.0
        %1514 = vmatpush1.msra.mxu0 0.0
        %1515 = vmatprep.subr.mxu0 0.0
        %1516 = vmatpush1.msra.mxu0 0.0
        %1517 = vmatprep.subr.mxu0 0.0
        %1518 = vmatpush1.msra.mxu0 0.0
        %1519 = vmatprep.subr.mxu0 0.0
        %1520 = vmatpush1.msra.mxu0 0.0
        %1521 = vmatprep.subr.mxu0 0.0
        %1522 = vmatpush1.msra.mxu0 0.0
        %1523 = vmatprep.subr.mxu0 0.0
        %1524 = vmatpush1.msra.mxu0 0.0
        %1525 = vmatprep.subr.mxu0 0.0
        %1526 = vmatpush1.msra.mxu0 0.0
        %1527 = vmatprep.subr.mxu0 0.0
        %1528 = vmatpush1.msra.mxu0 0.0
        %1529 = vmatprep.subr.mxu0 0.0
        %1530 = vmatpush1.msra.mxu0 0.0
        %1531 = vmatprep.subr.mxu0 0.0
        %1532 = vmatpush1.msra.mxu0 0.0
        %1533 = vmatprep.subr.mxu0 0.0
        %1534 = vmatpush1.msra.mxu0 0.0
        %1535 = vmatprep.subr.mxu0 0.0
        %1536 = vmatpush1.msra.mxu0 0.0
        %1537 = vmatprep.subr.mxu0 0.0
        %1538 = vmatpush1.msra.mxu0 0.0
        %1539 = vmatprep.subr.mxu0 0.0
        %1540 = vmatpush1.msra.mxu0 0.0
        %1541 = vmatprep.subr.mxu0 0.0
        %1542 = vmatpush1.msra.mxu0 0.0
        %1543 = vmatprep.subr.mxu0 0.0
        %1544 = vmatpush1.msra.mxu0 0.0
        %1545 = vmatprep.subr.mxu0 0.0
        %1546 = vmatpush1.msra.mxu0 0.0
        %1547 = vmatprep.subr.mxu0 0.0
        %1548 = vmatpush1.msra.mxu0 0.0
        %1549 = vmatprep.subr.mxu0 0.0
        %1550 = vmatpush1.msra.mxu0 0.0
        %1551 = vmatprep.subr.mxu0 0.0
        %1552 = vmatpush1.msra.mxu0 0.0
        %1553 = vmatprep.subr.mxu0 0.0
        %1554 = vmatpush1.msra.mxu0 0.0
        %1555 = vmatprep.mubr.f32.mxu0 0.0
        %1556 = vmatmul.mubr.f32.gmra.mrb[0].mxu0 %v1489
        %v1557 = vpop.f32.mrb[0].mxu0
        %v1558 = vadd.f32 0.0, %v1557
        %v1559 = vpop.f32.mrb[0].mxu0
        %1560 = vdwg.mxu0
        %v1562 = vsel %vm706, %v1144, 0
        %1564 = vmatprep.subr.mxu0 0.0
        %1565 = vmatpush1.msra.mxu0 %v1147
        %1566 = vmatprep.subr.mxu0 0.0
        %1567 = vmatpush1.msra.mxu0 0.0
        %1568 = vmatprep.subr.mxu0 0.0
        %1569 = vmatpush1.msra.mxu0 0.0
        %1570 = vmatprep.subr.mxu0 0.0
        %1571 = vmatpush1.msra.mxu0 0.0
        %1572 = vmatprep.subr.mxu0 0.0
        %1573 = vmatpush1.msra.mxu0 0.0
        %1574 = vmatprep.subr.mxu0 0.0
        %1575 = vmatpush1.msra.mxu0 0.0
        %1576 = vmatprep.subr.mxu0 0.0
        %1577 = vmatpush1.msra.mxu0 0.0
        %1578 = vmatprep.subr.mxu0 0.0
        %1579 = vmatpush1.msra.mxu0 0.0
        %1580 = vmatprep.subr.mxu0 0.0
        %1581 = vmatpush1.msra.mxu0 0.0
        %1582 = vmatprep.subr.mxu0 0.0
        %1583 = vmatpush1.msra.mxu0 0.0
        %1584 = vmatprep.subr.mxu0 0.0
        %1585 = vmatpush1.msra.mxu0 0.0
        %1586 = vmatprep.subr.mxu0 0.0
        %1587 = vmatpush1.msra.mxu0 0.0
        %1588 = vmatprep.subr.mxu0 0.0
        %1589 = vmatpush1.msra.mxu0 0.0
        %1590 = vmatprep.subr.mxu0 0.0
        %1591 = vmatpush1.msra.mxu0 0.0
        %1592 = vmatprep.subr.mxu0 0.0
        %1593 = vmatpush1.msra.mxu0 0.0
        %1594 = vmatprep.subr.mxu0 0.0
        %1595 = vmatpush1.msra.mxu0 0.0
        %1596 = vmatprep.subr.mxu0 0.0
        %1597 = vmatpush1.msra.mxu0 0.0
        %1598 = vmatprep.subr.mxu0 0.0
        %1599 = vmatpush1.msra.mxu0 0.0
        %1600 = vmatprep.subr.mxu0 0.0
        %1601 = vmatpush1.msra.mxu0 0.0
        %1602 = vmatprep.subr.mxu0 0.0
        %1603 = vmatpush1.msra.mxu0 0.0
        %1604 = vmatprep.subr.mxu0 0.0
        %1605 = vmatpush1.msra.mxu0 0.0
        %1606 = vmatprep.subr.mxu0 0.0
        %1607 = vmatpush1.msra.mxu0 0.0
        %1608 = vmatprep.subr.mxu0 0.0
        %1609 = vmatpush1.msra.mxu0 0.0
        %1610 = vmatprep.subr.mxu0 0.0
        %1611 = vmatpush1.msra.mxu0 0.0
        %1612 = vmatprep.subr.mxu0 0.0
        %1613 = vmatpush1.msra.mxu0 0.0
        %1614 = vmatprep.subr.mxu0 0.0
        %1615 = vmatpush1.msra.mxu0 0.0
        %1616 = vmatprep.subr.mxu0 0.0
        %1617 = vmatpush1.msra.mxu0 0.0
        %1618 = vmatprep.subr.mxu0 0.0
        %1619 = vmatpush1.msra.mxu0 0.0
        %1620 = vmatprep.subr.mxu0 0.0
        %1621 = vmatpush1.msra.mxu0 0.0
        %1622 = vmatprep.subr.mxu0 0.0
        %1623 = vmatpush1.msra.mxu0 0.0
        %1624 = vmatprep.subr.mxu0 0.0
        %1625 = vmatpush1.msra.mxu0 0.0
        %1626 = vmatprep.subr.mxu0 0.0
        %1627 = vmatpush1.msra.mxu0 0.0
        %1628 = vmatprep.mubr.f32.mxu0 0.0
        %1629 = vmatmul.mubr.f32.gmra.mrb[0].mxu0 %v1562
        %v1630 = vpop.f32.mrb[0].mxu0
        %v1631 = vadd.f32 %v1558, %v1630
        %v1632 = vpop.f32.mrb[0].mxu0
        %1633 = vdwg.mxu0
        %1634 = vrot.lane.b32.xlu0 %v821, 112
        %v1635 = vpop.permute.xlu0 %1634
        %1636 = vrot.lane.b32.xlu0 %v822, 112
        %v1637 = vpop.permute.xlu0 %1636
        %1638 = vrot.lane.b32.xlu0 %v823, 112
        %v1639 = vpop.permute.xlu0 %1638
        %1640 = vrot.lane.b32.xlu0 %v824, 112
        %v1641 = vpop.permute.xlu0 %1640
        %1646 = vrot.lane.b32.xlu0 %v830, 112
        %v1647 = vpop.permute.xlu0 %1646
        %1649 = vmatprep.subr.mxu0 0.0
        %1650 = vmatpush1.msra.mxu0 %v1635
        %1651 = vmatprep.subr.mxu0 0.0
        %1652 = vmatpush1.msra.mxu0 %v1637
        %1653 = vmatprep.subr.mxu0 0.0
        %1654 = vmatpush1.msra.mxu0 %v1639
        %1655 = vmatprep.subr.mxu0 0.0
        %1656 = vmatpush1.msra.mxu0 %v1641
        %1657 = vmatprep.subr.mxu0 0.0
        %1658 = vmatpush1.msra.mxu0 0.0
        %1659 = vmatprep.subr.mxu0 0.0
        %1660 = vmatpush1.msra.mxu0 0.0
        %1661 = vmatprep.subr.mxu0 0.0
        %1662 = vmatpush1.msra.mxu0 0.0
        %1663 = vmatprep.subr.mxu0 0.0
        %1664 = vmatpush1.msra.mxu0 0.0
        %1665 = vmatprep.subr.mxu0 0.0
        %1666 = vmatpush1.msra.mxu0 0.0
        %1667 = vmatprep.subr.mxu0 0.0
        %1668 = vmatpush1.msra.mxu0 0.0
        %1669 = vmatprep.subr.mxu0 0.0
        %1670 = vmatpush1.msra.mxu0 0.0
        %1671 = vmatprep.subr.mxu0 0.0
        %1672 = vmatpush1.msra.mxu0 0.0
        %1673 = vmatprep.subr.mxu0 0.0
        %1674 = vmatpush1.msra.mxu0 0.0
        %1675 = vmatprep.subr.mxu0 0.0
        %1676 = vmatpush1.msra.mxu0 0.0
        %1677 = vmatprep.subr.mxu0 0.0
        %1678 = vmatpush1.msra.mxu0 0.0
        %1679 = vmatprep.subr.mxu0 0.0
        %1680 = vmatpush1.msra.mxu0 0.0
        %1681 = vmatprep.subr.mxu0 0.0
        %1682 = vmatpush1.msra.mxu0 0.0
        %1683 = vmatprep.subr.mxu0 0.0
        %1684 = vmatpush1.msra.mxu0 0.0
        %1685 = vmatprep.subr.mxu0 0.0
        %1686 = vmatpush1.msra.mxu0 0.0
        %1687 = vmatprep.subr.mxu0 0.0
        %1688 = vmatpush1.msra.mxu0 0.0
        %1689 = vmatprep.subr.mxu0 0.0
        %1690 = vmatpush1.msra.mxu0 0.0
        %1691 = vmatprep.subr.mxu0 0.0
        %1692 = vmatpush1.msra.mxu0 0.0
        %1693 = vmatprep.subr.mxu0 0.0
        %1694 = vmatpush1.msra.mxu0 0.0
        %1695 = vmatprep.subr.mxu0 0.0
        %1696 = vmatpush1.msra.mxu0 0.0
        %1697 = vmatprep.subr.mxu0 0.0
        %1698 = vmatpush1.msra.mxu0 0.0
        %1699 = vmatprep.subr.mxu0 0.0
        %1700 = vmatpush1.msra.mxu0 0.0
        %1701 = vmatprep.subr.mxu0 0.0
        %1702 = vmatpush1.msra.mxu0 0.0
        %1703 = vmatprep.subr.mxu0 0.0
        %1704 = vmatpush1.msra.mxu0 0.0
        %1705 = vmatprep.subr.mxu0 0.0
        %1706 = vmatpush1.msra.mxu0 0.0
        %1707 = vmatprep.subr.mxu0 0.0
        %1708 = vmatpush1.msra.mxu0 0.0
        %1709 = vmatprep.subr.mxu0 0.0
        %1710 = vmatpush1.msra.mxu0 0.0
        %1711 = vmatprep.subr.mxu0 0.0
        %1712 = vmatpush1.msra.mxu0 0.0
        %1713 = vmatprep.mubr.f32.mxu0 0.0
        %1714 = vmatmul.mubr.f32.gmra.mrb[0].mxu0 %v833
        %v1715 = vpop.f32.mrb[0].mxu0
        %v1716 = vadd.f32 %v1647, %v1715
        %v1717 = vpop.f32.mrb[0].mxu0
        %1718 = vdwg.mxu0
        %1719 = vrot.lane.b32.xlu0 %v905, 112
        %v1720 = vpop.permute.xlu0 %1719
        %1721 = vrot.lane.b32.xlu0 %v906, 112
        %v1722 = vpop.permute.xlu0 %1721
        %1723 = vrot.lane.b32.xlu0 %v907, 112
        %v1724 = vpop.permute.xlu0 %1723
        %1725 = vrot.lane.b32.xlu0 %v908, 112
        %v1726 = vpop.permute.xlu0 %1725
        %1731 = vrot.lane.b32.xlu0 %v914, 112
        %v1732 = vpop.permute.xlu0 %1731
        %1734 = vmatprep.subr.mxu0 0.0
        %1735 = vmatpush1.msra.mxu0 %v1720
        %1736 = vmatprep.subr.mxu0 0.0
        %1737 = vmatpush1.msra.mxu0 %v1722
        %1738 = vmatprep.subr.mxu0 0.0
        %1739 = vmatpush1.msra.mxu0 %v1724
        %1740 = vmatprep.subr.mxu0 0.0
        %1741 = vmatpush1.msra.mxu0 %v1726
        %1742 = vmatprep.subr.mxu0 0.0
        %1743 = vmatpush1.msra.mxu0 0.0
        %1744 = vmatprep.subr.mxu0 0.0
        %1745 = vmatpush1.msra.mxu0 0.0
        %1746 = vmatprep.subr.mxu0 0.0
        %1747 = vmatpush1.msra.mxu0 0.0
        %1748 = vmatprep.subr.mxu0 0.0
        %1749 = vmatpush1.msra.mxu0 0.0
        %1750 = vmatprep.subr.mxu0 0.0
        %1751 = vmatpush1.msra.mxu0 0.0
        %1752 = vmatprep.subr.mxu0 0.0
        %1753 = vmatpush1.msra.mxu0 0.0
        %1754 = vmatprep.subr.mxu0 0.0
        %1755 = vmatpush1.msra.mxu0 0.0
        %1756 = vmatprep.subr.mxu0 0.0
        %1757 = vmatpush1.msra.mxu0 0.0
        %1758 = vmatprep.subr.mxu0 0.0
        %1759 = vmatpush1.msra.mxu0 0.0
        %1760 = vmatprep.subr.mxu0 0.0
        %1761 = vmatpush1.msra.mxu0 0.0
        %1762 = vmatprep.subr.mxu0 0.0
        %1763 = vmatpush1.msra.mxu0 0.0
        %1764 = vmatprep.subr.mxu0 0.0
        %1765 = vmatpush1.msra.mxu0 0.0
        %1766 = vmatprep.subr.mxu0 0.0
        %1767 = vmatpush1.msra.mxu0 0.0
        %1768 = vmatprep.subr.mxu0 0.0
        %1769 = vmatpush1.msra.mxu0 0.0
        %1770 = vmatprep.subr.mxu0 0.0
        %1771 = vmatpush1.msra.mxu0 0.0
        %1772 = vmatprep.subr.mxu0 0.0
        %1773 = vmatpush1.msra.mxu0 0.0
        %1774 = vmatprep.subr.mxu0 0.0
        %1775 = vmatpush1.msra.mxu0 0.0
        %1776 = vmatprep.subr.mxu0 0.0
        %1777 = vmatpush1.msra.mxu0 0.0
        %1778 = vmatprep.subr.mxu0 0.0
        %1779 = vmatpush1.msra.mxu0 0.0
        %1780 = vmatprep.subr.mxu0 0.0
        %1781 = vmatpush1.msra.mxu0 0.0
        %1782 = vmatprep.subr.mxu0 0.0
        %1783 = vmatpush1.msra.mxu0 0.0
        %1784 = vmatprep.subr.mxu0 0.0
        %1785 = vmatpush1.msra.mxu0 0.0
        %1786 = vmatprep.subr.mxu0 0.0
        %1787 = vmatpush1.msra.mxu0 0.0
        %1788 = vmatprep.subr.mxu0 0.0
        %1789 = vmatpush1.msra.mxu0 0.0
        %1790 = vmatprep.subr.mxu0 0.0
        %1791 = vmatpush1.msra.mxu0 0.0
        %1792 = vmatprep.subr.mxu0 0.0
        %1793 = vmatpush1.msra.mxu0 0.0
        %1794 = vmatprep.subr.mxu0 0.0
        %1795 = vmatpush1.msra.mxu0 0.0
        %1796 = vmatprep.subr.mxu0 0.0
        %1797 = vmatpush1.msra.mxu0 0.0
        %1798 = vmatprep.mubr.f32.mxu0 0.0
        %1799 = vmatmul.mubr.f32.gmra.mrb[0].mxu0 %v833
        %v1800 = vpop.f32.mrb[0].mxu0
        %v1801 = vadd.f32 %v1732, %v1800
        %v1802 = vpop.f32.mrb[0].mxu0
        %1803 = vdwg.mxu0
        %v1805 = vsel %vm706, %v1716, 0
        %v1808 = vsel %vm706, %v1801, 0
        %1810 = vmatprep.subr.mxu0 0.0
        %1811 = vmatpush1.xpose.msra.mxu0 %v1808
        %1812 = vmatprep.subr.mxu0 0.0
        %1813 = vmatpush1.xpose.msra.mxu0 0.0
        %1814 = vmatprep.subr.mxu0 0.0
        %1815 = vmatpush1.xpose.msra.mxu0 0.0
        %1816 = vmatprep.subr.mxu0 0.0
        %1817 = vmatpush1.xpose.msra.mxu0 0.0
        %1818 = vmatprep.subr.mxu0 0.0
        %1819 = vmatpush1.xpose.msra.mxu0 0.0
        %1820 = vmatprep.subr.mxu0 0.0
        %1821 = vmatpush1.xpose.msra.mxu0 0.0
        %1822 = vmatprep.subr.mxu0 0.0
        %1823 = vmatpush1.xpose.msra.mxu0 0.0
        %1824 = vmatprep.subr.mxu0 0.0
        %1825 = vmatpush1.xpose.msra.mxu0 0.0
        %1826 = vmatprep.subr.mxu0 0.0
        %1827 = vmatpush1.xpose.msra.mxu0 0.0
        %1828 = vmatprep.subr.mxu0 0.0
        %1829 = vmatpush1.xpose.msra.mxu0 0.0
        %1830 = vmatprep.subr.mxu0 0.0
        %1831 = vmatpush1.xpose.msra.mxu0 0.0
        %1832 = vmatprep.subr.mxu0 0.0
        %1833 = vmatpush1.xpose.msra.mxu0 0.0
        %1834 = vmatprep.subr.mxu0 0.0
        %1835 = vmatpush1.xpose.msra.mxu0 0.0
        %1836 = vmatprep.subr.mxu0 0.0
        %1837 = vmatpush1.xpose.msra.mxu0 0.0
        %1838 = vmatprep.subr.mxu0 0.0
        %1839 = vmatpush1.xpose.msra.mxu0 0.0
        %1840 = vmatprep.subr.mxu0 0.0
        %1841 = vmatpush1.xpose.msra.mxu0 0.0
        %1842 = vmatprep.subr.mxu0 0.0
        %1843 = vmatpush1.xpose.msra.mxu0 0.0
        %1844 = vmatprep.subr.mxu0 0.0
        %1845 = vmatpush1.xpose.msra.mxu0 0.0
        %1846 = vmatprep.subr.mxu0 0.0
        %1847 = vmatpush1.xpose.msra.mxu0 0.0
        %1848 = vmatprep.subr.mxu0 0.0
        %1849 = vmatpush1.xpose.msra.mxu0 0.0
        %1850 = vmatprep.subr.mxu0 0.0
        %1851 = vmatpush1.xpose.msra.mxu0 0.0
        %1852 = vmatprep.subr.mxu0 0.0
        %1853 = vmatpush1.xpose.msra.mxu0 0.0
        %1854 = vmatprep.subr.mxu0 0.0
        %1855 = vmatpush1.xpose.msra.mxu0 0.0
        %1856 = vmatprep.subr.mxu0 0.0
        %1857 = vmatpush1.xpose.msra.mxu0 0.0
        %1858 = vmatprep.subr.mxu0 0.0
        %1859 = vmatpush1.xpose.msra.mxu0 0.0
        %1860 = vmatprep.subr.mxu0 0.0
        %1861 = vmatpush1.xpose.msra.mxu0 0.0
        %1862 = vmatprep.subr.mxu0 0.0
        %1863 = vmatpush1.xpose.msra.mxu0 0.0
        %1864 = vmatprep.subr.mxu0 0.0
        %1865 = vmatpush1.xpose.msra.mxu0 0.0
        %1866 = vmatprep.subr.mxu0 0.0
        %1867 = vmatpush1.xpose.msra.mxu0 0.0
        %1868 = vmatprep.subr.mxu0 0.0
        %1869 = vmatpush1.xpose.msra.mxu0 0.0
        %1870 = vmatprep.subr.mxu0 0.0
        %1871 = vmatpush1.xpose.msra.mxu0 0.0
        %1872 = vmatprep.subr.mxu0 0.0
        %1873 = vmatpush1.xpose.msra.mxu0 0.0
        %1874 = vmatprep.mubr.f32.mxu0 0.0
        %1875 = vmatmul.mubr.f32.gmra.mrb[0].mxu0 %v1805
        %v1876 = vpop.f32.mrb[0].mxu0
        %v1877 = vadd.f32 0.0, %v1876
        %v1878 = vpop.f32.mrb[0].mxu0
        %1879 = vdwg.mxu0
        %v1880 = vmul.f32 %v1877, 0.35355338
        %v1881 = vsel %vm706, %v1880, -inf
        %1882 = vmax.xlane.f32.xlu0 %v1881
        %v1883 = vpop.xlane.xlu0 %1882
        %v1884 = vsub.f32 %v1880, %v1883
        %v1885 = vmul.f32 %v1884, 1.442695
        %v1886 = vpow.pop %v1885
        %v1887 = vsel %vm706, %v1886, 0.0
        %1888 = vadd.xlane.f32.xlu0 %v1887
        %v1889 = vpop.xlane.xlu0 %1888
        %v1890 = vrcp.pop %v1889
        %v1891 = vmul.f32 %v1886, %v1890
        %v1893 = vsel %vm706, %v1891, 0
        %1895 = vmatprep.subr.mxu0 0.0
        %1896 = vmatpush1.msra.mxu0 %v1801
        %1897 = vmatprep.subr.mxu0 0.0
        %1898 = vmatpush1.msra.mxu0 0.0
        %1899 = vmatprep.subr.mxu0 0.0
        %1900 = vmatpush1.msra.mxu0 0.0
        %1901 = vmatprep.subr.mxu0 0.0
        %1902 = vmatpush1.msra.mxu0 0.0
        %1903 = vmatprep.subr.mxu0 0.0
        %1904 = vmatpush1.msra.mxu0 0.0
        %1905 = vmatprep.subr.mxu0 0.0
        %1906 = vmatpush1.msra.mxu0 0.0
        %1907 = vmatprep.subr.mxu0 0.0
        %1908 = vmatpush1.msra.mxu0 0.0
        %1909 = vmatprep.subr.mxu0 0.0
        %1910 = vmatpush1.msra.mxu0 0.0
        %1911 = vmatprep.subr.mxu0 0.0
        %1912 = vmatpush1.msra.mxu0 0.0
        %1913 = vmatprep.subr.mxu0 0.0
        %1914 = vmatpush1.msra.mxu0 0.0
        %1915 = vmatprep.subr.mxu0 0.0
        %1916 = vmatpush1.msra.mxu0 0.0
        %1917 = vmatprep.subr.mxu0 0.0
        %1918 = vmatpush1.msra.mxu0 0.0
        %1919 = vmatprep.subr.mxu0 0.0
        %1920 = vmatpush1.msra.mxu0 0.0
        %1921 = vmatprep.subr.mxu0 0.0
        %1922 = vmatpush1.msra.mxu0 0.0
        %1923 = vmatprep.subr.mxu0 0.0
        %1924 = vmatpush1.msra.mxu0 0.0
        %1925 = vmatprep.subr.mxu0 0.0
        %1926 = vmatpush1.msra.mxu0 0.0
        %1927 = vmatprep.subr.mxu0 0.0
        %1928 = vmatpush1.msra.mxu0 0.0
        %1929 = vmatprep.subr.mxu0 0.0
        %1930 = vmatpush1.msra.mxu0 0.0
        %1931 = vmatprep.subr.mxu0 0.0
        %1932 = vmatpush1.msra.mxu0 0.0
        %1933 = vmatprep.subr.mxu0 0.0
        %1934 = vmatpush1.msra.mxu0 0.0
        %1935 = vmatprep.subr.mxu0 0.0
        %1936 = vmatpush1.msra.mxu0 0.0
        %1937 = vmatprep.subr.mxu0 0.0
        %1938 = vmatpush1.msra.mxu0 0.0
        %1939 = vmatprep.subr.mxu0 0.0
        %1940 = vmatpush1.msra.mxu0 0.0
        %1941 = vmatprep.subr.mxu0 0.0
        %1942 = vmatpush1.msra.mxu0 0.0
        %1943 = vmatprep.subr.mxu0 0.0
        %1944 = vmatpush1.msra.mxu0 0.0
        %1945 = vmatprep.subr.mxu0 0.0
        %1946 = vmatpush1.msra.mxu0 0.0
        %1947 = vmatprep.subr.mxu0 0.0
        %1948 = vmatpush1.msra.mxu0 0.0
        %1949 = vmatprep.subr.mxu0 0.0
        %1950 = vmatpush1.msra.mxu0 0.0
        %1951 = vmatprep.subr.mxu0 0.0
        %1952 = vmatpush1.msra.mxu0 0.0
        %1953 = vmatprep.subr.mxu0 0.0
        %1954 = vmatpush1.msra.mxu0 0.0
        %1955 = vmatprep.subr.mxu0 0.0
        %1956 = vmatpush1.msra.mxu0 0.0
        %1957 = vmatprep.subr.mxu0 0.0
        %1958 = vmatpush1.msra.mxu0 0.0
        %1959 = vmatprep.mubr.f32.mxu0 0.0
        %1960 = vmatmul.mubr.f32.gmra.mrb[0].mxu0 %v1893
        %v1961 = vpop.f32.mrb[0].mxu0
        %v1962 = vadd.f32 0.0, %v1961
        %v1963 = vpop.f32.mrb[0].mxu0
        %1964 = vdwg.mxu0
        %v1965 = vld [vmem:[%s10 + $0x10] sm:$0xff]
        %v1967 = vsel %vm706, %v1962, 0
        %1969 = vmatprep.subr.mxu0 0.0
        %1970 = vmatpush1.msra.mxu0 %v1965
        %1971 = vmatprep.subr.mxu0 0.0
        %1972 = vmatpush1.msra.mxu0 0.0
        %1973 = vmatprep.subr.mxu0 0.0
        %1974 = vmatpush1.msra.mxu0 0.0
        %1975 = vmatprep.subr.mxu0 0.0
        %1976 = vmatpush1.msra.mxu0 0.0
        %1977 = vmatprep.subr.mxu0 0.0
        %1978 = vmatpush1.msra.mxu0 0.0
        %1979 = vmatprep.subr.mxu0 0.0
        %1980 = vmatpush1.msra.mxu0 0.0
        %1981 = vmatprep.subr.mxu0 0.0
        %1982 = vmatpush1.msra.mxu0 0.0
        %1983 = vmatprep.subr.mxu0 0.0
        %1984 = vmatpush1.msra.mxu0 0.0
        %1985 = vmatprep.subr.mxu0 0.0
        %1986 = vmatpush1.msra.mxu0 0.0
        %1987 = vmatprep.subr.mxu0 0.0
        %1988 = vmatpush1.msra.mxu0 0.0
        %1989 = vmatprep.subr.mxu0 0.0
        %1990 = vmatpush1.msra.mxu0 0.0
        %1991 = vmatprep.subr.mxu0 0.0
        %1992 = vmatpush1.msra.mxu0 0.0
        %1993 = vmatprep.subr.mxu0 0.0
        %1994 = vmatpush1.msra.mxu0 0.0
        %1995 = vmatprep.subr.mxu0 0.0
        %1996 = vmatpush1.msra.mxu0 0.0
        %1997 = vmatprep.subr.mxu0 0.0
        %1998 = vmatpush1.msra.mxu0 0.0
        %1999 = vmatprep.subr.mxu0 0.0
        %2000 = vmatpush1.msra.mxu0 0.0
        %2001 = vmatprep.subr.mxu0 0.0
        %2002 = vmatpush1.msra.mxu0 0.0
        %2003 = vmatprep.subr.mxu0 0.0
        %2004 = vmatpush1.msra.mxu0 0.0
        %2005 = vmatprep.subr.mxu0 0.0
        %2006 = vmatpush1.msra.mxu0 0.0
        %2007 = vmatprep.subr.mxu0 0.0
        %2008 = vmatpush1.msra.mxu0 0.0
        %2009 = vmatprep.subr.mxu0 0.0
        %2010 = vmatpush1.msra.mxu0 0.0
        %2011 = vmatprep.subr.mxu0 0.0
        %2012 = vmatpush1.msra.mxu0 0.0
        %2013 = vmatprep.subr.mxu0 0.0
        %2014 = vmatpush1.msra.mxu0 0.0
        %2015 = vmatprep.subr.mxu0 0.0
        %2016 = vmatpush1.msra.mxu0 0.0
        %2017 = vmatprep.subr.mxu0 0.0
        %2018 = vmatpush1.msra.mxu0 0.0
        %2019 = vmatprep.subr.mxu0 0.0
        %2020 = vmatpush1.msra.mxu0 0.0
        %2021 = vmatprep.subr.mxu0 0.0
        %2022 = vmatpush1.msra.mxu0 0.0
        %2023 = vmatprep.subr.mxu0 0.0
        %2024 = vmatpush1.msra.mxu0 0.0
        %2025 = vmatprep.subr.mxu0 0.0
        %2026 = vmatpush1.msra.mxu0 0.0
        %2027 = vmatprep.subr.mxu0 0.0
        %2028 = vmatpush1.msra.mxu0 0.0
        %2029 = vmatprep.subr.mxu0 0.0
        %2030 = vmatpush1.msra.mxu0 0.0
        %2031 = vmatprep.subr.mxu0 0.0
        %2032 = vmatpush1.msra.mxu0 0.0
        %2033 = vmatprep.mubr.f32.mxu0 0.0
        %2034 = vmatmul.mubr.f32.gmra.mrb[0].mxu0 %v1967
        %v2035 = vpop.f32.mrb[0].mxu0
        %v2036 = vadd.f32 0.0, %v2035
        %v2037 = vpop.f32.mrb[0].mxu0
        %2038 = vdwg.mxu0
        %v2039 = vadd.f32 %v1631, %v2036
        %2040 = vrot.lane.b32.xlu0 %v821, 104
        %v2041 = vpop.permute.xlu0 %2040
        %2042 = vrot.lane.b32.xlu0 %v822, 104
        %v2043 = vpop.permute.xlu0 %2042
        %2044 = vrot.lane.b32.xlu0 %v823, 104
        %v2045 = vpop.permute.xlu0 %2044
        %2046 = vrot.lane.b32.xlu0 %v824, 104
        %v2047 = vpop.permute.xlu0 %2046
        %2052 = vrot.lane.b32.xlu0 %v830, 104
        %v2053 = vpop.permute.xlu0 %2052
        %2055 = vmatprep.subr.mxu0 0.0
        %2056 = vmatpush1.msra.mxu0 %v2041
        %2057 = vmatprep.subr.mxu0 0.0
        %2058 = vmatpush1.msra.mxu0 %v2043
        %2059 = vmatprep.subr.mxu0 0.0
        %2060 = vmatpush1.msra.mxu0 %v2045
        %2061 = vmatprep.subr.mxu0 0.0
        %2062 = vmatpush1.msra.mxu0 %v2047
        %2063 = vmatprep.subr.mxu0 0.0
        %2064 = vmatpush1.msra.mxu0 0.0
        %2065 = vmatprep.subr.mxu0 0.0
        %2066 = vmatpush1.msra.mxu0 0.0
        %2067 = vmatprep.subr.mxu0 0.0
        %2068 = vmatpush1.msra.mxu0 0.0
        %2069 = vmatprep.subr.mxu0 0.0
        %2070 = vmatpush1.msra.mxu0 0.0
        %2071 = vmatprep.subr.mxu0 0.0
        %2072 = vmatpush1.msra.mxu0 0.0
        %2073 = vmatprep.subr.mxu0 0.0
        %2074 = vmatpush1.msra.mxu0 0.0
        %2075 = vmatprep.subr.mxu0 0.0
        %2076 = vmatpush1.msra.mxu0 0.0
        %2077 = vmatprep.subr.mxu0 0.0
        %2078 = vmatpush1.msra.mxu0 0.0
        %2079 = vmatprep.subr.mxu0 0.0
        %2080 = vmatpush1.msra.mxu0 0.0
        %2081 = vmatprep.subr.mxu0 0.0
        %2082 = vmatpush1.msra.mxu0 0.0
        %2083 = vmatprep.subr.mxu0 0.0
        %2084 = vmatpush1.msra.mxu0 0.0
        %2085 = vmatprep.subr.mxu0 0.0
        %2086 = vmatpush1.msra.mxu0 0.0
        %2087 = vmatprep.subr.mxu0 0.0
        %2088 = vmatpush1.msra.mxu0 0.0
        %2089 = vmatprep.subr.mxu0 0.0
        %2090 = vmatpush1.msra.mxu0 0.0
        %2091 = vmatprep.subr.mxu0 0.0
        %2092 = vmatpush1.msra.mxu0 0.0
        %2093 = vmatprep.subr.mxu0 0.0
        %2094 = vmatpush1.msra.mxu0 0.0
        %2095 = vmatprep.subr.mxu0 0.0
        %2096 = vmatpush1.msra.mxu0 0.0
        %2097 = vmatprep.subr.mxu0 0.0
        %2098 = vmatpush1.msra.mxu0 0.0
        %2099 = vmatprep.subr.mxu0 0.0
        %2100 = vmatpush1.msra.mxu0 0.0
        %2101 = vmatprep.subr.mxu0 0.0
        %2102 = vmatpush1.msra.mxu0 0.0
        %2103 = vmatprep.subr.mxu0 0.0
        %2104 = vmatpush1.msra.mxu0 0.0
        %2105 = vmatprep.subr.mxu0 0.0
        %2106 = vmatpush1.msra.mxu0 0.0
        %2107 = vmatprep.subr.mxu0 0.0
        %2108 = vmatpush1.msra.mxu0 0.0
        %2109 = vmatprep.subr.mxu0 0.0
        %2110 = vmatpush1.msra.mxu0 0.0
        %2111 = vmatprep.subr.mxu0 0.0
        %2112 = vmatpush1.msra.mxu0 0.0
        %2113 = vmatprep.subr.mxu0 0.0
        %2114 = vmatpush1.msra.mxu0 0.0
        %2115 = vmatprep.subr.mxu0 0.0
        %2116 = vmatpush1.msra.mxu0 0.0
        %2117 = vmatprep.subr.mxu0 0.0
        %2118 = vmatpush1.msra.mxu0 0.0
        %2119 = vmatprep.mubr.f32.mxu0 0.0
        %2120 = vmatmul.mubr.f32.gmra.mrb[0].mxu0 %v833
        %v2121 = vpop.f32.mrb[0].mxu0
        %v2122 = vadd.f32 %v2053, %v2121
        %v2123 = vpop.f32.mrb[0].mxu0
        %2124 = vdwg.mxu0
        %2125 = vrot.lane.b32.xlu0 %v905, 104
        %v2126 = vpop.permute.xlu0 %2125
        %2127 = vrot.lane.b32.xlu0 %v906, 104
        %v2128 = vpop.permute.xlu0 %2127
        %2129 = vrot.lane.b32.xlu0 %v907, 104
        %v2130 = vpop.permute.xlu0 %2129
        %2131 = vrot.lane.b32.xlu0 %v908, 104
        %v2132 = vpop.permute.xlu0 %2131
        %2137 = vrot.lane.b32.xlu0 %v914, 104
        %v2138 = vpop.permute.xlu0 %2137
        %2140 = vmatprep.subr.mxu0 0.0
        %2141 = vmatpush1.msra.mxu0 %v2126
        %2142 = vmatprep.subr.mxu0 0.0
        %2143 = vmatpush1.msra.mxu0 %v2128
        %2144 = vmatprep.subr.mxu0 0.0
        %2145 = vmatpush1.msra.mxu0 %v2130
        %2146 = vmatprep.subr.mxu0 0.0
        %2147 = vmatpush1.msra.mxu0 %v2132
        %2148 = vmatprep.subr.mxu0 0.0
        %2149 = vmatpush1.msra.mxu0 0.0
        %2150 = vmatprep.subr.mxu0 0.0
        %2151 = vmatpush1.msra.mxu0 0.0
        %2152 = vmatprep.subr.mxu0 0.0
        %2153 = vmatpush1.msra.mxu0 0.0
        %2154 = vmatprep.subr.mxu0 0.0
        %2155 = vmatpush1.msra.mxu0 0.0
        %2156 = vmatprep.subr.mxu0 0.0
        %2157 = vmatpush1.msra.mxu0 0.0
        %2158 = vmatprep.subr.mxu0 0.0
        %2159 = vmatpush1.msra.mxu0 0.0
        %2160 = vmatprep.subr.mxu0 0.0
        %2161 = vmatpush1.msra.mxu0 0.0
        %2162 = vmatprep.subr.mxu0 0.0
        %2163 = vmatpush1.msra.mxu0 0.0
        %2164 = vmatprep.subr.mxu0 0.0
        %2165 = vmatpush1.msra.mxu0 0.0
        %2166 = vmatprep.subr.mxu0 0.0
        %2167 = vmatpush1.msra.mxu0 0.0
        %2168 = vmatprep.subr.mxu0 0.0
        %2169 = vmatpush1.msra.mxu0 0.0
        %2170 = vmatprep.subr.mxu0 0.0
        %2171 = vmatpush1.msra.mxu0 0.0
        %2172 = vmatprep.subr.mxu0 0.0
        %2173 = vmatpush1.msra.mxu0 0.0
        %2174 = vmatprep.subr.mxu0 0.0
        %2175 = vmatpush1.msra.mxu0 0.0
        %2176 = vmatprep.subr.mxu0 0.0
        %2177 = vmatpush1.msra.mxu0 0.0
        %2178 = vmatprep.subr.mxu0 0.0
        %2179 = vmatpush1.msra.mxu0 0.0
        %2180 = vmatprep.subr.mxu0 0.0
        %2181 = vmatpush1.msra.mxu0 0.0
        %2182 = vmatprep.subr.mxu0 0.0
        %2183 = vmatpush1.msra.mxu0 0.0
        %2184 = vmatprep.subr.mxu0 0.0
        %2185 = vmatpush1.msra.mxu0 0.0
        %2186 = vmatprep.subr.mxu0 0.0
        %2187 = vmatpush1.msra.mxu0 0.0
        %2188 = vmatprep.subr.mxu0 0.0
        %2189 = vmatpush1.msra.mxu0 0.0
        %2190 = vmatprep.subr.mxu0 0.0
        %2191 = vmatpush1.msra.mxu0 0.0
        %2192 = vmatprep.subr.mxu0 0.0
        %2193 = vmatpush1.msra.mxu0 0.0
        %2194 = vmatprep.subr.mxu0 0.0
        %2195 = vmatpush1.msra.mxu0 0.0
        %2196 = vmatprep.subr.mxu0 0.0
        %2197 = vmatpush1.msra.mxu0 0.0
        %2198 = vmatprep.subr.mxu0 0.0
        %2199 = vmatpush1.msra.mxu0 0.0
        %2200 = vmatprep.subr.mxu0 0.0
        %2201 = vmatpush1.msra.mxu0 0.0
        %2202 = vmatprep.subr.mxu0 0.0
        %2203 = vmatpush1.msra.mxu0 0.0
        %2204 = vmatprep.mubr.f32.mxu0 0.0
        %2205 = vmatmul.mubr.f32.gmra.mrb[0].mxu0 %v833
        %v2206 = vpop.f32.mrb[0].mxu0
        %v2207 = vadd.f32 %v2138, %v2206
        %v2208 = vpop.f32.mrb[0].mxu0
        %2209 = vdwg.mxu0
        %v2211 = vsel %vm706, %v2122, 0
        %v2214 = vsel %vm706, %v2207, 0
        %2216 = vmatprep.subr.mxu0 0.0
        %2217 = vmatpush1.xpose.msra.mxu0 %v2214
        %2218 = vmatprep.subr.mxu0 0.0
        %2219 = vmatpush1.xpose.msra.mxu0 0.0
        %2220 = vmatprep.subr.mxu0 0.0
        %2221 = vmatpush1.xpose.msra.mxu0 0.0
        %2222 = vmatprep.subr.mxu0 0.0
        %2223 = vmatpush1.xpose.msra.mxu0 0.0
        %2224 = vmatprep.subr.mxu0 0.0
        %2225 = vmatpush1.xpose.msra.mxu0 0.0
        %2226 = vmatprep.subr.mxu0 0.0
        %2227 = vmatpush1.xpose.msra.mxu0 0.0
        %2228 = vmatprep.subr.mxu0 0.0
        %2229 = vmatpush1.xpose.msra.mxu0 0.0
        %2230 = vmatprep.subr.mxu0 0.0
        %2231 = vmatpush1.xpose.msra.mxu0 0.0
        %2232 = vmatprep.subr.mxu0 0.0
        %2233 = vmatpush1.xpose.msra.mxu0 0.0
        %2234 = vmatprep.subr.mxu0 0.0
        %2235 = vmatpush1.xpose.msra.mxu0 0.0
        %2236 = vmatprep.subr.mxu0 0.0
        %2237 = vmatpush1.xpose.msra.mxu0 0.0
        %2238 = vmatprep.subr.mxu0 0.0
        %2239 = vmatpush1.xpose.msra.mxu0 0.0
        %2240 = vmatprep.subr.mxu0 0.0
        %2241 = vmatpush1.xpose.msra.mxu0 0.0
        %2242 = vmatprep.subr.mxu0 0.0
        %2243 = vmatpush1.xpose.msra.mxu0 0.0
        %2244 = vmatprep.subr.mxu0 0.0
        %2245 = vmatpush1.xpose.msra.mxu0 0.0
        %2246 = vmatprep.subr.mxu0 0.0
        %2247 = vmatpush1.xpose.msra.mxu0 0.0
        %2248 = vmatprep.subr.mxu0 0.0
        %2249 = vmatpush1.xpose.msra.mxu0 0.0
        %2250 = vmatprep.subr.mxu0 0.0
        %2251 = vmatpush1.xpose.msra.mxu0 0.0
        %2252 = vmatprep.subr.mxu0 0.0
        %2253 = vmatpush1.xpose.msra.mxu0 0.0
        %2254 = vmatprep.subr.mxu0 0.0
        %2255 = vmatpush1.xpose.msra.mxu0 0.0
        %2256 = vmatprep.subr.mxu0 0.0
        %2257 = vmatpush1.xpose.msra.mxu0 0.0
        %2258 = vmatprep.subr.mxu0 0.0
        %2259 = vmatpush1.xpose.msra.mxu0 0.0
        %2260 = vmatprep.subr.mxu0 0.0
        %2261 = vmatpush1.xpose.msra.mxu0 0.0
        %2262 = vmatprep.subr.mxu0 0.0
        %2263 = vmatpush1.xpose.msra.mxu0 0.0
        %2264 = vmatprep.subr.mxu0 0.0
        %2265 = vmatpush1.xpose.msra.mxu0 0.0
        %2266 = vmatprep.subr.mxu0 0.0
        %2267 = vmatpush1.xpose.msra.mxu0 0.0
        %2268 = vmatprep.subr.mxu0 0.0
        %2269 = vmatpush1.xpose.msra.mxu0 0.0
        %2270 = vmatprep.subr.mxu0 0.0
        %2271 = vmatpush1.xpose.msra.mxu0 0.0
        %2272 = vmatprep.subr.mxu0 0.0
        %2273 = vmatpush1.xpose.msra.mxu0 0.0
        %2274 = vmatprep.subr.mxu0 0.0
        %2275 = vmatpush1.xpose.msra.mxu0 0.0
        %2276 = vmatprep.subr.mxu0 0.0
        %2277 = vmatpush1.xpose.msra.mxu0 0.0
        %2278 = vmatprep.subr.mxu0 0.0
        %2279 = vmatpush1.xpose.msra.mxu0 0.0
        %2280 = vmatprep.mubr.f32.mxu0 0.0
        %2281 = vmatmul.mubr.f32.gmra.mrb[0].mxu0 %v2211
        %v2282 = vpop.f32.mrb[0].mxu0
        %v2283 = vadd.f32 0.0, %v2282
        %v2284 = vpop.f32.mrb[0].mxu0
        %2285 = vdwg.mxu0
        %v2286 = vmul.f32 %v2283, 0.35355338
        %v2287 = vsel %vm706, %v2286, -inf
        %2288 = vmax.xlane.f32.xlu0 %v2287
        %v2289 = vpop.xlane.xlu0 %2288
        %v2290 = vsub.f32 %v2286, %v2289
        %v2291 = vmul.f32 %v2290, 1.442695
        %v2292 = vpow.pop %v2291
        %v2293 = vsel %vm706, %v2292, 0.0
        %2294 = vadd.xlane.f32.xlu0 %v2293
        %v2295 = vpop.xlane.xlu0 %2294
        %v2296 = vrcp.pop %v2295
        %v2297 = vmul.f32 %v2292, %v2296
        %v2299 = vsel %vm706, %v2297, 0
        %2301 = vmatprep.subr.mxu0 0.0
        %2302 = vmatpush1.msra.mxu0 %v2207
        %2303 = vmatprep.subr.mxu0 0.0
        %2304 = vmatpush1.msra.mxu0 0.0
        %2305 = vmatprep.subr.mxu0 0.0
        %2306 = vmatpush1.msra.mxu0 0.0
        %2307 = vmatprep.subr.mxu0 0.0
        %2308 = vmatpush1.msra.mxu0 0.0
        %2309 = vmatprep.subr.mxu0 0.0
        %2310 = vmatpush1.msra.mxu0 0.0
        %2311 = vmatprep.subr.mxu0 0.0
        %2312 = vmatpush1.msra.mxu0 0.0
        %2313 = vmatprep.subr.mxu0 0.0
        %2314 = vmatpush1.msra.mxu0 0.0
        %2315 = vmatprep.subr.mxu0 0.0
        %2316 = vmatpush1.msra.mxu0 0.0
        %2317 = vmatprep.subr.mxu0 0.0
        %2318 = vmatpush1.msra.mxu0 0.0
        %2319 = vmatprep.subr.mxu0 0.0
        %2320 = vmatpush1.msra.mxu0 0.0
        %2321 = vmatprep.subr.mxu0 0.0
        %2322 = vmatpush1.msra.mxu0 0.0
        %2323 = vmatprep.subr.mxu0 0.0
        %2324 = vmatpush1.msra.mxu0 0.0
        %2325 = vmatprep.subr.mxu0 0.0
        %2326 = vmatpush1.msra.mxu0 0.0
        %2327 = vmatprep.subr.mxu0 0.0
        %2328 = vmatpush1.msra.mxu0 0.0
        %2329 = vmatprep.subr.mxu0 0.0
        %2330 = vmatpush1.msra.mxu0 0.0
        %2331 = vmatprep.subr.mxu0 0.0
        %2332 = vmatpush1.msra.mxu0 0.0
        %2333 = vmatprep.subr.mxu0 0.0
        %2334 = vmatpush1.msra.mxu0 0.0
        %2335 = vmatprep.subr.mxu0 0.0
        %2336 = vmatpush1.msra.mxu0 0.0
        %2337 = vmatprep.subr.mxu0 0.0
        %2338 = vmatpush1.msra.mxu0 0.0
        %2339 = vmatprep.subr.mxu0 0.0
        %2340 = vmatpush1.msra.mxu0 0.0
        %2341 = vmatprep.subr.mxu0 0.0
        %2342 = vmatpush1.msra.mxu0 0.0
        %2343 = vmatprep.subr.mxu0 0.0
        %2344 = vmatpush1.msra.mxu0 0.0
        %2345 = vmatprep.subr.mxu0 0.0
        %2346 = vmatpush1.msra.mxu0 0.0
        %2347 = vmatprep.subr.mxu0 0.0
        %2348 = vmatpush1.msra.mxu0 0.0
        %2349 = vmatprep.subr.mxu0 0.0
        %2350 = vmatpush1.msra.mxu0 0.0
        %2351 = vmatprep.subr.mxu0 0.0
        %2352 = vmatpush1.msra.mxu0 0.0
        %2353 = vmatprep.subr.mxu0 0.0
        %2354 = vmatpush1.msra.mxu0 0.0
        %2355 = vmatprep.subr.mxu0 0.0
        %2356 = vmatpush1.msra.mxu0 0.0
        %2357 = vmatprep.subr.mxu0 0.0
        %2358 = vmatpush1.msra.mxu0 0.0
        %2359 = vmatprep.subr.mxu0 0.0
        %2360 = vmatpush1.msra.mxu0 0.0
        %2361 = vmatprep.subr.mxu0 0.0
        %2362 = vmatpush1.msra.mxu0 0.0
        %2363 = vmatprep.subr.mxu0 0.0
        %2364 = vmatpush1.msra.mxu0 0.0
        %2365 = vmatprep.mubr.f32.mxu0 0.0
        %2366 = vmatmul.mubr.f32.gmra.mrb[0].mxu0 %v2299
        %v2367 = vpop.f32.mrb[0].mxu0
        %v2368 = vadd.f32 0.0, %v2367
        %v2369 = vpop.f32.mrb[0].mxu0
        %2370 = vdwg.mxu0
        %v2371 = vld [vmem:[%s10 + $0x18] sm:$0xff]
        %v2373 = vsel %vm706, %v2368, 0
        %2375 = vmatprep.subr.mxu0 0.0
        %2376 = vmatpush1.msra.mxu0 %v2371
        %2377 = vmatprep.subr.mxu0 0.0
        %2378 = vmatpush1.msra.mxu0 0.0
        %2379 = vmatprep.subr.mxu0 0.0
        %2380 = vmatpush1.msra.mxu0 0.0
        %2381 = vmatprep.subr.mxu0 0.0
        %2382 = vmatpush1.msra.mxu0 0.0
        %2383 = vmatprep.subr.mxu0 0.0
        %2384 = vmatpush1.msra.mxu0 0.0
        %2385 = vmatprep.subr.mxu0 0.0
        %2386 = vmatpush1.msra.mxu0 0.0
        %2387 = vmatprep.subr.mxu0 0.0
        %2388 = vmatpush1.msra.mxu0 0.0
        %2389 = vmatprep.subr.mxu0 0.0
        %2390 = vmatpush1.msra.mxu0 0.0
        %2391 = vmatprep.subr.mxu0 0.0
        %2392 = vmatpush1.msra.mxu0 0.0
        %2393 = vmatprep.subr.mxu0 0.0
        %2394 = vmatpush1.msra.mxu0 0.0
        %2395 = vmatprep.subr.mxu0 0.0
        %2396 = vmatpush1.msra.mxu0 0.0
        %2397 = vmatprep.subr.mxu0 0.0
        %2398 = vmatpush1.msra.mxu0 0.0
        %2399 = vmatprep.subr.mxu0 0.0
        %2400 = vmatpush1.msra.mxu0 0.0
        %2401 = vmatprep.subr.mxu0 0.0
        %2402 = vmatpush1.msra.mxu0 0.0
        %2403 = vmatprep.subr.mxu0 0.0
        %2404 = vmatpush1.msra.mxu0 0.0
        %2405 = vmatprep.subr.mxu0 0.0
        %2406 = vmatpush1.msra.mxu0 0.0
        %2407 = vmatprep.subr.mxu0 0.0
        %2408 = vmatpush1.msra.mxu0 0.0
        %2409 = vmatprep.subr.mxu0 0.0
        %2410 = vmatpush1.msra.mxu0 0.0
        %2411 = vmatprep.subr.mxu0 0.0
        %2412 = vmatpush1.msra.mxu0 0.0
        %2413 = vmatprep.subr.mxu0 0.0
        %2414 = vmatpush1.msra.mxu0 0.0
        %2415 = vmatprep.subr.mxu0 0.0
        %2416 = vmatpush1.msra.mxu0 0.0
        %2417 = vmatprep.subr.mxu0 0.0
        %2418 = vmatpush1.msra.mxu0 0.0
        %2419 = vmatprep.subr.mxu0 0.0
        %2420 = vmatpush1.msra.mxu0 0.0
        %2421 = vmatprep.subr.mxu0 0.0
        %2422 = vmatpush1.msra.mxu0 0.0
        %2423 = vmatprep.subr.mxu0 0.0
        %2424 = vmatpush1.msra.mxu0 0.0
        %2425 = vmatprep.subr.mxu0 0.0
        %2426 = vmatpush1.msra.mxu0 0.0
        %2427 = vmatprep.subr.mxu0 0.0
        %2428 = vmatpush1.msra.mxu0 0.0
        %2429 = vmatprep.subr.mxu0 0.0
        %2430 = vmatpush1.msra.mxu0 0.0
        %2431 = vmatprep.subr.mxu0 0.0
        %2432 = vmatpush1.msra.mxu0 0.0
        %2433 = vmatprep.subr.mxu0 0.0
        %2434 = vmatpush1.msra.mxu0 0.0
        %2435 = vmatprep.subr.mxu0 0.0
        %2436 = vmatpush1.msra.mxu0 0.0
        %2437 = vmatprep.subr.mxu0 0.0
        %2438 = vmatpush1.msra.mxu0 0.0
        %2439 = vmatprep.mubr.f32.mxu0 0.0
        %2440 = vmatmul.mubr.f32.gmra.mrb[0].mxu0 %v2373
        %v2441 = vpop.f32.mrb[0].mxu0
        %v2442 = vadd.f32 0.0, %v2441
        %v2443 = vpop.f32.mrb[0].mxu0
        %2444 = vdwg.mxu0
        %v2445 = vadd.f32 %v2039, %v2442
        %v2446 = vadd.f32 %v782, %v2445
        %v2447 = vld [vmem:[%s11] sm:$0x1]
        %v2449 = vlaneseq
        %v2450 = vshrl.u32 %v2449, 7
        %v2451 = vsub.s32 0, %v2450
        %v2452 = vrot.slane %v2447, %v2451
        %v2454 = vadd.f32 %v2446, %v2452
        %v2455 = vld [vmem:[%s12] sm:$0x1]
        %v2456 = vld [vmem:[%s13] sm:$0x1]
        %v2457 = vsel %vm785, %v2454, 0.0
        %2458 = vadd.xlane.f32.xlu0 %v2457
        %v2459 = vpop.xlane.xlu0 %2458
        %v2460 = vmul.f32 %v2459, %v789
        %v2461 = vsub.f32 %v2454, %v2460
        %v2462 = vmul.f32 %v2461, %v2461
        %v2463 = vsel %vm785, %v2462, 0.0
        %2464 = vadd.xlane.f32.xlu0 %v2463
        %v2465 = vpop.xlane.xlu0 %2464
        %v2466 = vmul.f32 %v2465, 0.032258064
        %v2467 = vrsqrt.pop %v2466
        %v2468 = vmul.f32 %v2466, %v2467
        %vm2469 = vcmp.eq.f32.partialorder %v2466, inf
        %v2470 = vsel %vm2469, %v2466, %v2468
        %vm2471 = vcmp.eq.f32.partialorder %v2466, 0.0
        %v2472 = vand.u32 %v2466, 2147483648
        %v2473 = vsel %vm2471, %v2472, %v2470
        %v2474 = vadd.f32 %v2473, 1e-06
        %v2475 = vrcp.pop %v2474
        %v2476 = vmul.f32 %v2461, %v2475
        %v2478 = vlaneseq
        %v2479 = vshrl.u32 %v2478, 7
        %v2480 = vsub.s32 0, %v2479
        %v2481 = vrot.slane %v2455, %v2480
        %v2483 = vmul.f32 %v2481, %v2476
        %v2485 = vlaneseq
        %v2486 = vshrl.u32 %v2485, 7
        %v2487 = vsub.s32 0, %v2486
        %v2488 = vrot.slane %v2456, %v2487
        %v2490 = vadd.f32 %v2483, %v2488
        %v2491 = vld [vmem:[#allocation10] sm:$0xff]
        %v2492 = vld [vmem:[#allocation10 + $0x8] sm:$0xff]
        %v2493 = vld [vmem:[#allocation10 + $0x10] sm:$0xff]
        %v2494 = vld [vmem:[#allocation10 + $0x18] sm:$0xff]
        %v2495 = vld [vmem:[%s15] sm:$0x1]
        %v2497 = vlaneseq
        %v2498 = vshrl.u32 %v2497, 7
        %v2499 = vsub.s32 0, %v2498
        %v2500 = vrot.slane %v2495, %v2499
        %v2503 = vsel %vm785, %v2490, 0
        %2505 = vmatprep.subr.mxu0 0.0
        %2506 = vmatpush1.msra.mxu0 %v2491
        %2507 = vmatprep.subr.mxu0 0.0
        %2508 = vmatpush1.msra.mxu0 %v2492
        %2509 = vmatprep.subr.mxu0 0.0
        %2510 = vmatpush1.msra.mxu0 %v2493
        %2511 = vmatprep.subr.mxu0 0.0
        %2512 = vmatpush1.msra.mxu0 %v2494
        %2513 = vmatprep.subr.mxu0 0.0
        %2514 = vmatpush1.msra.mxu0 0.0
        %2515 = vmatprep.subr.mxu0 0.0
        %2516 = vmatpush1.msra.mxu0 0.0
        %2517 = vmatprep.subr.mxu0 0.0
        %2518 = vmatpush1.msra.mxu0 0.0
        %2519 = vmatprep.subr.mxu0 0.0
        %2520 = vmatpush1.msra.mxu0 0.0
        %2521 = vmatprep.subr.mxu0 0.0
        %2522 = vmatpush1.msra.mxu0 0.0
        %2523 = vmatprep.subr.mxu0 0.0
        %2524 = vmatpush1.msra.mxu0 0.0
        %2525 = vmatprep.subr.mxu0 0.0
        %2526 = vmatpush1.msra.mxu0 0.0
        %2527 = vmatprep.subr.mxu0 0.0
        %2528 = vmatpush1.msra.mxu0 0.0
        %2529 = vmatprep.subr.mxu0 0.0
        %2530 = vmatpush1.msra.mxu0 0.0
        %2531 = vmatprep.subr.mxu0 0.0
        %2532 = vmatpush1.msra.mxu0 0.0
        %2533 = vmatprep.subr.mxu0 0.0
        %2534 = vmatpush1.msra.mxu0 0.0
        %2535 = vmatprep.subr.mxu0 0.0
        %2536 = vmatpush1.msra.mxu0 0.0
        %2537 = vmatprep.subr.mxu0 0.0
        %2538 = vmatpush1.msra.mxu0 0.0
        %2539 = vmatprep.subr.mxu0 0.0
        %2540 = vmatpush1.msra.mxu0 0.0
        %2541 = vmatprep.subr.mxu0 0.0
        %2542 = vmatpush1.msra.mxu0 0.0
        %2543 = vmatprep.subr.mxu0 0.0
        %2544 = vmatpush1.msra.mxu0 0.0
        %2545 = vmatprep.subr.mxu0 0.0
        %2546 = vmatpush1.msra.mxu0 0.0
        %2547 = vmatprep.subr.mxu0 0.0
        %2548 = vmatpush1.msra.mxu0 0.0
        %2549 = vmatprep.subr.mxu0 0.0
        %2550 = vmatpush1.msra.mxu0 0.0
        %2551 = vmatprep.subr.mxu0 0.0
        %2552 = vmatpush1.msra.mxu0 0.0
        %2553 = vmatprep.subr.mxu0 0.0
        %2554 = vmatpush1.msra.mxu0 0.0
        %2555 = vmatprep.subr.mxu0 0.0
        %2556 = vmatpush1.msra.mxu0 0.0
        %2557 = vmatprep.subr.mxu0 0.0
        %2558 = vmatpush1.msra.mxu0 0.0
        %2559 = vmatprep.subr.mxu0 0.0
        %2560 = vmatpush1.msra.mxu0 0.0
        %2561 = vmatprep.subr.mxu0 0.0
        %2562 = vmatpush1.msra.mxu0 0.0
        %2563 = vmatprep.subr.mxu0 0.0
        %2564 = vmatpush1.msra.mxu0 0.0
        %2565 = vmatprep.subr.mxu0 0.0
        %2566 = vmatpush1.msra.mxu0 0.0
        %2567 = vmatprep.subr.mxu0 0.0
        %2568 = vmatpush1.msra.mxu0 0.0
        %2569 = vmatprep.mubr.f32.mxu0 0.0
        %2570 = vmatmul.mubr.f32.gmra.mrb[0].mxu0 %v2503
        %v2571 = vpop.f32.mrb[0].mxu0
        %v2572 = vadd.f32 %v2500, %v2571
        %v2573 = vpop.f32.mrb[0].mxu0
        %2574 = vdwg.mxu0
        %v2575 = vmax.f32 %v2572, 0.0
        %v2576 = vld [vmem:[%s16] sm:$0xff]
        %v2577 = vld [vmem:[%s16 + $0x8] sm:$0xff]
        %v2578 = vld [vmem:[%s16 + $0x10] sm:$0xff]
        %v2579 = vld [vmem:[%s16 + $0x18] sm:$0xff]
        %v2580 = vld [vmem:[%s16 + $0x20] sm:$0xff]
        %v2581 = vld [vmem:[%s16 + $0x28] sm:$0xff]
        %v2582 = vld [vmem:[%s16 + $0x30] sm:$0xff]
        %v2583 = vld [vmem:[%s16 + $0x38] sm:$0xff]
        %v2584 = vld [vmem:[%s17] sm:$0x1]
        %v2586 = vlaneseq
        %v2587 = vshrl.u32 %v2586, 7
        %v2588 = vsub.s32 0, %v2587
        %v2589 = vrot.slane %v2584, %v2588
        %vm2591 = vcmask 523264
        %v2593 = vsel %vm2591, %v2575, 0
        %2595 = vmatprep.subr.mxu0 0.0
        %2596 = vmatpush1.msra.mxu0 %v2576
        %2597 = vmatprep.subr.mxu0 0.0
        %2598 = vmatpush1.msra.mxu0 %v2577
        %2599 = vmatprep.subr.mxu0 0.0
        %2600 = vmatpush1.msra.mxu0 %v2578
        %2601 = vmatprep.subr.mxu0 0.0
        %2602 = vmatpush1.msra.mxu0 %v2579
        %2603 = vmatprep.subr.mxu0 0.0
        %2604 = vmatpush1.msra.mxu0 %v2580
        %2605 = vmatprep.subr.mxu0 0.0
        %2606 = vmatpush1.msra.mxu0 %v2581
        %2607 = vmatprep.subr.mxu0 0.0
        %2608 = vmatpush1.msra.mxu0 %v2582
        %2609 = vmatprep.subr.mxu0 0.0
        %2610 = vmatpush1.msra.mxu0 %v2583
        %2611 = vmatprep.subr.mxu0 0.0
        %2612 = vmatpush1.msra.mxu0 0.0
        %2613 = vmatprep.subr.mxu0 0.0
        %2614 = vmatpush1.msra.mxu0 0.0
        %2615 = vmatprep.subr.mxu0 0.0
        %2616 = vmatpush1.msra.mxu0 0.0
        %2617 = vmatprep.subr.mxu0 0.0
        %2618 = vmatpush1.msra.mxu0 0.0
        %2619 = vmatprep.subr.mxu0 0.0
        %2620 = vmatpush1.msra.mxu0 0.0
        %2621 = vmatprep.subr.mxu0 0.0
        %2622 = vmatpush1.msra.mxu0 0.0
        %2623 = vmatprep.subr.mxu0 0.0
        %2624 = vmatpush1.msra.mxu0 0.0
        %2625 = vmatprep.subr.mxu0 0.0
        %2626 = vmatpush1.msra.mxu0 0.0
        %2627 = vmatprep.subr.mxu0 0.0
        %2628 = vmatpush1.msra.mxu0 0.0
        %2629 = vmatprep.subr.mxu0 0.0
        %2630 = vmatpush1.msra.mxu0 0.0
        %2631 = vmatprep.subr.mxu0 0.0
        %2632 = vmatpush1.msra.mxu0 0.0
        %2633 = vmatprep.subr.mxu0 0.0
        %2634 = vmatpush1.msra.mxu0 0.0
        %2635 = vmatprep.subr.mxu0 0.0
        %2636 = vmatpush1.msra.mxu0 0.0
        %2637 = vmatprep.subr.mxu0 0.0
        %2638 = vmatpush1.msra.mxu0 0.0
        %2639 = vmatprep.subr.mxu0 0.0
        %2640 = vmatpush1.msra.mxu0 0.0
        %2641 = vmatprep.subr.mxu0 0.0
        %2642 = vmatpush1.msra.mxu0 0.0
        %2643 = vmatprep.subr.mxu0 0.0
        %2644 = vmatpush1.msra.mxu0 0.0
        %2645 = vmatprep.subr.mxu0 0.0
        %2646 = vmatpush1.msra.mxu0 0.0
        %2647 = vmatprep.subr.mxu0 0.0
        %2648 = vmatpush1.msra.mxu0 0.0
        %2649 = vmatprep.subr.mxu0 0.0
        %2650 = vmatpush1.msra.mxu0 0.0
        %2651 = vmatprep.subr.mxu0 0.0
        %2652 = vmatpush1.msra.mxu0 0.0
        %2653 = vmatprep.subr.mxu0 0.0
        %2654 = vmatpush1.msra.mxu0 0.0
        %2655 = vmatprep.subr.mxu0 0.0
        %2656 = vmatpush1.msra.mxu0 0.0
        %2657 = vmatprep.subr.mxu0 0.0
        %2658 = vmatpush1.msra.mxu0 0.0
        %2659 = vmatprep.mubr.f32.mxu0 0.0
        %2660 = vmatmul.mubr.f32.gmra.mrb[0].mxu0 %v2593
        %v2661 = vpop.f32.mrb[0].mxu0
        %v2662 = vadd.f32 %v2589, %v2661
        %v2663 = vpop.f32.mrb[0].mxu0
        %2664 = vdwg.mxu0
        %v2665 = vadd.f32 %v2454, %v2662
        %s2666 = scalar_lea.vmem %s4, 1
        %v2667 = vld [vmem:[%s2666] sm:$0x1]
        %s2668 = scalar_lea.vmem %s5, 1
        %v2669 = vld [vmem:[%s2668] sm:$0x1]
        %v2670 = vsel %vm785, %v2665, 0.0
        %2671 = vadd.xlane.f32.xlu0 %v2670
        %v2672 = vpop.xlane.xlu0 %2671
        %v2673 = vmul.f32 %v2672, %v789
        %v2674 = vsub.f32 %v2665, %v2673
        %v2675 = vmul.f32 %v2674, %v2674
        %v2676 = vsel %vm785, %v2675, 0.0
        %2677 = vadd.xlane.f32.xlu0 %v2676
        %v2678 = vpop.xlane.xlu0 %2677
        %v2679 = vmul.f32 %v2678, 0.032258064
        %v2680 = vrsqrt.pop %v2679
        %v2681 = vmul.f32 %v2679, %v2680
        %vm2682 = vcmp.eq.f32.partialorder %v2679, inf
        %v2683 = vsel %vm2682, %v2679, %v2681
        %vm2684 = vcmp.eq.f32.partialorder %v2679, 0.0
        %v2685 = vand.u32 %v2679, 2147483648
        %v2686 = vsel %vm2684, %v2685, %v2683
        %v2687 = vadd.f32 %v2686, 1e-06
        %v2688 = vrcp.pop %v2687
        %v2689 = vmul.f32 %v2674, %v2688
        %v2691 = vlaneseq
        %v2692 = vshrl.u32 %v2691, 7
        %v2693 = vsub.s32 0, %v2692
        %v2694 = vrot.slane %v2667, %v2693
        %v2696 = vmul.f32 %v2694, %v2689
        %v2698 = vlaneseq
        %v2699 = vshrl.u32 %v2698, 7
        %v2700 = vsub.s32 0, %v2699
        %v2701 = vrot.slane %v2669, %v2700
        %v2703 = vadd.f32 %v2696, %v2701
        %s2704 = scalar_lea.vmem %s6, 32
        %v2705 = vld [vmem:[%s2704] sm:$0xff]
        %v2706 = vld [vmem:[%s2704 + $0x8] sm:$0xff]
        %v2707 = vld [vmem:[%s2704 + $0x10] sm:$0xff]
        %v2708 = vld [vmem:[%s2704 + $0x18] sm:$0xff]
        %s2709 = scalar_lea.vmem %s7, 1
        %v2710 = vld [vmem:[%s2709] sm:$0x1]
        %v2712 = vlaneseq
        %v2713 = vshrl.u32 %v2712, 7
        %v2714 = vsub.s32 0, %v2713
        %v2715 = vrot.slane %v2710, %v2714
        %v2718 = vsel %vm785, %v2703, 0
        %2720 = vmatprep.subr.mxu0 0.0
        %2721 = vmatpush1.msra.mxu0 %v2705
        %2722 = vmatprep.subr.mxu0 0.0
        %2723 = vmatpush1.msra.mxu0 %v2706
        %2724 = vmatprep.subr.mxu0 0.0
        %2725 = vmatpush1.msra.mxu0 %v2707
        %2726 = vmatprep.subr.mxu0 0.0
        %2727 = vmatpush1.msra.mxu0 %v2708
        %2728 = vmatprep.subr.mxu0 0.0
        %2729 = vmatpush1.msra.mxu0 0.0
        %2730 = vmatprep.subr.mxu0 0.0
        %2731 = vmatpush1.msra.mxu0 0.0
        %2732 = vmatprep.subr.mxu0 0.0
        %2733 = vmatpush1.msra.mxu0 0.0
        %2734 = vmatprep.subr.mxu0 0.0
        %2735 = vmatpush1.msra.mxu0 0.0
        %2736 = vmatprep.subr.mxu0 0.0
        %2737 = vmatpush1.msra.mxu0 0.0
        %2738 = vmatprep.subr.mxu0 0.0
        %2739 = vmatpush1.msra.mxu0 0.0
        %2740 = vmatprep.subr.mxu0 0.0
        %2741 = vmatpush1.msra.mxu0 0.0
        %2742 = vmatprep.subr.mxu0 0.0
        %2743 = vmatpush1.msra.mxu0 0.0
        %2744 = vmatprep.subr.mxu0 0.0
        %2745 = vmatpush1.msra.mxu0 0.0
        %2746 = vmatprep.subr.mxu0 0.0
        %2747 = vmatpush1.msra.mxu0 0.0
        %2748 = vmatprep.subr.mxu0 0.0
        %2749 = vmatpush1.msra.mxu0 0.0
        %2750 = vmatprep.subr.mxu0 0.0
        %2751 = vmatpush1.msra.mxu0 0.0
        %2752 = vmatprep.subr.mxu0 0.0
        %2753 = vmatpush1.msra.mxu0 0.0
        %2754 = vmatprep.subr.mxu0 0.0
        %2755 = vmatpush1.msra.mxu0 0.0
        %2756 = vmatprep.subr.mxu0 0.0
        %2757 = vmatpush1.msra.mxu0 0.0
        %2758 = vmatprep.subr.mxu0 0.0
        %2759 = vmatpush1.msra.mxu0 0.0
        %2760 = vmatprep.subr.mxu0 0.0
        %2761 = vmatpush1.msra.mxu0 0.0
        %2762 = vmatprep.subr.mxu0 0.0
        %2763 = vmatpush1.msra.mxu0 0.0
        %2764 = vmatprep.subr.mxu0 0.0
        %2765 = vmatpush1.msra.mxu0 0.0
        %2766 = vmatprep.subr.mxu0 0.0
        %2767 = vmatpush1.msra.mxu0 0.0
        %2768 = vmatprep.subr.mxu0 0.0
        %2769 = vmatpush1.msra.mxu0 0.0
        %2770 = vmatprep.subr.mxu0 0.0
        %2771 = vmatpush1.msra.mxu0 0.0
        %2772 = vmatprep.subr.mxu0 0.0
        %2773 = vmatpush1.msra.mxu0 0.0
        %2774 = vmatprep.subr.mxu0 0.0
        %2775 = vmatpush1.msra.mxu0 0.0
        %2776 = vmatprep.subr.mxu0 0.0
        %2777 = vmatpush1.msra.mxu0 0.0
        %2778 = vmatprep.subr.mxu0 0.0
        %2779 = vmatpush1.msra.mxu0 0.0
        %2780 = vmatprep.subr.mxu0 0.0
        %2781 = vmatpush1.msra.mxu0 0.0
        %2782 = vmatprep.subr.mxu0 0.0
        %2783 = vmatpush1.msra.mxu0 0.0
        %2784 = vmatprep.mubr.f32.mxu0 0.0
        %2785 = vmatmul.mubr.f32.gmra.mrb[0].mxu0 %v2718
        %v2786 = vpop.f32.mrb[0].mxu0
        %v2787 = vadd.f32 %v2715, %v2786
        %v2788 = vpop.f32.mrb[0].mxu0
        %2789 = vdwg.mxu0
        %s2790 = scalar_lea.vmem %s8, 32
        %v2791 = vld [vmem:[%s2790] sm:$0xff]
        %v2792 = vld [vmem:[%s2790 + $0x8] sm:$0xff]
        %v2793 = vld [vmem:[%s2790 + $0x10] sm:$0xff]
        %v2794 = vld [vmem:[%s2790 + $0x18] sm:$0xff]
        %s2795 = scalar_lea.vmem %s9, 1
        %v2796 = vld [vmem:[%s2795] sm:$0x1]
        %v2798 = vlaneseq
        %v2799 = vshrl.u32 %v2798, 7
        %v2800 = vsub.s32 0, %v2799
        %v2801 = vrot.slane %v2796, %v2800
        %2803 = vmatprep.subr.mxu0 0.0
        %2804 = vmatpush1.msra.mxu0 %v2791
        %2805 = vmatprep.subr.mxu0 0.0
        %2806 = vmatpush1.msra.mxu0 %v2792
        %2807 = vmatprep.subr.mxu0 0.0
        %2808 = vmatpush1.msra.mxu0 %v2793
        %2809 = vmatprep.subr.mxu0 0.0
        %2810 = vmatpush1.msra.mxu0 %v2794
        %2811 = vmatprep.subr.mxu0 0.0
        %2812 = vmatpush1.msra.mxu0 0.0
        %2813 = vmatprep.subr.mxu0 0.0
        %2814 = vmatpush1.msra.mxu0 0.0
        %2815 = vmatprep.subr.mxu0 0.0
        %2816 = vmatpush1.msra.mxu0 0.0
        %2817 = vmatprep.subr.mxu0 0.0
        %2818 = vmatpush1.msra.mxu0 0.0
        %2819 = vmatprep.subr.mxu0 0.0
        %2820 = vmatpush1.msra.mxu0 0.0
        %2821 = vmatprep.subr.mxu0 0.0
        %2822 = vmatpush1.msra.mxu0 0.0
        %2823 = vmatprep.subr.mxu0 0.0
        %2824 = vmatpush1.msra.mxu0 0.0
        %2825 = vmatprep.subr.mxu0 0.0
        %2826 = vmatpush1.msra.mxu0 0.0
        %2827 = vmatprep.subr.mxu0 0.0
        %2828 = vmatpush1.msra.mxu0 0.0
        %2829 = vmatprep.subr.mxu0 0.0
        %2830 = vmatpush1.msra.mxu0 0.0
        %2831 = vmatprep.subr.mxu0 0.0
        %2832 = vmatpush1.msra.mxu0 0.0
        %2833 = vmatprep.subr.mxu0 0.0
        %2834 = vmatpush1.msra.mxu0 0.0
        %2835 = vmatprep.subr.mxu0 0.0
        %2836 = vmatpush1.msra.mxu0 0.0
        %2837 = vmatprep.subr.mxu0 0.0
        %2838 = vmatpush1.msra.mxu0 0.0
        %2839 = vmatprep.subr.mxu0 0.0
        %2840 = vmatpush1.msra.mxu0 0.0
        %2841 = vmatprep.subr.mxu0 0.0
        %2842 = vmatpush1.msra.mxu0 0.0
        %2843 = vmatprep.subr.mxu0 0.0
        %2844 = vmatpush1.msra.mxu0 0.0
        %2845 = vmatprep.subr.mxu0 0.0
        %2846 = vmatpush1.msra.mxu0 0.0
        %2847 = vmatprep.subr.mxu0 0.0
        %2848 = vmatpush1.msra.mxu0 0.0
        %2849 = vmatprep.subr.mxu0 0.0
        %2850 = vmatpush1.msra.mxu0 0.0
        %2851 = vmatprep.subr.mxu0 0.0
        %2852 = vmatpush1.msra.mxu0 0.0
        %2853 = vmatprep.subr.mxu0 0.0
        %2854 = vmatpush1.msra.mxu0 0.0
        %2855 = vmatprep.subr.mxu0 0.0
        %2856 = vmatpush1.msra.mxu0 0.0
        %2857 = vmatprep.subr.mxu0 0.0
        %2858 = vmatpush1.msra.mxu0 0.0
        %2859 = vmatprep.subr.mxu0 0.0
        %2860 = vmatpush1.msra.mxu0 0.0
        %2861 = vmatprep.subr.mxu0 0.0
        %2862 = vmatpush1.msra.mxu0 0.0
        %2863 = vmatprep.subr.mxu0 0.0
        %2864 = vmatpush1.msra.mxu0 0.0
        %2865 = vmatprep.subr.mxu0 0.0
        %2866 = vmatpush1.msra.mxu0 0.0
        %2867 = vmatprep.mubr.f32.mxu0 0.0
        %2868 = vmatmul.mubr.f32.gmra.mrb[0].mxu0 %v2718
        %v2869 = vpop.f32.mrb[0].mxu0
        %v2870 = vadd.f32 %v2801, %v2869
        %v2871 = vpop.f32.mrb[0].mxu0
        %2872 = vdwg.mxu0
        %v2874 = vsel %vm706, %v2787, 0
        %v2877 = vsel %vm706, %v2870, 0
        %2879 = vmatprep.subr.mxu0 0.0
        %2880 = vmatpush1.xpose.msra.mxu0 %v2877
        %2881 = vmatprep.subr.mxu0 0.0
        %2882 = vmatpush1.xpose.msra.mxu0 0.0
        %2883 = vmatprep.subr.mxu0 0.0
        %2884 = vmatpush1.xpose.msra.mxu0 0.0
        %2885 = vmatprep.subr.mxu0 0.0
        %2886 = vmatpush1.xpose.msra.mxu0 0.0
        %2887 = vmatprep.subr.mxu0 0.0
        %2888 = vmatpush1.xpose.msra.mxu0 0.0
        %2889 = vmatprep.subr.mxu0 0.0
        %2890 = vmatpush1.xpose.msra.mxu0 0.0
        %2891 = vmatprep.subr.mxu0 0.0
        %2892 = vmatpush1.xpose.msra.mxu0 0.0
        %2893 = vmatprep.subr.mxu0 0.0
        %2894 = vmatpush1.xpose.msra.mxu0 0.0
        %2895 = vmatprep.subr.mxu0 0.0
        %2896 = vmatpush1.xpose.msra.mxu0 0.0
        %2897 = vmatprep.subr.mxu0 0.0
        %2898 = vmatpush1.xpose.msra.mxu0 0.0
        %2899 = vmatprep.subr.mxu0 0.0
        %2900 = vmatpush1.xpose.msra.mxu0 0.0
        %2901 = vmatprep.subr.mxu0 0.0
        %2902 = vmatpush1.xpose.msra.mxu0 0.0
        %2903 = vmatprep.subr.mxu0 0.0
        %2904 = vmatpush1.xpose.msra.mxu0 0.0
        %2905 = vmatprep.subr.mxu0 0.0
        %2906 = vmatpush1.xpose.msra.mxu0 0.0
        %2907 = vmatprep.subr.mxu0 0.0
        %2908 = vmatpush1.xpose.msra.mxu0 0.0
        %2909 = vmatprep.subr.mxu0 0.0
        %2910 = vmatpush1.xpose.msra.mxu0 0.0
        %2911 = vmatprep.subr.mxu0 0.0
        %2912 = vmatpush1.xpose.msra.mxu0 0.0
        %2913 = vmatprep.subr.mxu0 0.0
        %2914 = vmatpush1.xpose.msra.mxu0 0.0
        %2915 = vmatprep.subr.mxu0 0.0
        %2916 = vmatpush1.xpose.msra.mxu0 0.0
        %2917 = vmatprep.subr.mxu0 0.0
        %2918 = vmatpush1.xpose.msra.mxu0 0.0
        %2919 = vmatprep.subr.mxu0 0.0
        %2920 = vmatpush1.xpose.msra.mxu0 0.0
        %2921 = vmatprep.subr.mxu0 0.0
        %2922 = vmatpush1.xpose.msra.mxu0 0.0
        %2923 = vmatprep.subr.mxu0 0.0
        %2924 = vmatpush1.xpose.msra.mxu0 0.0
        %2925 = vmatprep.subr.mxu0 0.0
        %2926 = vmatpush1.xpose.msra.mxu0 0.0
        %2927 = vmatprep.subr.mxu0 0.0
        %2928 = vmatpush1.xpose.msra.mxu0 0.0
        %2929 = vmatprep.subr.mxu0 0.0
        %2930 = vmatpush1.xpose.msra.mxu0 0.0
        %2931 = vmatprep.subr.mxu0 0.0
        %2932 = vmatpush1.xpose.msra.mxu0 0.0
        %2933 = vmatprep.subr.mxu0 0.0
        %2934 = vmatpush1.xpose.msra.mxu0 0.0
        %2935 = vmatprep.subr.mxu0 0.0
        %2936 = vmatpush1.xpose.msra.mxu0 0.0
        %2937 = vmatprep.subr.mxu0 0.0
        %2938 = vmatpush1.xpose.msra.mxu0 0.0
        %2939 = vmatprep.subr.mxu0 0.0
        %2940 = vmatpush1.xpose.msra.mxu0 0.0
        %2941 = vmatprep.subr.mxu0 0.0
        %2942 = vmatpush1.xpose.msra.mxu0 0.0
        %2943 = vmatprep.mubr.f32.mxu0 0.0
        %2944 = vmatmul.mubr.f32.gmra.mrb[0].mxu0 %v2874
        %v2945 = vpop.f32.mrb[0].mxu0
        %v2946 = vadd.f32 0.0, %v2945
        %v2947 = vpop.f32.mrb[0].mxu0
        %2948 = vdwg.mxu0
        %v2949 = vmul.f32 %v2946, 0.35355338
        %v2950 = vsel %vm706, %v2949, -inf
        %2951 = vmax.xlane.f32.xlu0 %v2950
        %v2952 = vpop.xlane.xlu0 %2951
        %v2953 = vsub.f32 %v2949, %v2952
        %v2954 = vmul.f32 %v2953, 1.442695
        %v2955 = vpow.pop %v2954
        %v2956 = vsel %vm706, %v2955, 0.0
        %2957 = vadd.xlane.f32.xlu0 %v2956
        %v2958 = vpop.xlane.xlu0 %2957
        %v2959 = vrcp.pop %v2958
        %v2960 = vmul.f32 %v2955, %v2959
        %v2962 = vsel %vm706, %v2960, 0
        %2964 = vmatprep.subr.mxu0 0.0
        %2965 = vmatpush1.msra.mxu0 %v2870
        %2966 = vmatprep.subr.mxu0 0.0
        %2967 = vmatpush1.msra.mxu0 0.0
        %2968 = vmatprep.subr.mxu0 0.0
        %2969 = vmatpush1.msra.mxu0 0.0
        %2970 = vmatprep.subr.mxu0 0.0
        %2971 = vmatpush1.msra.mxu0 0.0
        %2972 = vmatprep.subr.mxu0 0.0
        %2973 = vmatpush1.msra.mxu0 0.0
        %2974 = vmatprep.subr.mxu0 0.0
        %2975 = vmatpush1.msra.mxu0 0.0
        %2976 = vmatprep.subr.mxu0 0.0
        %2977 = vmatpush1.msra.mxu0 0.0
        %2978 = vmatprep.subr.mxu0 0.0
        %2979 = vmatpush1.msra.mxu0 0.0
        %2980 = vmatprep.subr.mxu0 0.0
        %2981 = vmatpush1.msra.mxu0 0.0
        %2982 = vmatprep.subr.mxu0 0.0
        %2983 = vmatpush1.msra.mxu0 0.0
        %2984 = vmatprep.subr.mxu0 0.0
        %2985 = vmatpush1.msra.mxu0 0.0
        %2986 = vmatprep.subr.mxu0 0.0
        %2987 = vmatpush1.msra.mxu0 0.0
        %2988 = vmatprep.subr.mxu0 0.0
        %2989 = vmatpush1.msra.mxu0 0.0
        %2990 = vmatprep.subr.mxu0 0.0
        %2991 = vmatpush1.msra.mxu0 0.0
        %2992 = vmatprep.subr.mxu0 0.0
        %2993 = vmatpush1.msra.mxu0 0.0
        %2994 = vmatprep.subr.mxu0 0.0
        %2995 = vmatpush1.msra.mxu0 0.0
        %2996 = vmatprep.subr.mxu0 0.0
        %2997 = vmatpush1.msra.mxu0 0.0
        %2998 = vmatprep.subr.mxu0 0.0
        %2999 = vmatpush1.msra.mxu0 0.0
        %3000 = vmatprep.subr.mxu0 0.0
        %3001 = vmatpush1.msra.mxu0 0.0
        %3002 = vmatprep.subr.mxu0 0.0
        %3003 = vmatpush1.msra.mxu0 0.0
        %3004 = vmatprep.subr.mxu0 0.0
        %3005 = vmatpush1.msra.mxu0 0.0
        %3006 = vmatprep.subr.mxu0 0.0
        %3007 = vmatpush1.msra.mxu0 0.0
        %3008 = vmatprep.subr.mxu0 0.0
        %3009 = vmatpush1.msra.mxu0 0.0
        %3010 = vmatprep.subr.mxu0 0.0
        %3011 = vmatpush1.msra.mxu0 0.0
        %3012 = vmatprep.subr.mxu0 0.0
        %3013 = vmatpush1.msra.mxu0 0.0
        %3014 = vmatprep.subr.mxu0 0.0
        %3015 = vmatpush1.msra.mxu0 0.0
        %3016 = vmatprep.subr.mxu0 0.0
        %3017 = vmatpush1.msra.mxu0 0.0
        %3018 = vmatprep.subr.mxu0 0.0
        %3019 = vmatpush1.msra.mxu0 0.0
        %3020 = vmatprep.subr.mxu0 0.0
        %3021 = vmatpush1.msra.mxu0 0.0
        %3022 = vmatprep.subr.mxu0 0.0
        %3023 = vmatpush1.msra.mxu0 0.0
        %3024 = vmatprep.subr.mxu0 0.0
        %3025 = vmatpush1.msra.mxu0 0.0
        %3026 = vmatprep.subr.mxu0 0.0
        %3027 = vmatpush1.msra.mxu0 0.0
        %3028 = vmatprep.mubr.f32.mxu0 0.0
        %3029 = vmatmul.mubr.f32.gmra.mrb[0].mxu0 %v2962
        %v3030 = vpop.f32.mrb[0].mxu0
        %v3031 = vadd.f32 0.0, %v3030
        %v3032 = vpop.f32.mrb[0].mxu0
        %3033 = vdwg.mxu0
        %s3034 = scalar_lea.vmem %s10, 32
        %v3035 = vld [vmem:[%s3034] sm:$0xff]
        %3040 = vrot.lane.b32.xlu0 %v2705, 120
        %v3041 = vpop.permute.xlu0 %3040
        %3042 = vrot.lane.b32.xlu0 %v2706, 120
        %v3043 = vpop.permute.xlu0 %3042
        %3044 = vrot.lane.b32.xlu0 %v2707, 120
        %v3045 = vpop.permute.xlu0 %3044
        %3046 = vrot.lane.b32.xlu0 %v2708, 120
        %v3047 = vpop.permute.xlu0 %3046
        %3052 = vrot.lane.b32.xlu0 %v2715, 120
        %v3053 = vpop.permute.xlu0 %3052
        %3055 = vmatprep.subr.mxu0 0.0
        %3056 = vmatpush1.msra.mxu0 %v3041
        %3057 = vmatprep.subr.mxu0 0.0
        %3058 = vmatpush1.msra.mxu0 %v3043
        %3059 = vmatprep.subr.mxu0 0.0
        %3060 = vmatpush1.msra.mxu0 %v3045
        %3061 = vmatprep.subr.mxu0 0.0
        %3062 = vmatpush1.msra.mxu0 %v3047
        %3063 = vmatprep.subr.mxu0 0.0
        %3064 = vmatpush1.msra.mxu0 0.0
        %3065 = vmatprep.subr.mxu0 0.0
        %3066 = vmatpush1.msra.mxu0 0.0
        %3067 = vmatprep.subr.mxu0 0.0
        %3068 = vmatpush1.msra.mxu0 0.0
        %3069 = vmatprep.subr.mxu0 0.0
        %3070 = vmatpush1.msra.mxu0 0.0
        %3071 = vmatprep.subr.mxu0 0.0
        %3072 = vmatpush1.msra.mxu0 0.0
        %3073 = vmatprep.subr.mxu0 0.0
        %3074 = vmatpush1.msra.mxu0 0.0
        %3075 = vmatprep.subr.mxu0 0.0
        %3076 = vmatpush1.msra.mxu0 0.0
        %3077 = vmatprep.subr.mxu0 0.0
        %3078 = vmatpush1.msra.mxu0 0.0
        %3079 = vmatprep.subr.mxu0 0.0
        %3080 = vmatpush1.msra.mxu0 0.0
        %3081 = vmatprep.subr.mxu0 0.0
        %3082 = vmatpush1.msra.mxu0 0.0
        %3083 = vmatprep.subr.mxu0 0.0
        %3084 = vmatpush1.msra.mxu0 0.0
        %3085 = vmatprep.subr.mxu0 0.0
        %3086 = vmatpush1.msra.mxu0 0.0
        %3087 = vmatprep.subr.mxu0 0.0
        %3088 = vmatpush1.msra.mxu0 0.0
        %3089 = vmatprep.subr.mxu0 0.0
        %3090 = vmatpush1.msra.mxu0 0.0
        %3091 = vmatprep.subr.mxu0 0.0
        %3092 = vmatpush1.msra.mxu0 0.0
        %3093 = vmatprep.subr.mxu0 0.0
        %3094 = vmatpush1.msra.mxu0 0.0
        %3095 = vmatprep.subr.mxu0 0.0
        %3096 = vmatpush1.msra.mxu0 0.0
        %3097 = vmatprep.subr.mxu0 0.0
        %3098 = vmatpush1.msra.mxu0 0.0
        %3099 = vmatprep.subr.mxu0 0.0
        %3100 = vmatpush1.msra.mxu0 0.0
        %3101 = vmatprep.subr.mxu0 0.0
        %3102 = vmatpush1.msra.mxu0 0.0
        %3103 = vmatprep.subr.mxu0 0.0
        %3104 = vmatpush1.msra.mxu0 0.0
        %3105 = vmatprep.subr.mxu0 0.0
        %3106 = vmatpush1.msra.mxu0 0.0
        %3107 = vmatprep.subr.mxu0 0.0
        %3108 = vmatpush1.msra.mxu0 0.0
        %3109 = vmatprep.subr.mxu0 0.0
        %3110 = vmatpush1.msra.mxu0 0.0
        %3111 = vmatprep.subr.mxu0 0.0
        %3112 = vmatpush1.msra.mxu0 0.0
        %3113 = vmatprep.subr.mxu0 0.0
        %3114 = vmatpush1.msra.mxu0 0.0
        %3115 = vmatprep.subr.mxu0 0.0
        %3116 = vmatpush1.msra.mxu0 0.0
        %3117 = vmatprep.subr.mxu0 0.0
        %3118 = vmatpush1.msra.mxu0 0.0
        %3119 = vmatprep.mubr.f32.mxu0 0.0
        %3120 = vmatmul.mubr.f32.gmra.mrb[0].mxu0 %v2718
        %v3121 = vpop.f32.mrb[0].mxu0
        %v3122 = vadd.f32 %v3053, %v3121
        %v3123 = vpop.f32.mrb[0].mxu0
        %3124 = vdwg.mxu0
        %3129 = vrot.lane.b32.xlu0 %v2791, 120
        %v3130 = vpop.permute.xlu0 %3129
        %3131 = vrot.lane.b32.xlu0 %v2792, 120
        %v3132 = vpop.permute.xlu0 %3131
        %3133 = vrot.lane.b32.xlu0 %v2793, 120
        %v3134 = vpop.permute.xlu0 %3133
        %3135 = vrot.lane.b32.xlu0 %v2794, 120
        %v3136 = vpop.permute.xlu0 %3135
        %3141 = vrot.lane.b32.xlu0 %v2801, 120
        %v3142 = vpop.permute.xlu0 %3141
        %3144 = vmatprep.subr.mxu0 0.0
        %3145 = vmatpush1.msra.mxu0 %v3130
        %3146 = vmatprep.subr.mxu0 0.0
        %3147 = vmatpush1.msra.mxu0 %v3132
        %3148 = vmatprep.subr.mxu0 0.0
        %3149 = vmatpush1.msra.mxu0 %v3134
        %3150 = vmatprep.subr.mxu0 0.0
        %3151 = vmatpush1.msra.mxu0 %v3136
        %3152 = vmatprep.subr.mxu0 0.0
        %3153 = vmatpush1.msra.mxu0 0.0
        %3154 = vmatprep.subr.mxu0 0.0
        %3155 = vmatpush1.msra.mxu0 0.0
        %3156 = vmatprep.subr.mxu0 0.0
        %3157 = vmatpush1.msra.mxu0 0.0
        %3158 = vmatprep.subr.mxu0 0.0
        %3159 = vmatpush1.msra.mxu0 0.0
        %3160 = vmatprep.subr.mxu0 0.0
        %3161 = vmatpush1.msra.mxu0 0.0
        %3162 = vmatprep.subr.mxu0 0.0
        %3163 = vmatpush1.msra.mxu0 0.0
        %3164 = vmatprep.subr.mxu0 0.0
        %3165 = vmatpush1.msra.mxu0 0.0
        %3166 = vmatprep.subr.mxu0 0.0
        %3167 = vmatpush1.msra.mxu0 0.0
        %3168 = vmatprep.subr.mxu0 0.0
        %3169 = vmatpush1.msra.mxu0 0.0
        %3170 = vmatprep.subr.mxu0 0.0
        %3171 = vmatpush1.msra.mxu0 0.0
        %3172 = vmatprep.subr.mxu0 0.0
        %3173 = vmatpush1.msra.mxu0 0.0
        %3174 = vmatprep.subr.mxu0 0.0
        %3175 = vmatpush1.msra.mxu0 0.0
        %3176 = vmatprep.subr.mxu0 0.0
        %3177 = vmatpush1.msra.mxu0 0.0
        %3178 = vmatprep.subr.mxu0 0.0
        %3179 = vmatpush1.msra.mxu0 0.0
        %3180 = vmatprep.subr.mxu0 0.0
        %3181 = vmatpush1.msra.mxu0 0.0
        %3182 = vmatprep.subr.mxu0 0.0
        %3183 = vmatpush1.msra.mxu0 0.0
        %3184 = vmatprep.subr.mxu0 0.0
        %3185 = vmatpush1.msra.mxu0 0.0
        %3186 = vmatprep.subr.mxu0 0.0
        %3187 = vmatpush1.msra.mxu0 0.0
        %3188 = vmatprep.subr.mxu0 0.0
        %3189 = vmatpush1.msra.mxu0 0.0
        %3190 = vmatprep.subr.mxu0 0.0
        %3191 = vmatpush1.msra.mxu0 0.0
        %3192 = vmatprep.subr.mxu0 0.0
        %3193 = vmatpush1.msra.mxu0 0.0
        %3194 = vmatprep.subr.mxu0 0.0
        %3195 = vmatpush1.msra.mxu0 0.0
        %3196 = vmatprep.subr.mxu0 0.0
        %3197 = vmatpush1.msra.mxu0 0.0
        %3198 = vmatprep.subr.mxu0 0.0
        %3199 = vmatpush1.msra.mxu0 0.0
        %3200 = vmatprep.subr.mxu0 0.0
        %3201 = vmatpush1.msra.mxu0 0.0
        %3202 = vmatprep.subr.mxu0 0.0
        %3203 = vmatpush1.msra.mxu0 0.0
        %3204 = vmatprep.subr.mxu0 0.0
        %3205 = vmatpush1.msra.mxu0 0.0
        %3206 = vmatprep.subr.mxu0 0.0
        %3207 = vmatpush1.msra.mxu0 0.0
        %3208 = vmatprep.mubr.f32.mxu0 0.0
        %3209 = vmatmul.mubr.f32.gmra.mrb[0].mxu0 %v2718
        %v3210 = vpop.f32.mrb[0].mxu0
        %v3211 = vadd.f32 %v3142, %v3210
        %v3212 = vpop.f32.mrb[0].mxu0
        %3213 = vdwg.mxu0
        %v3215 = vsel %vm706, %v3122, 0
        %v3218 = vsel %vm706, %v3211, 0
        %3220 = vmatprep.subr.mxu0 0.0
        %3221 = vmatpush1.xpose.msra.mxu0 %v3218
        %3222 = vmatprep.subr.mxu0 0.0
        %3223 = vmatpush1.xpose.msra.mxu0 0.0
        %3224 = vmatprep.subr.mxu0 0.0
        %3225 = vmatpush1.xpose.msra.mxu0 0.0
        %3226 = vmatprep.subr.mxu0 0.0
        %3227 = vmatpush1.xpose.msra.mxu0 0.0
        %3228 = vmatprep.subr.mxu0 0.0
        %3229 = vmatpush1.xpose.msra.mxu0 0.0
        %3230 = vmatprep.subr.mxu0 0.0
        %3231 = vmatpush1.xpose.msra.mxu0 0.0
        %3232 = vmatprep.subr.mxu0 0.0
        %3233 = vmatpush1.xpose.msra.mxu0 0.0
        %3234 = vmatprep.subr.mxu0 0.0
        %3235 = vmatpush1.xpose.msra.mxu0 0.0
        %3236 = vmatprep.subr.mxu0 0.0
        %3237 = vmatpush1.xpose.msra.mxu0 0.0
        %3238 = vmatprep.subr.mxu0 0.0
        %3239 = vmatpush1.xpose.msra.mxu0 0.0
        %3240 = vmatprep.subr.mxu0 0.0
        %3241 = vmatpush1.xpose.msra.mxu0 0.0
        %3242 = vmatprep.subr.mxu0 0.0
        %3243 = vmatpush1.xpose.msra.mxu0 0.0
        %3244 = vmatprep.subr.mxu0 0.0
        %3245 = vmatpush1.xpose.msra.mxu0 0.0
        %3246 = vmatprep.subr.mxu0 0.0
        %3247 = vmatpush1.xpose.msra.mxu0 0.0
        %3248 = vmatprep.subr.mxu0 0.0
        %3249 = vmatpush1.xpose.msra.mxu0 0.0
        %3250 = vmatprep.subr.mxu0 0.0
        %3251 = vmatpush1.xpose.msra.mxu0 0.0
        %3252 = vmatprep.subr.mxu0 0.0
        %3253 = vmatpush1.xpose.msra.mxu0 0.0
        %3254 = vmatprep.subr.mxu0 0.0
        %3255 = vmatpush1.xpose.msra.mxu0 0.0
        %3256 = vmatprep.subr.mxu0 0.0
        %3257 = vmatpush1.xpose.msra.mxu0 0.0
        %3258 = vmatprep.subr.mxu0 0.0
        %3259 = vmatpush1.xpose.msra.mxu0 0.0
        %3260 = vmatprep.subr.mxu0 0.0
        %3261 = vmatpush1.xpose.msra.mxu0 0.0
        %3262 = vmatprep.subr.mxu0 0.0
        %3263 = vmatpush1.xpose.msra.mxu0 0.0
        %3264 = vmatprep.subr.mxu0 0.0
        %3265 = vmatpush1.xpose.msra.mxu0 0.0
        %3266 = vmatprep.subr.mxu0 0.0
        %3267 = vmatpush1.xpose.msra.mxu0 0.0
        %3268 = vmatprep.subr.mxu0 0.0
        %3269 = vmatpush1.xpose.msra.mxu0 0.0
        %3270 = vmatprep.subr.mxu0 0.0
        %3271 = vmatpush1.xpose.msra.mxu0 0.0
        %3272 = vmatprep.subr.mxu0 0.0
        %3273 = vmatpush1.xpose.msra.mxu0 0.0
        %3274 = vmatprep.subr.mxu0 0.0
        %3275 = vmatpush1.xpose.msra.mxu0 0.0
        %3276 = vmatprep.subr.mxu0 0.0
        %3277 = vmatpush1.xpose.msra.mxu0 0.0
        %3278 = vmatprep.subr.mxu0 0.0
        %3279 = vmatpush1.xpose.msra.mxu0 0.0
        %3280 = vmatprep.subr.mxu0 0.0
        %3281 = vmatpush1.xpose.msra.mxu0 0.0
        %3282 = vmatprep.subr.mxu0 0.0
        %3283 = vmatpush1.xpose.msra.mxu0 0.0
        %3284 = vmatprep.mubr.f32.mxu0 0.0
        %3285 = vmatmul.mubr.f32.gmra.mrb[0].mxu0 %v3215
        %v3286 = vpop.f32.mrb[0].mxu0
        %v3287 = vadd.f32 0.0, %v3286
        %v3288 = vpop.f32.mrb[0].mxu0
        %3289 = vdwg.mxu0
        %v3290 = vmul.f32 %v3287, 0.35355338
        %v3291 = vsel %vm706, %v3290, -inf
        %3292 = vmax.xlane.f32.xlu0 %v3291
        %v3293 = vpop.xlane.xlu0 %3292
        %v3294 = vsub.f32 %v3290, %v3293
        %v3295 = vmul.f32 %v3294, 1.442695
        %v3296 = vpow.pop %v3295
        %v3297 = vsel %vm706, %v3296, 0.0
        %3298 = vadd.xlane.f32.xlu0 %v3297
        %v3299 = vpop.xlane.xlu0 %3298
        %v3300 = vrcp.pop %v3299
        %v3301 = vmul.f32 %v3296, %v3300
        %v3303 = vsel %vm706, %v3301, 0
        %3305 = vmatprep.subr.mxu0 0.0
        %3306 = vmatpush1.msra.mxu0 %v3211
        %3307 = vmatprep.subr.mxu0 0.0
        %3308 = vmatpush1.msra.mxu0 0.0
        %3309 = vmatprep.subr.mxu0 0.0
        %3310 = vmatpush1.msra.mxu0 0.0
        %3311 = vmatprep.subr.mxu0 0.0
        %3312 = vmatpush1.msra.mxu0 0.0
        %3313 = vmatprep.subr.mxu0 0.0
        %3314 = vmatpush1.msra.mxu0 0.0
        %3315 = vmatprep.subr.mxu0 0.0
        %3316 = vmatpush1.msra.mxu0 0.0
        %3317 = vmatprep.subr.mxu0 0.0
        %3318 = vmatpush1.msra.mxu0 0.0
        %3319 = vmatprep.subr.mxu0 0.0
        %3320 = vmatpush1.msra.mxu0 0.0
        %3321 = vmatprep.subr.mxu0 0.0
        %3322 = vmatpush1.msra.mxu0 0.0
        %3323 = vmatprep.subr.mxu0 0.0
        %3324 = vmatpush1.msra.mxu0 0.0
        %3325 = vmatprep.subr.mxu0 0.0
        %3326 = vmatpush1.msra.mxu0 0.0
        %3327 = vmatprep.subr.mxu0 0.0
        %3328 = vmatpush1.msra.mxu0 0.0
        %3329 = vmatprep.subr.mxu0 0.0
        %3330 = vmatpush1.msra.mxu0 0.0
        %3331 = vmatprep.subr.mxu0 0.0
        %3332 = vmatpush1.msra.mxu0 0.0
        %3333 = vmatprep.subr.mxu0 0.0
        %3334 = vmatpush1.msra.mxu0 0.0
        %3335 = vmatprep.subr.mxu0 0.0
        %3336 = vmatpush1.msra.mxu0 0.0
        %3337 = vmatprep.subr.mxu0 0.0
        %3338 = vmatpush1.msra.mxu0 0.0
        %3339 = vmatprep.subr.mxu0 0.0
        %3340 = vmatpush1.msra.mxu0 0.0
        %3341 = vmatprep.subr.mxu0 0.0
        %3342 = vmatpush1.msra.mxu0 0.0
        %3343 = vmatprep.subr.mxu0 0.0
        %3344 = vmatpush1.msra.mxu0 0.0
        %3345 = vmatprep.subr.mxu0 0.0
        %3346 = vmatpush1.msra.mxu0 0.0
        %3347 = vmatprep.subr.mxu0 0.0
        %3348 = vmatpush1.msra.mxu0 0.0
        %3349 = vmatprep.subr.mxu0 0.0
        %3350 = vmatpush1.msra.mxu0 0.0
        %3351 = vmatprep.subr.mxu0 0.0
        %3352 = vmatpush1.msra.mxu0 0.0
        %3353 = vmatprep.subr.mxu0 0.0
        %3354 = vmatpush1.msra.mxu0 0.0
        %3355 = vmatprep.subr.mxu0 0.0
        %3356 = vmatpush1.msra.mxu0 0.0
        %3357 = vmatprep.subr.mxu0 0.0
        %3358 = vmatpush1.msra.mxu0 0.0
        %3359 = vmatprep.subr.mxu0 0.0
        %3360 = vmatpush1.msra.mxu0 0.0
        %3361 = vmatprep.subr.mxu0 0.0
        %3362 = vmatpush1.msra.mxu0 0.0
        %3363 = vmatprep.subr.mxu0 0.0
        %3364 = vmatpush1.msra.mxu0 0.0
        %3365 = vmatprep.subr.mxu0 0.0
        %3366 = vmatpush1.msra.mxu0 0.0
        %3367 = vmatprep.subr.mxu0 0.0
        %3368 = vmatpush1.msra.mxu0 0.0
        %3369 = vmatprep.mubr.f32.mxu0 0.0
        %3370 = vmatmul.mubr.f32.gmra.mrb[0].mxu0 %v3303
        %v3371 = vpop.f32.mrb[0].mxu0
        %v3372 = vadd.f32 0.0, %v3371
        %v3373 = vpop.f32.mrb[0].mxu0
        %3374 = vdwg.mxu0
        %v3375 = vld [vmem:[%s3034 + $0x8] sm:$0xff]
        %v3377 = vsel %vm706, %v3372, 0
        %3379 = vmatprep.subr.mxu0 0.0
        %3380 = vmatpush1.msra.mxu0 %v3375
        %3381 = vmatprep.subr.mxu0 0.0
        %3382 = vmatpush1.msra.mxu0 0.0
        %3383 = vmatprep.subr.mxu0 0.0
        %3384 = vmatpush1.msra.mxu0 0.0
        %3385 = vmatprep.subr.mxu0 0.0
        %3386 = vmatpush1.msra.mxu0 0.0
        %3387 = vmatprep.subr.mxu0 0.0
        %3388 = vmatpush1.msra.mxu0 0.0
        %3389 = vmatprep.subr.mxu0 0.0
        %3390 = vmatpush1.msra.mxu0 0.0
        %3391 = vmatprep.subr.mxu0 0.0
        %3392 = vmatpush1.msra.mxu0 0.0
        %3393 = vmatprep.subr.mxu0 0.0
        %3394 = vmatpush1.msra.mxu0 0.0
        %3395 = vmatprep.subr.mxu0 0.0
        %3396 = vmatpush1.msra.mxu0 0.0
        %3397 = vmatprep.subr.mxu0 0.0
        %3398 = vmatpush1.msra.mxu0 0.0
        %3399 = vmatprep.subr.mxu0 0.0
        %3400 = vmatpush1.msra.mxu0 0.0
        %3401 = vmatprep.subr.mxu0 0.0
        %3402 = vmatpush1.msra.mxu0 0.0
        %3403 = vmatprep.subr.mxu0 0.0
        %3404 = vmatpush1.msra.mxu0 0.0
        %3405 = vmatprep.subr.mxu0 0.0
        %3406 = vmatpush1.msra.mxu0 0.0
        %3407 = vmatprep.subr.mxu0 0.0
        %3408 = vmatpush1.msra.mxu0 0.0
        %3409 = vmatprep.subr.mxu0 0.0
        %3410 = vmatpush1.msra.mxu0 0.0
        %3411 = vmatprep.subr.mxu0 0.0
        %3412 = vmatpush1.msra.mxu0 0.0
        %3413 = vmatprep.subr.mxu0 0.0
        %3414 = vmatpush1.msra.mxu0 0.0
        %3415 = vmatprep.subr.mxu0 0.0
        %3416 = vmatpush1.msra.mxu0 0.0
        %3417 = vmatprep.subr.mxu0 0.0
        %3418 = vmatpush1.msra.mxu0 0.0
        %3419 = vmatprep.subr.mxu0 0.0
        %3420 = vmatpush1.msra.mxu0 0.0
        %3421 = vmatprep.subr.mxu0 0.0
        %3422 = vmatpush1.msra.mxu0 0.0
        %3423 = vmatprep.subr.mxu0 0.0
        %3424 = vmatpush1.msra.mxu0 0.0
        %3425 = vmatprep.subr.mxu0 0.0
        %3426 = vmatpush1.msra.mxu0 0.0
        %3427 = vmatprep.subr.mxu0 0.0
        %3428 = vmatpush1.msra.mxu0 0.0
        %3429 = vmatprep.subr.mxu0 0.0
        %3430 = vmatpush1.msra.mxu0 0.0
        %3431 = vmatprep.subr.mxu0 0.0
        %3432 = vmatpush1.msra.mxu0 0.0
        %3433 = vmatprep.subr.mxu0 0.0
        %3434 = vmatpush1.msra.mxu0 0.0
        %3435 = vmatprep.subr.mxu0 0.0
        %3436 = vmatpush1.msra.mxu0 0.0
        %3437 = vmatprep.subr.mxu0 0.0
        %3438 = vmatpush1.msra.mxu0 0.0
        %3439 = vmatprep.subr.mxu0 0.0
        %3440 = vmatpush1.msra.mxu0 0.0
        %3441 = vmatprep.subr.mxu0 0.0
        %3442 = vmatpush1.msra.mxu0 0.0
        %3443 = vmatprep.mubr.f32.mxu0 0.0
        %3444 = vmatmul.mubr.f32.gmra.mrb[0].mxu0 %v3377
        %v3445 = vpop.f32.mrb[0].mxu0
        %v3446 = vadd.f32 0.0, %v3445
        %v3447 = vpop.f32.mrb[0].mxu0
        %3448 = vdwg.mxu0
        %v3450 = vsel %vm706, %v3031, 0
        %3452 = vmatprep.subr.mxu0 0.0
        %3453 = vmatpush1.msra.mxu0 %v3035
        %3454 = vmatprep.subr.mxu0 0.0
        %3455 = vmatpush1.msra.mxu0 0.0
        %3456 = vmatprep.subr.mxu0 0.0
        %3457 = vmatpush1.msra.mxu0 0.0
        %3458 = vmatprep.subr.mxu0 0.0
        %3459 = vmatpush1.msra.mxu0 0.0
        %3460 = vmatprep.subr.mxu0 0.0
        %3461 = vmatpush1.msra.mxu0 0.0
        %3462 = vmatprep.subr.mxu0 0.0
        %3463 = vmatpush1.msra.mxu0 0.0
        %3464 = vmatprep.subr.mxu0 0.0
        %3465 = vmatpush1.msra.mxu0 0.0
        %3466 = vmatprep.subr.mxu0 0.0
        %3467 = vmatpush1.msra.mxu0 0.0
        %3468 = vmatprep.subr.mxu0 0.0
        %3469 = vmatpush1.msra.mxu0 0.0
        %3470 = vmatprep.subr.mxu0 0.0
        %3471 = vmatpush1.msra.mxu0 0.0
        %3472 = vmatprep.subr.mxu0 0.0
        %3473 = vmatpush1.msra.mxu0 0.0
        %3474 = vmatprep.subr.mxu0 0.0
        %3475 = vmatpush1.msra.mxu0 0.0
        %3476 = vmatprep.subr.mxu0 0.0
        %3477 = vmatpush1.msra.mxu0 0.0
        %3478 = vmatprep.subr.mxu0 0.0
        %3479 = vmatpush1.msra.mxu0 0.0
        %3480 = vmatprep.subr.mxu0 0.0
        %3481 = vmatpush1.msra.mxu0 0.0
        %3482 = vmatprep.subr.mxu0 0.0
        %3483 = vmatpush1.msra.mxu0 0.0
        %3484 = vmatprep.subr.mxu0 0.0
        %3485 = vmatpush1.msra.mxu0 0.0
        %3486 = vmatprep.subr.mxu0 0.0
        %3487 = vmatpush1.msra.mxu0 0.0
        %3488 = vmatprep.subr.mxu0 0.0
        %3489 = vmatpush1.msra.mxu0 0.0
        %3490 = vmatprep.subr.mxu0 0.0
        %3491 = vmatpush1.msra.mxu0 0.0
        %3492 = vmatprep.subr.mxu0 0.0
        %3493 = vmatpush1.msra.mxu0 0.0
        %3494 = vmatprep.subr.mxu0 0.0
        %3495 = vmatpush1.msra.mxu0 0.0
        %3496 = vmatprep.subr.mxu0 0.0
        %3497 = vmatpush1.msra.mxu0 0.0
        %3498 = vmatprep.subr.mxu0 0.0
        %3499 = vmatpush1.msra.mxu0 0.0
        %3500 = vmatprep.subr.mxu0 0.0
        %3501 = vmatpush1.msra.mxu0 0.0
        %3502 = vmatprep.subr.mxu0 0.0
        %3503 = vmatpush1.msra.mxu0 0.0
        %3504 = vmatprep.subr.mxu0 0.0
        %3505 = vmatpush1.msra.mxu0 0.0
        %3506 = vmatprep.subr.mxu0 0.0
        %3507 = vmatpush1.msra.mxu0 0.0
        %3508 = vmatprep.subr.mxu0 0.0
        %3509 = vmatpush1.msra.mxu0 0.0
        %3510 = vmatprep.subr.mxu0 0.0
        %3511 = vmatpush1.msra.mxu0 0.0
        %3512 = vmatprep.subr.mxu0 0.0
        %3513 = vmatpush1.msra.mxu0 0.0
        %3514 = vmatprep.subr.mxu0 0.0
        %3515 = vmatpush1.msra.mxu0 0.0
        %3516 = vmatprep.mubr.f32.mxu0 0.0
        %3517 = vmatmul.mubr.f32.gmra.mrb[0].mxu0 %v3450
        %v3518 = vpop.f32.mrb[0].mxu0
        %v3519 = vadd.f32 %v3446, %v3518
        %v3520 = vpop.f32.mrb[0].mxu0
        %3521 = vdwg.mxu0
        %3522 = vrot.lane.b32.xlu0 %v2705, 112
        %v3523 = vpop.permute.xlu0 %3522
        %3524 = vrot.lane.b32.xlu0 %v2706, 112
        %v3525 = vpop.permute.xlu0 %3524
        %3526 = vrot.lane.b32.xlu0 %v2707, 112
        %v3527 = vpop.permute.xlu0 %3526
        %3528 = vrot.lane.b32.xlu0 %v2708, 112
        %v3529 = vpop.permute.xlu0 %3528
        %3534 = vrot.lane.b32.xlu0 %v2715, 112
        %v3535 = vpop.permute.xlu0 %3534
        %3537 = vmatprep.subr.mxu0 0.0
        %3538 = vmatpush1.msra.mxu0 %v3523
        %3539 = vmatprep.subr.mxu0 0.0
        %3540 = vmatpush1.msra.mxu0 %v3525
        %3541 = vmatprep.subr.mxu0 0.0
        %3542 = vmatpush1.msra.mxu0 %v3527
        %3543 = vmatprep.subr.mxu0 0.0
        %3544 = vmatpush1.msra.mxu0 %v3529
        %3545 = vmatprep.subr.mxu0 0.0
        %3546 = vmatpush1.msra.mxu0 0.0
        %3547 = vmatprep.subr.mxu0 0.0
        %3548 = vmatpush1.msra.mxu0 0.0
        %3549 = vmatprep.subr.mxu0 0.0
        %3550 = vmatpush1.msra.mxu0 0.0
        %3551 = vmatprep.subr.mxu0 0.0
        %3552 = vmatpush1.msra.mxu0 0.0
        %3553 = vmatprep.subr.mxu0 0.0
        %3554 = vmatpush1.msra.mxu0 0.0
        %3555 = vmatprep.subr.mxu0 0.0
        %3556 = vmatpush1.msra.mxu0 0.0
        %3557 = vmatprep.subr.mxu0 0.0
        %3558 = vmatpush1.msra.mxu0 0.0
        %3559 = vmatprep.subr.mxu0 0.0
        %3560 = vmatpush1.msra.mxu0 0.0
        %3561 = vmatprep.subr.mxu0 0.0
        %3562 = vmatpush1.msra.mxu0 0.0
        %3563 = vmatprep.subr.mxu0 0.0
        %3564 = vmatpush1.msra.mxu0 0.0
        %3565 = vmatprep.subr.mxu0 0.0
        %3566 = vmatpush1.msra.mxu0 0.0
        %3567 = vmatprep.subr.mxu0 0.0
        %3568 = vmatpush1.msra.mxu0 0.0
        %3569 = vmatprep.subr.mxu0 0.0
        %3570 = vmatpush1.msra.mxu0 0.0
        %3571 = vmatprep.subr.mxu0 0.0
        %3572 = vmatpush1.msra.mxu0 0.0
        %3573 = vmatprep.subr.mxu0 0.0
        %3574 = vmatpush1.msra.mxu0 0.0
        %3575 = vmatprep.subr.mxu0 0.0
        %3576 = vmatpush1.msra.mxu0 0.0
        %3577 = vmatprep.subr.mxu0 0.0
        %3578 = vmatpush1.msra.mxu0 0.0
        %3579 = vmatprep.subr.mxu0 0.0
        %3580 = vmatpush1.msra.mxu0 0.0
        %3581 = vmatprep.subr.mxu0 0.0
        %3582 = vmatpush1.msra.mxu0 0.0
        %3583 = vmatprep.subr.mxu0 0.0
        %3584 = vmatpush1.msra.mxu0 0.0
        %3585 = vmatprep.subr.mxu0 0.0
        %3586 = vmatpush1.msra.mxu0 0.0
        %3587 = vmatprep.subr.mxu0 0.0
        %3588 = vmatpush1.msra.mxu0 0.0
        %3589 = vmatprep.subr.mxu0 0.0
        %3590 = vmatpush1.msra.mxu0 0.0
        %3591 = vmatprep.subr.mxu0 0.0
        %3592 = vmatpush1.msra.mxu0 0.0
        %3593 = vmatprep.subr.mxu0 0.0
        %3594 = vmatpush1.msra.mxu0 0.0
        %3595 = vmatprep.subr.mxu0 0.0
        %3596 = vmatpush1.msra.mxu0 0.0
        %3597 = vmatprep.subr.mxu0 0.0
        %3598 = vmatpush1.msra.mxu0 0.0
        %3599 = vmatprep.subr.mxu0 0.0
        %3600 = vmatpush1.msra.mxu0 0.0
        %3601 = vmatprep.mubr.f32.mxu0 0.0
        %3602 = vmatmul.mubr.f32.gmra.mrb[0].mxu0 %v2718
        %v3603 = vpop.f32.mrb[0].mxu0
        %v3604 = vadd.f32 %v3535, %v3603
        %v3605 = vpop.f32.mrb[0].mxu0
        %3606 = vdwg.mxu0
        %3607 = vrot.lane.b32.xlu0 %v2791, 112
        %v3608 = vpop.permute.xlu0 %3607
        %3609 = vrot.lane.b32.xlu0 %v2792, 112
        %v3610 = vpop.permute.xlu0 %3609
        %3611 = vrot.lane.b32.xlu0 %v2793, 112
        %v3612 = vpop.permute.xlu0 %3611
        %3613 = vrot.lane.b32.xlu0 %v2794, 112
        %v3614 = vpop.permute.xlu0 %3613
        %3619 = vrot.lane.b32.xlu0 %v2801, 112
        %v3620 = vpop.permute.xlu0 %3619
        %3622 = vmatprep.subr.mxu0 0.0
        %3623 = vmatpush1.msra.mxu0 %v3608
        %3624 = vmatprep.subr.mxu0 0.0
        %3625 = vmatpush1.msra.mxu0 %v3610
        %3626 = vmatprep.subr.mxu0 0.0
        %3627 = vmatpush1.msra.mxu0 %v3612
        %3628 = vmatprep.subr.mxu0 0.0
        %3629 = vmatpush1.msra.mxu0 %v3614
        %3630 = vmatprep.subr.mxu0 0.0
        %3631 = vmatpush1.msra.mxu0 0.0
        %3632 = vmatprep.subr.mxu0 0.0
        %3633 = vmatpush1.msra.mxu0 0.0
        %3634 = vmatprep.subr.mxu0 0.0
        %3635 = vmatpush1.msra.mxu0 0.0
        %3636 = vmatprep.subr.mxu0 0.0
        %3637 = vmatpush1.msra.mxu0 0.0
        %3638 = vmatprep.subr.mxu0 0.0
        %3639 = vmatpush1.msra.mxu0 0.0
        %3640 = vmatprep.subr.mxu0 0.0
        %3641 = vmatpush1.msra.mxu0 0.0
        %3642 = vmatprep.subr.mxu0 0.0
        %3643 = vmatpush1.msra.mxu0 0.0
        %3644 = vmatprep.subr.mxu0 0.0
        %3645 = vmatpush1.msra.mxu0 0.0
        %3646 = vmatprep.subr.mxu0 0.0
        %3647 = vmatpush1.msra.mxu0 0.0
        %3648 = vmatprep.subr.mxu0 0.0
        %3649 = vmatpush1.msra.mxu0 0.0
        %3650 = vmatprep.subr.mxu0 0.0
        %3651 = vmatpush1.msra.mxu0 0.0
        %3652 = vmatprep.subr.mxu0 0.0
        %3653 = vmatpush1.msra.mxu0 0.0
        %3654 = vmatprep.subr.mxu0 0.0
        %3655 = vmatpush1.msra.mxu0 0.0
        %3656 = vmatprep.subr.mxu0 0.0
        %3657 = vmatpush1.msra.mxu0 0.0
        %3658 = vmatprep.subr.mxu0 0.0
        %3659 = vmatpush1.msra.mxu0 0.0
        %3660 = vmatprep.subr.mxu0 0.0
        %3661 = vmatpush1.msra.mxu0 0.0
        %3662 = vmatprep.subr.mxu0 0.0
        %3663 = vmatpush1.msra.mxu0 0.0
        %3664 = vmatprep.subr.mxu0 0.0
        %3665 = vmatpush1.msra.mxu0 0.0
        %3666 = vmatprep.subr.mxu0 0.0
        %3667 = vmatpush1.msra.mxu0 0.0
        %3668 = vmatprep.subr.mxu0 0.0
        %3669 = vmatpush1.msra.mxu0 0.0
        %3670 = vmatprep.subr.mxu0 0.0
        %3671 = vmatpush1.msra.mxu0 0.0
        %3672 = vmatprep.subr.mxu0 0.0
        %3673 = vmatpush1.msra.mxu0 0.0
        %3674 = vmatprep.subr.mxu0 0.0
        %3675 = vmatpush1.msra.mxu0 0.0
        %3676 = vmatprep.subr.mxu0 0.0
        %3677 = vmatpush1.msra.mxu0 0.0
        %3678 = vmatprep.subr.mxu0 0.0
        %3679 = vmatpush1.msra.mxu0 0.0
        %3680 = vmatprep.subr.mxu0 0.0
        %3681 = vmatpush1.msra.mxu0 0.0
        %3682 = vmatprep.subr.mxu0 0.0
        %3683 = vmatpush1.msra.mxu0 0.0
        %3684 = vmatprep.subr.mxu0 0.0
        %3685 = vmatpush1.msra.mxu0 0.0
        %3686 = vmatprep.mubr.f32.mxu0 0.0
        %3687 = vmatmul.mubr.f32.gmra.mrb[0].mxu0 %v2718
        %v3688 = vpop.f32.mrb[0].mxu0
        %v3689 = vadd.f32 %v3620, %v3688
        %v3690 = vpop.f32.mrb[0].mxu0
        %3691 = vdwg.mxu0
        %v3693 = vsel %vm706, %v3604, 0
        %v3696 = vsel %vm706, %v3689, 0
        %3698 = vmatprep.subr.mxu0 0.0
        %3699 = vmatpush1.xpose.msra.mxu0 %v3696
        %3700 = vmatprep.subr.mxu0 0.0
        %3701 = vmatpush1.xpose.msra.mxu0 0.0
        %3702 = vmatprep.subr.mxu0 0.0
        %3703 = vmatpush1.xpose.msra.mxu0 0.0
        %3704 = vmatprep.subr.mxu0 0.0
        %3705 = vmatpush1.xpose.msra.mxu0 0.0
        %3706 = vmatprep.subr.mxu0 0.0
        %3707 = vmatpush1.xpose.msra.mxu0 0.0
        %3708 = vmatprep.subr.mxu0 0.0
        %3709 = vmatpush1.xpose.msra.mxu0 0.0
        %3710 = vmatprep.subr.mxu0 0.0
        %3711 = vmatpush1.xpose.msra.mxu0 0.0
        %3712 = vmatprep.subr.mxu0 0.0
        %3713 = vmatpush1.xpose.msra.mxu0 0.0
        %3714 = vmatprep.subr.mxu0 0.0
        %3715 = vmatpush1.xpose.msra.mxu0 0.0
        %3716 = vmatprep.subr.mxu0 0.0
        %3717 = vmatpush1.xpose.msra.mxu0 0.0
        %3718 = vmatprep.subr.mxu0 0.0
        %3719 = vmatpush1.xpose.msra.mxu0 0.0
        %3720 = vmatprep.subr.mxu0 0.0
        %3721 = vmatpush1.xpose.msra.mxu0 0.0
        %3722 = vmatprep.subr.mxu0 0.0
        %3723 = vmatpush1.xpose.msra.mxu0 0.0
        %3724 = vmatprep.subr.mxu0 0.0
        %3725 = vmatpush1.xpose.msra.mxu0 0.0
        %3726 = vmatprep.subr.mxu0 0.0
        %3727 = vmatpush1.xpose.msra.mxu0 0.0
        %3728 = vmatprep.subr.mxu0 0.0
        %3729 = vmatpush1.xpose.msra.mxu0 0.0
        %3730 = vmatprep.subr.mxu0 0.0
        %3731 = vmatpush1.xpose.msra.mxu0 0.0
        %3732 = vmatprep.subr.mxu0 0.0
        %3733 = vmatpush1.xpose.msra.mxu0 0.0
        %3734 = vmatprep.subr.mxu0 0.0
        %3735 = vmatpush1.xpose.msra.mxu0 0.0
        %3736 = vmatprep.subr.mxu0 0.0
        %3737 = vmatpush1.xpose.msra.mxu0 0.0
        %3738 = vmatprep.subr.mxu0 0.0
        %3739 = vmatpush1.xpose.msra.mxu0 0.0
        %3740 = vmatprep.subr.mxu0 0.0
        %3741 = vmatpush1.xpose.msra.mxu0 0.0
        %3742 = vmatprep.subr.mxu0 0.0
        %3743 = vmatpush1.xpose.msra.mxu0 0.0
        %3744 = vmatprep.subr.mxu0 0.0
        %3745 = vmatpush1.xpose.msra.mxu0 0.0
        %3746 = vmatprep.subr.mxu0 0.0
        %3747 = vmatpush1.xpose.msra.mxu0 0.0
        %3748 = vmatprep.subr.mxu0 0.0
        %3749 = vmatpush1.xpose.msra.mxu0 0.0
        %3750 = vmatprep.subr.mxu0 0.0
        %3751 = vmatpush1.xpose.msra.mxu0 0.0
        %3752 = vmatprep.subr.mxu0 0.0
        %3753 = vmatpush1.xpose.msra.mxu0 0.0
        %3754 = vmatprep.subr.mxu0 0.0
        %3755 = vmatpush1.xpose.msra.mxu0 0.0
        %3756 = vmatprep.subr.mxu0 0.0
        %3757 = vmatpush1.xpose.msra.mxu0 0.0
        %3758 = vmatprep.subr.mxu0 0.0
        %3759 = vmatpush1.xpose.msra.mxu0 0.0
        %3760 = vmatprep.subr.mxu0 0.0
        %3761 = vmatpush1.xpose.msra.mxu0 0.0
        %3762 = vmatprep.mubr.f32.mxu0 0.0
        %3763 = vmatmul.mubr.f32.gmra.mrb[0].mxu0 %v3693
        %v3764 = vpop.f32.mrb[0].mxu0
        %v3765 = vadd.f32 0.0, %v3764
        %v3766 = vpop.f32.mrb[0].mxu0
        %3767 = vdwg.mxu0
        %v3768 = vmul.f32 %v3765, 0.35355338
        %v3769 = vsel %vm706, %v3768, -inf
        %3770 = vmax.xlane.f32.xlu0 %v3769
        %v3771 = vpop.xlane.xlu0 %3770
        %v3772 = vsub.f32 %v3768, %v3771
        %v3773 = vmul.f32 %v3772, 1.442695
        %v3774 = vpow.pop %v3773
        %v3775 = vsel %vm706, %v3774, 0.0
        %3776 = vadd.xlane.f32.xlu0 %v3775
        %v3777 = vpop.xlane.xlu0 %3776
        %v3778 = vrcp.pop %v3777
        %v3779 = vmul.f32 %v3774, %v3778
        %v3781 = vsel %vm706, %v3779, 0
        %3783 = vmatprep.subr.mxu0 0.0
        %3784 = vmatpush1.msra.mxu0 %v3689
        %3785 = vmatprep.subr.mxu0 0.0
        %3786 = vmatpush1.msra.mxu0 0.0
        %3787 = vmatprep.subr.mxu0 0.0
        %3788 = vmatpush1.msra.mxu0 0.0
        %3789 = vmatprep.subr.mxu0 0.0
        %3790 = vmatpush1.msra.mxu0 0.0
        %3791 = vmatprep.subr.mxu0 0.0
        %3792 = vmatpush1.msra.mxu0 0.0
        %3793 = vmatprep.subr.mxu0 0.0
        %3794 = vmatpush1.msra.mxu0 0.0
        %3795 = vmatprep.subr.mxu0 0.0
        %3796 = vmatpush1.msra.mxu0 0.0
        %3797 = vmatprep.subr.mxu0 0.0
        %3798 = vmatpush1.msra.mxu0 0.0
        %3799 = vmatprep.subr.mxu0 0.0
        %3800 = vmatpush1.msra.mxu0 0.0
        %3801 = vmatprep.subr.mxu0 0.0
        %3802 = vmatpush1.msra.mxu0 0.0
        %3803 = vmatprep.subr.mxu0 0.0
        %3804 = vmatpush1.msra.mxu0 0.0
        %3805 = vmatprep.subr.mxu0 0.0
        %3806 = vmatpush1.msra.mxu0 0.0
        %3807 = vmatprep.subr.mxu0 0.0
        %3808 = vmatpush1.msra.mxu0 0.0
        %3809 = vmatprep.subr.mxu0 0.0
        %3810 = vmatpush1.msra.mxu0 0.0
        %3811 = vmatprep.subr.mxu0 0.0
        %3812 = vmatpush1.msra.mxu0 0.0
        %3813 = vmatprep.subr.mxu0 0.0
        %3814 = vmatpush1.msra.mxu0 0.0
        %3815 = vmatprep.subr.mxu0 0.0
        %3816 = vmatpush1.msra.mxu0 0.0
        %3817 = vmatprep.subr.mxu0 0.0
        %3818 = vmatpush1.msra.mxu0 0.0
        %3819 = vmatprep.subr.mxu0 0.0
        %3820 = vmatpush1.msra.mxu0 0.0
        %3821 = vmatprep.subr.mxu0 0.0
        %3822 = vmatpush1.msra.mxu0 0.0
        %3823 = vmatprep.subr.mxu0 0.0
        %3824 = vmatpush1.msra.mxu0 0.0
        %3825 = vmatprep.subr.mxu0 0.0
        %3826 = vmatpush1.msra.mxu0 0.0
        %3827 = vmatprep.subr.mxu0 0.0
        %3828 = vmatpush1.msra.mxu0 0.0
        %3829 = vmatprep.subr.mxu0 0.0
        %3830 = vmatpush1.msra.mxu0 0.0
        %3831 = vmatprep.subr.mxu0 0.0
        %3832 = vmatpush1.msra.mxu0 0.0
        %3833 = vmatprep.subr.mxu0 0.0
        %3834 = vmatpush1.msra.mxu0 0.0
        %3835 = vmatprep.subr.mxu0 0.0
        %3836 = vmatpush1.msra.mxu0 0.0
        %3837 = vmatprep.subr.mxu0 0.0
        %3838 = vmatpush1.msra.mxu0 0.0
        %3839 = vmatprep.subr.mxu0 0.0
        %3840 = vmatpush1.msra.mxu0 0.0
        %3841 = vmatprep.subr.mxu0 0.0
        %3842 = vmatpush1.msra.mxu0 0.0
        %3843 = vmatprep.subr.mxu0 0.0
        %3844 = vmatpush1.msra.mxu0 0.0
        %3845 = vmatprep.subr.mxu0 0.0
        %3846 = vmatpush1.msra.mxu0 0.0
        %3847 = vmatprep.mubr.f32.mxu0 0.0
        %3848 = vmatmul.mubr.f32.gmra.mrb[0].mxu0 %v3781
        %v3849 = vpop.f32.mrb[0].mxu0
        %v3850 = vadd.f32 0.0, %v3849
        %v3851 = vpop.f32.mrb[0].mxu0
        %3852 = vdwg.mxu0
        %v3853 = vld [vmem:[%s3034 + $0x10] sm:$0xff]
        %v3855 = vsel %vm706, %v3850, 0
        %3857 = vmatprep.subr.mxu0 0.0
        %3858 = vmatpush1.msra.mxu0 %v3853
        %3859 = vmatprep.subr.mxu0 0.0
        %3860 = vmatpush1.msra.mxu0 0.0
        %3861 = vmatprep.subr.mxu0 0.0
        %3862 = vmatpush1.msra.mxu0 0.0
        %3863 = vmatprep.subr.mxu0 0.0
        %3864 = vmatpush1.msra.mxu0 0.0
        %3865 = vmatprep.subr.mxu0 0.0
        %3866 = vmatpush1.msra.mxu0 0.0
        %3867 = vmatprep.subr.mxu0 0.0
        %3868 = vmatpush1.msra.mxu0 0.0
        %3869 = vmatprep.subr.mxu0 0.0
        %3870 = vmatpush1.msra.mxu0 0.0
        %3871 = vmatprep.subr.mxu0 0.0
        %3872 = vmatpush1.msra.mxu0 0.0
        %3873 = vmatprep.subr.mxu0 0.0
        %3874 = vmatpush1.msra.mxu0 0.0
        %3875 = vmatprep.subr.mxu0 0.0
        %3876 = vmatpush1.msra.mxu0 0.0
        %3877 = vmatprep.subr.mxu0 0.0
        %3878 = vmatpush1.msra.mxu0 0.0
        %3879 = vmatprep.subr.mxu0 0.0
        %3880 = vmatpush1.msra.mxu0 0.0
        %3881 = vmatprep.subr.mxu0 0.0
        %3882 = vmatpush1.msra.mxu0 0.0
        %3883 = vmatprep.subr.mxu0 0.0
        %3884 = vmatpush1.msra.mxu0 0.0
        %3885 = vmatprep.subr.mxu0 0.0
        %3886 = vmatpush1.msra.mxu0 0.0
        %3887 = vmatprep.subr.mxu0 0.0
        %3888 = vmatpush1.msra.mxu0 0.0
        %3889 = vmatprep.subr.mxu0 0.0
        %3890 = vmatpush1.msra.mxu0 0.0
        %3891 = vmatprep.subr.mxu0 0.0
        %3892 = vmatpush1.msra.mxu0 0.0
        %3893 = vmatprep.subr.mxu0 0.0
        %3894 = vmatpush1.msra.mxu0 0.0
        %3895 = vmatprep.subr.mxu0 0.0
        %3896 = vmatpush1.msra.mxu0 0.0
        %3897 = vmatprep.subr.mxu0 0.0
        %3898 = vmatpush1.msra.mxu0 0.0
        %3899 = vmatprep.subr.mxu0 0.0
        %3900 = vmatpush1.msra.mxu0 0.0
        %3901 = vmatprep.subr.mxu0 0.0
        %3902 = vmatpush1.msra.mxu0 0.0
        %3903 = vmatprep.subr.mxu0 0.0
        %3904 = vmatpush1.msra.mxu0 0.0
        %3905 = vmatprep.subr.mxu0 0.0
        %3906 = vmatpush1.msra.mxu0 0.0
        %3907 = vmatprep.subr.mxu0 0.0
        %3908 = vmatpush1.msra.mxu0 0.0
        %3909 = vmatprep.subr.mxu0 0.0
        %3910 = vmatpush1.msra.mxu0 0.0
        %3911 = vmatprep.subr.mxu0 0.0
        %3912 = vmatpush1.msra.mxu0 0.0
        %3913 = vmatprep.subr.mxu0 0.0
        %3914 = vmatpush1.msra.mxu0 0.0
        %3915 = vmatprep.subr.mxu0 0.0
        %3916 = vmatpush1.msra.mxu0 0.0
        %3917 = vmatprep.subr.mxu0 0.0
        %3918 = vmatpush1.msra.mxu0 0.0
        %3919 = vmatprep.subr.mxu0 0.0
        %3920 = vmatpush1.msra.mxu0 0.0
        %3921 = vmatprep.mubr.f32.mxu0 0.0
        %3922 = vmatmul.mubr.f32.gmra.mrb[0].mxu0 %v3855
        %v3923 = vpop.f32.mrb[0].mxu0
        %v3924 = vadd.f32 0.0, %v3923
        %v3925 = vpop.f32.mrb[0].mxu0
        %3926 = vdwg.mxu0
        %v3927 = vadd.f32 %v3519, %v3924
        %3928 = vrot.lane.b32.xlu0 %v2705, 104
        %v3929 = vpop.permute.xlu0 %3928
        %3930 = vrot.lane.b32.xlu0 %v2706, 104
        %v3931 = vpop.permute.xlu0 %3930
        %3932 = vrot.lane.b32.xlu0 %v2707, 104
        %v3933 = vpop.permute.xlu0 %3932
        %3934 = vrot.lane.b32.xlu0 %v2708, 104
        %v3935 = vpop.permute.xlu0 %3934
        %3940 = vrot.lane.b32.xlu0 %v2715, 104
        %v3941 = vpop.permute.xlu0 %3940
        %3943 = vmatprep.subr.mxu0 0.0
        %3944 = vmatpush1.msra.mxu0 %v3929
        %3945 = vmatprep.subr.mxu0 0.0
        %3946 = vmatpush1.msra.mxu0 %v3931
        %3947 = vmatprep.subr.mxu0 0.0
        %3948 = vmatpush1.msra.mxu0 %v3933
        %3949 = vmatprep.subr.mxu0 0.0
        %3950 = vmatpush1.msra.mxu0 %v3935
        %3951 = vmatprep.subr.mxu0 0.0
        %3952 = vmatpush1.msra.mxu0 0.0
        %3953 = vmatprep.subr.mxu0 0.0
        %3954 = vmatpush1.msra.mxu0 0.0
        %3955 = vmatprep.subr.mxu0 0.0
        %3956 = vmatpush1.msra.mxu0 0.0
        %3957 = vmatprep.subr.mxu0 0.0
        %3958 = vmatpush1.msra.mxu0 0.0
        %3959 = vmatprep.subr.mxu0 0.0
        %3960 = vmatpush1.msra.mxu0 0.0
        %3961 = vmatprep.subr.mxu0 0.0
        %3962 = vmatpush1.msra.mxu0 0.0
        %3963 = vmatprep.subr.mxu0 0.0
        %3964 = vmatpush1.msra.mxu0 0.0
        %3965 = vmatprep.subr.mxu0 0.0
        %3966 = vmatpush1.msra.mxu0 0.0
        %3967 = vmatprep.subr.mxu0 0.0
        %3968 = vmatpush1.msra.mxu0 0.0
        %3969 = vmatprep.subr.mxu0 0.0
        %3970 = vmatpush1.msra.mxu0 0.0
        %3971 = vmatprep.subr.mxu0 0.0
        %3972 = vmatpush1.msra.mxu0 0.0
        %3973 = vmatprep.subr.mxu0 0.0
        %3974 = vmatpush1.msra.mxu0 0.0
        %3975 = vmatprep.subr.mxu0 0.0
        %3976 = vmatpush1.msra.mxu0 0.0
        %3977 = vmatprep.subr.mxu0 0.0
        %3978 = vmatpush1.msra.mxu0 0.0
        %3979 = vmatprep.subr.mxu0 0.0
        %3980 = vmatpush1.msra.mxu0 0.0
        %3981 = vmatprep.subr.mxu0 0.0
        %3982 = vmatpush1.msra.mxu0 0.0
        %3983 = vmatprep.subr.mxu0 0.0
        %3984 = vmatpush1.msra.mxu0 0.0
        %3985 = vmatprep.subr.mxu0 0.0
        %3986 = vmatpush1.msra.mxu0 0.0
        %3987 = vmatprep.subr.mxu0 0.0
        %3988 = vmatpush1.msra.mxu0 0.0
        %3989 = vmatprep.subr.mxu0 0.0
        %3990 = vmatpush1.msra.mxu0 0.0
        %3991 = vmatprep.subr.mxu0 0.0
        %3992 = vmatpush1.msra.mxu0 0.0
        %3993 = vmatprep.subr.mxu0 0.0
        %3994 = vmatpush1.msra.mxu0 0.0
        %3995 = vmatprep.subr.mxu0 0.0
        %3996 = vmatpush1.msra.mxu0 0.0
        %3997 = vmatprep.subr.mxu0 0.0
        %3998 = vmatpush1.msra.mxu0 0.0
        %3999 = vmatprep.subr.mxu0 0.0
        %4000 = vmatpush1.msra.mxu0 0.0
        %4001 = vmatprep.subr.mxu0 0.0
        %4002 = vmatpush1.msra.mxu0 0.0
        %4003 = vmatprep.subr.mxu0 0.0
        %4004 = vmatpush1.msra.mxu0 0.0
        %4005 = vmatprep.subr.mxu0 0.0
        %4006 = vmatpush1.msra.mxu0 0.0
        %4007 = vmatprep.mubr.f32.mxu0 0.0
        %4008 = vmatmul.mubr.f32.gmra.mrb[0].mxu0 %v2718
        %v4009 = vpop.f32.mrb[0].mxu0
        %v4010 = vadd.f32 %v3941, %v4009
        %v4011 = vpop.f32.mrb[0].mxu0
        %4012 = vdwg.mxu0
        %4013 = vrot.lane.b32.xlu0 %v2791, 104
        %v4014 = vpop.permute.xlu0 %4013
        %4015 = vrot.lane.b32.xlu0 %v2792, 104
        %v4016 = vpop.permute.xlu0 %4015
        %4017 = vrot.lane.b32.xlu0 %v2793, 104
        %v4018 = vpop.permute.xlu0 %4017
        %4019 = vrot.lane.b32.xlu0 %v2794, 104
        %v4020 = vpop.permute.xlu0 %4019
        %4025 = vrot.lane.b32.xlu0 %v2801, 104
        %v4026 = vpop.permute.xlu0 %4025
        %4028 = vmatprep.subr.mxu0 0.0
        %4029 = vmatpush1.msra.mxu0 %v4014
        %4030 = vmatprep.subr.mxu0 0.0
        %4031 = vmatpush1.msra.mxu0 %v4016
        %4032 = vmatprep.subr.mxu0 0.0
        %4033 = vmatpush1.msra.mxu0 %v4018
        %4034 = vmatprep.subr.mxu0 0.0
        %4035 = vmatpush1.msra.mxu0 %v4020
        %4036 = vmatprep.subr.mxu0 0.0
        %4037 = vmatpush1.msra.mxu0 0.0
        %4038 = vmatprep.subr.mxu0 0.0
        %4039 = vmatpush1.msra.mxu0 0.0
        %4040 = vmatprep.subr.mxu0 0.0
        %4041 = vmatpush1.msra.mxu0 0.0
        %4042 = vmatprep.subr.mxu0 0.0
        %4043 = vmatpush1.msra.mxu0 0.0
        %4044 = vmatprep.subr.mxu0 0.0
        %4045 = vmatpush1.msra.mxu0 0.0
        %4046 = vmatprep.subr.mxu0 0.0
        %4047 = vmatpush1.msra.mxu0 0.0
        %4048 = vmatprep.subr.mxu0 0.0
        %4049 = vmatpush1.msra.mxu0 0.0
        %4050 = vmatprep.subr.mxu0 0.0
        %4051 = vmatpush1.msra.mxu0 0.0
        %4052 = vmatprep.subr.mxu0 0.0
        %4053 = vmatpush1.msra.mxu0 0.0
        %4054 = vmatprep.subr.mxu0 0.0
        %4055 = vmatpush1.msra.mxu0 0.0
        %4056 = vmatprep.subr.mxu0 0.0
        %4057 = vmatpush1.msra.mxu0 0.0
        %4058 = vmatprep.subr.mxu0 0.0
        %4059 = vmatpush1.msra.mxu0 0.0
        %4060 = vmatprep.subr.mxu0 0.0
        %4061 = vmatpush1.msra.mxu0 0.0
        %4062 = vmatprep.subr.mxu0 0.0
        %4063 = vmatpush1.msra.mxu0 0.0
        %4064 = vmatprep.subr.mxu0 0.0
        %4065 = vmatpush1.msra.mxu0 0.0
        %4066 = vmatprep.subr.mxu0 0.0
        %4067 = vmatpush1.msra.mxu0 0.0
        %4068 = vmatprep.subr.mxu0 0.0
        %4069 = vmatpush1.msra.mxu0 0.0
        %4070 = vmatprep.subr.mxu0 0.0
        %4071 = vmatpush1.msra.mxu0 0.0
        %4072 = vmatprep.subr.mxu0 0.0
        %4073 = vmatpush1.msra.mxu0 0.0
        %4074 = vmatprep.subr.mxu0 0.0
        %4075 = vmatpush1.msra.mxu0 0.0
        %4076 = vmatprep.subr.mxu0 0.0
        %4077 = vmatpush1.msra.mxu0 0.0
        %4078 = vmatprep.subr.mxu0 0.0
        %4079 = vmatpush1.msra.mxu0 0.0
        %4080 = vmatprep.subr.mxu0 0.0
        %4081 = vmatpush1.msra.mxu0 0.0
        %4082 = vmatprep.subr.mxu0 0.0
        %4083 = vmatpush1.msra.mxu0 0.0
        %4084 = vmatprep.subr.mxu0 0.0
        %4085 = vmatpush1.msra.mxu0 0.0
        %4086 = vmatprep.subr.mxu0 0.0
        %4087 = vmatpush1.msra.mxu0 0.0
        %4088 = vmatprep.subr.mxu0 0.0
        %4089 = vmatpush1.msra.mxu0 0.0
        %4090 = vmatprep.subr.mxu0 0.0
        %4091 = vmatpush1.msra.mxu0 0.0
        %4092 = vmatprep.mubr.f32.mxu0 0.0
        %4093 = vmatmul.mubr.f32.gmra.mrb[0].mxu0 %v2718
        %v4094 = vpop.f32.mrb[0].mxu0
        %v4095 = vadd.f32 %v4026, %v4094
        %v4096 = vpop.f32.mrb[0].mxu0
        %4097 = vdwg.mxu0
        %v4099 = vsel %vm706, %v4010, 0
        %v4102 = vsel %vm706, %v4095, 0
        %4104 = vmatprep.subr.mxu0 0.0
        %4105 = vmatpush1.xpose.msra.mxu0 %v4102
        %4106 = vmatprep.subr.mxu0 0.0
        %4107 = vmatpush1.xpose.msra.mxu0 0.0
        %4108 = vmatprep.subr.mxu0 0.0
        %4109 = vmatpush1.xpose.msra.mxu0 0.0
        %4110 = vmatprep.subr.mxu0 0.0
        %4111 = vmatpush1.xpose.msra.mxu0 0.0
        %4112 = vmatprep.subr.mxu0 0.0
        %4113 = vmatpush1.xpose.msra.mxu0 0.0
        %4114 = vmatprep.subr.mxu0 0.0
        %4115 = vmatpush1.xpose.msra.mxu0 0.0
        %4116 = vmatprep.subr.mxu0 0.0
        %4117 = vmatpush1.xpose.msra.mxu0 0.0
        %4118 = vmatprep.subr.mxu0 0.0
        %4119 = vmatpush1.xpose.msra.mxu0 0.0
        %4120 = vmatprep.subr.mxu0 0.0
        %4121 = vmatpush1.xpose.msra.mxu0 0.0
        %4122 = vmatprep.subr.mxu0 0.0
        %4123 = vmatpush1.xpose.msra.mxu0 0.0
        %4124 = vmatprep.subr.mxu0 0.0
        %4125 = vmatpush1.xpose.msra.mxu0 0.0
        %4126 = vmatprep.subr.mxu0 0.0
        %4127 = vmatpush1.xpose.msra.mxu0 0.0
        %4128 = vmatprep.subr.mxu0 0.0
        %4129 = vmatpush1.xpose.msra.mxu0 0.0
        %4130 = vmatprep.subr.mxu0 0.0
        %4131 = vmatpush1.xpose.msra.mxu0 0.0
        %4132 = vmatprep.subr.mxu0 0.0
        %4133 = vmatpush1.xpose.msra.mxu0 0.0
        %4134 = vmatprep.subr.mxu0 0.0
        %4135 = vmatpush1.xpose.msra.mxu0 0.0
        %4136 = vmatprep.subr.mxu0 0.0
        %4137 = vmatpush1.xpose.msra.mxu0 0.0
        %4138 = vmatprep.subr.mxu0 0.0
        %4139 = vmatpush1.xpose.msra.mxu0 0.0
        %4140 = vmatprep.subr.mxu0 0.0
        %4141 = vmatpush1.xpose.msra.mxu0 0.0
        %4142 = vmatprep.subr.mxu0 0.0
        %4143 = vmatpush1.xpose.msra.mxu0 0.0
        %4144 = vmatprep.subr.mxu0 0.0
        %4145 = vmatpush1.xpose.msra.mxu0 0.0
        %4146 = vmatprep.subr.mxu0 0.0
        %4147 = vmatpush1.xpose.msra.mxu0 0.0
        %4148 = vmatprep.subr.mxu0 0.0
        %4149 = vmatpush1.xpose.msra.mxu0 0.0
        %4150 = vmatprep.subr.mxu0 0.0
        %4151 = vmatpush1.xpose.msra.mxu0 0.0
        %4152 = vmatprep.subr.mxu0 0.0
        %4153 = vmatpush1.xpose.msra.mxu0 0.0
        %4154 = vmatprep.subr.mxu0 0.0
        %4155 = vmatpush1.xpose.msra.mxu0 0.0
        %4156 = vmatprep.subr.mxu0 0.0
        %4157 = vmatpush1.xpose.msra.mxu0 0.0
        %4158 = vmatprep.subr.mxu0 0.0
        %4159 = vmatpush1.xpose.msra.mxu0 0.0
        %4160 = vmatprep.subr.mxu0 0.0
        %4161 = vmatpush1.xpose.msra.mxu0 0.0
        %4162 = vmatprep.subr.mxu0 0.0
        %4163 = vmatpush1.xpose.msra.mxu0 0.0
        %4164 = vmatprep.subr.mxu0 0.0
        %4165 = vmatpush1.xpose.msra.mxu0 0.0
        %4166 = vmatprep.subr.mxu0 0.0
        %4167 = vmatpush1.xpose.msra.mxu0 0.0
        %4168 = vmatprep.mubr.f32.mxu0 0.0
        %4169 = vmatmul.mubr.f32.gmra.mrb[0].mxu0 %v4099
        %v4170 = vpop.f32.mrb[0].mxu0
        %v4171 = vadd.f32 0.0, %v4170
        %v4172 = vpop.f32.mrb[0].mxu0
        %4173 = vdwg.mxu0
        %v4174 = vmul.f32 %v4171, 0.35355338
        %v4175 = vsel %vm706, %v4174, -inf
        %4176 = vmax.xlane.f32.xlu0 %v4175
        %v4177 = vpop.xlane.xlu0 %4176
        %v4178 = vsub.f32 %v4174, %v4177
        %v4179 = vmul.f32 %v4178, 1.442695
        %v4180 = vpow.pop %v4179
        %v4181 = vsel %vm706, %v4180, 0.0
        %4182 = vadd.xlane.f32.xlu0 %v4181
        %v4183 = vpop.xlane.xlu0 %4182
        %v4184 = vrcp.pop %v4183
        %v4185 = vmul.f32 %v4180, %v4184
        %v4187 = vsel %vm706, %v4185, 0
        %4189 = vmatprep.subr.mxu0 0.0
        %4190 = vmatpush1.msra.mxu0 %v4095
        %4191 = vmatprep.subr.mxu0 0.0
        %4192 = vmatpush1.msra.mxu0 0.0
        %4193 = vmatprep.subr.mxu0 0.0
        %4194 = vmatpush1.msra.mxu0 0.0
        %4195 = vmatprep.subr.mxu0 0.0
        %4196 = vmatpush1.msra.mxu0 0.0
        %4197 = vmatprep.subr.mxu0 0.0
        %4198 = vmatpush1.msra.mxu0 0.0
        %4199 = vmatprep.subr.mxu0 0.0
        %4200 = vmatpush1.msra.mxu0 0.0
        %4201 = vmatprep.subr.mxu0 0.0
        %4202 = vmatpush1.msra.mxu0 0.0
        %4203 = vmatprep.subr.mxu0 0.0
        %4204 = vmatpush1.msra.mxu0 0.0
        %4205 = vmatprep.subr.mxu0 0.0
        %4206 = vmatpush1.msra.mxu0 0.0
        %4207 = vmatprep.subr.mxu0 0.0
        %4208 = vmatpush1.msra.mxu0 0.0
        %4209 = vmatprep.subr.mxu0 0.0
        %4210 = vmatpush1.msra.mxu0 0.0
        %4211 = vmatprep.subr.mxu0 0.0
        %4212 = vmatpush1.msra.mxu0 0.0
        %4213 = vmatprep.subr.mxu0 0.0
        %4214 = vmatpush1.msra.mxu0 0.0
        %4215 = vmatprep.subr.mxu0 0.0
        %4216 = vmatpush1.msra.mxu0 0.0
        %4217 = vmatprep.subr.mxu0 0.0
        %4218 = vmatpush1.msra.mxu0 0.0
        %4219 = vmatprep.subr.mxu0 0.0
        %4220 = vmatpush1.msra.mxu0 0.0
        %4221 = vmatprep.subr.mxu0 0.0
        %4222 = vmatpush1.msra.mxu0 0.0
        %4223 = vmatprep.subr.mxu0 0.0
        %4224 = vmatpush1.msra.mxu0 0.0
        %4225 = vmatprep.subr.mxu0 0.0
        %4226 = vmatpush1.msra.mxu0 0.0
        %4227 = vmatprep.subr.mxu0 0.0
        %4228 = vmatpush1.msra.mxu0 0.0
        %4229 = vmatprep.subr.mxu0 0.0
        %4230 = vmatpush1.msra.mxu0 0.0
        %4231 = vmatprep.subr.mxu0 0.0
        %4232 = vmatpush1.msra.mxu0 0.0
        %4233 = vmatprep.subr.mxu0 0.0
        %4234 = vmatpush1.msra.mxu0 0.0
        %4235 = vmatprep.subr.mxu0 0.0
        %4236 = vmatpush1.msra.mxu0 0.0
        %4237 = vmatprep.subr.mxu0 0.0
        %4238 = vmatpush1.msra.mxu0 0.0
        %4239 = vmatprep.subr.mxu0 0.0
        %4240 = vmatpush1.msra.mxu0 0.0
        %4241 = vmatprep.subr.mxu0 0.0
        %4242 = vmatpush1.msra.mxu0 0.0
        %4243 = vmatprep.subr.mxu0 0.0
        %4244 = vmatpush1.msra.mxu0 0.0
        %4245 = vmatprep.subr.mxu0 0.0
        %4246 = vmatpush1.msra.mxu0 0.0
        %4247 = vmatprep.subr.mxu0 0.0
        %4248 = vmatpush1.msra.mxu0 0.0
        %4249 = vmatprep.subr.mxu0 0.0
        %4250 = vmatpush1.msra.mxu0 0.0
        %4251 = vmatprep.subr.mxu0 0.0
        %4252 = vmatpush1.msra.mxu0 0.0
        %4253 = vmatprep.mubr.f32.mxu0 0.0
        %4254 = vmatmul.mubr.f32.gmra.mrb[0].mxu0 %v4187
        %v4255 = vpop.f32.mrb[0].mxu0
        %v4256 = vadd.f32 0.0, %v4255
        %v4257 = vpop.f32.mrb[0].mxu0
        %4258 = vdwg.mxu0
        %v4259 = vld [vmem:[%s3034 + $0x18] sm:$0xff]
        %v4261 = vsel %vm706, %v4256, 0
        %4263 = vmatprep.subr.mxu0 0.0
        %4264 = vmatpush1.msra.mxu0 %v4259
        %4265 = vmatprep.subr.mxu0 0.0
        %4266 = vmatpush1.msra.mxu0 0.0
        %4267 = vmatprep.subr.mxu0 0.0
        %4268 = vmatpush1.msra.mxu0 0.0
        %4269 = vmatprep.subr.mxu0 0.0
        %4270 = vmatpush1.msra.mxu0 0.0
        %4271 = vmatprep.subr.mxu0 0.0
        %4272 = vmatpush1.msra.mxu0 0.0
        %4273 = vmatprep.subr.mxu0 0.0
        %4274 = vmatpush1.msra.mxu0 0.0
        %4275 = vmatprep.subr.mxu0 0.0
        %4276 = vmatpush1.msra.mxu0 0.0
        %4277 = vmatprep.subr.mxu0 0.0
        %4278 = vmatpush1.msra.mxu0 0.0
        %4279 = vmatprep.subr.mxu0 0.0
        %4280 = vmatpush1.msra.mxu0 0.0
        %4281 = vmatprep.subr.mxu0 0.0
        %4282 = vmatpush1.msra.mxu0 0.0
        %4283 = vmatprep.subr.mxu0 0.0
        %4284 = vmatpush1.msra.mxu0 0.0
        %4285 = vmatprep.subr.mxu0 0.0
        %4286 = vmatpush1.msra.mxu0 0.0
        %4287 = vmatprep.subr.mxu0 0.0
        %4288 = vmatpush1.msra.mxu0 0.0
        %4289 = vmatprep.subr.mxu0 0.0
        %4290 = vmatpush1.msra.mxu0 0.0
        %4291 = vmatprep.subr.mxu0 0.0
        %4292 = vmatpush1.msra.mxu0 0.0
        %4293 = vmatprep.subr.mxu0 0.0
        %4294 = vmatpush1.msra.mxu0 0.0
        %4295 = vmatprep.subr.mxu0 0.0
        %4296 = vmatpush1.msra.mxu0 0.0
        %4297 = vmatprep.subr.mxu0 0.0
        %4298 = vmatpush1.msra.mxu0 0.0
        %4299 = vmatprep.subr.mxu0 0.0
        %4300 = vmatpush1.msra.mxu0 0.0
        %4301 = vmatprep.subr.mxu0 0.0
        %4302 = vmatpush1.msra.mxu0 0.0
        %4303 = vmatprep.subr.mxu0 0.0
        %4304 = vmatpush1.msra.mxu0 0.0
        %4305 = vmatprep.subr.mxu0 0.0
        %4306 = vmatpush1.msra.mxu0 0.0
        %4307 = vmatprep.subr.mxu0 0.0
        %4308 = vmatpush1.msra.mxu0 0.0
        %4309 = vmatprep.subr.mxu0 0.0
        %4310 = vmatpush1.msra.mxu0 0.0
        %4311 = vmatprep.subr.mxu0 0.0
        %4312 = vmatpush1.msra.mxu0 0.0
        %4313 = vmatprep.subr.mxu0 0.0
        %4314 = vmatpush1.msra.mxu0 0.0
        %4315 = vmatprep.subr.mxu0 0.0
        %4316 = vmatpush1.msra.mxu0 0.0
        %4317 = vmatprep.subr.mxu0 0.0
        %4318 = vmatpush1.msra.mxu0 0.0
        %4319 = vmatprep.subr.mxu0 0.0
        %4320 = vmatpush1.msra.mxu0 0.0
        %4321 = vmatprep.subr.mxu0 0.0
        %4322 = vmatpush1.msra.mxu0 0.0
        %4323 = vmatprep.subr.mxu0 0.0
        %4324 = vmatpush1.msra.mxu0 0.0
        %4325 = vmatprep.subr.mxu0 0.0
        %4326 = vmatpush1.msra.mxu0 0.0
        %4327 = vmatprep.mubr.f32.mxu0 0.0
        %4328 = vmatmul.mubr.f32.gmra.mrb[0].mxu0 %v4261
        %v4329 = vpop.f32.mrb[0].mxu0
        %v4330 = vadd.f32 0.0, %v4329
        %v4331 = vpop.f32.mrb[0].mxu0
        %4332 = vdwg.mxu0
        %v4333 = vadd.f32 %v3927, %v4330
        %v4334 = vadd.f32 %v2665, %v4333
        %s4335 = scalar_lea.vmem %s11, 1
        %v4336 = vld [vmem:[%s4335] sm:$0x1]
        %v4338 = vlaneseq
        %v4339 = vshrl.u32 %v4338, 7
        %v4340 = vsub.s32 0, %v4339
        %v4341 = vrot.slane %v4336, %v4340
        %v4343 = vadd.f32 %v4334, %v4341
        %s4344 = scalar_lea.vmem %s12, 1
        %v4345 = vld [vmem:[%s4344] sm:$0x1]
        %s4346 = scalar_lea.vmem %s13, 1
        %v4347 = vld [vmem:[%s4346] sm:$0x1]
        %v4348 = vsel %vm785, %v4343, 0.0
        %4349 = vadd.xlane.f32.xlu0 %v4348
        %v4350 = vpop.xlane.xlu0 %4349
        %v4351 = vmul.f32 %v4350, %v789
        %v4352 = vsub.f32 %v4343, %v4351
        %v4353 = vmul.f32 %v4352, %v4352
        %v4354 = vsel %vm785, %v4353, 0.0
        %4355 = vadd.xlane.f32.xlu0 %v4354
        %v4356 = vpop.xlane.xlu0 %4355
        %v4357 = vmul.f32 %v4356, 0.032258064
        %v4358 = vrsqrt.pop %v4357
        %v4359 = vmul.f32 %v4357, %v4358
        %vm4360 = vcmp.eq.f32.partialorder %v4357, inf
        %v4361 = vsel %vm4360, %v4357, %v4359
        %vm4362 = vcmp.eq.f32.partialorder %v4357, 0.0
        %v4363 = vand.u32 %v4357, 2147483648
        %v4364 = vsel %vm4362, %v4363, %v4361
        %v4365 = vadd.f32 %v4364, 1e-06
        %v4366 = vrcp.pop %v4365
        %v4367 = vmul.f32 %v4352, %v4366
        %v4369 = vlaneseq
        %v4370 = vshrl.u32 %v4369, 7
        %v4371 = vsub.s32 0, %v4370
        %v4372 = vrot.slane %v4345, %v4371
        %v4374 = vmul.f32 %v4372, %v4367
        %v4376 = vlaneseq
        %v4377 = vshrl.u32 %v4376, 7
        %v4378 = vsub.s32 0, %v4377
        %v4379 = vrot.slane %v4347, %v4378
        %v4381 = vadd.f32 %v4374, %v4379
        %s4382 = scalar_lea.vmem [#allocation10], 32
        %v4383 = vld [vmem:[%s4382] sm:$0xff]
        %v4384 = vld [vmem:[%s4382 + $0x8] sm:$0xff]
        %v4385 = vld [vmem:[%s4382 + $0x10] sm:$0xff]
        %v4386 = vld [vmem:[%s4382 + $0x18] sm:$0xff]
        %s4387 = scalar_lea.vmem %s15, 1
        %v4388 = vld [vmem:[%s4387] sm:$0x1]
        %v4390 = vlaneseq
        %v4391 = vshrl.u32 %v4390, 7
        %v4392 = vsub.s32 0, %v4391
        %v4393 = vrot.slane %v4388, %v4392
        %v4396 = vsel %vm785, %v4381, 0
        %4398 = vmatprep.subr.mxu0 0.0
        %4399 = vmatpush1.msra.mxu0 %v4383
        %4400 = vmatprep.subr.mxu0 0.0
        %4401 = vmatpush1.msra.mxu0 %v4384
        %4402 = vmatprep.subr.mxu0 0.0
        %4403 = vmatpush1.msra.mxu0 %v4385
        %4404 = vmatprep.subr.mxu0 0.0
        %4405 = vmatpush1.msra.mxu0 %v4386
        %4406 = vmatprep.subr.mxu0 0.0
        %4407 = vmatpush1.msra.mxu0 0.0
        %4408 = vmatprep.subr.mxu0 0.0
        %4409 = vmatpush1.msra.mxu0 0.0
        %4410 = vmatprep.subr.mxu0 0.0
        %4411 = vmatpush1.msra.mxu0 0.0
        %4412 = vmatprep.subr.mxu0 0.0
        %4413 = vmatpush1.msra.mxu0 0.0
        %4414 = vmatprep.subr.mxu0 0.0
        %4415 = vmatpush1.msra.mxu0 0.0
        %4416 = vmatprep.subr.mxu0 0.0
        %4417 = vmatpush1.msra.mxu0 0.0
        %4418 = vmatprep.subr.mxu0 0.0
        %4419 = vmatpush1.msra.mxu0 0.0
        %4420 = vmatprep.subr.mxu0 0.0
        %4421 = vmatpush1.msra.mxu0 0.0
        %4422 = vmatprep.subr.mxu0 0.0
        %4423 = vmatpush1.msra.mxu0 0.0
        %4424 = vmatprep.subr.mxu0 0.0
        %4425 = vmatpush1.msra.mxu0 0.0
        %4426 = vmatprep.subr.mxu0 0.0
        %4427 = vmatpush1.msra.mxu0 0.0
        %4428 = vmatprep.subr.mxu0 0.0
        %4429 = vmatpush1.msra.mxu0 0.0
        %4430 = vmatprep.subr.mxu0 0.0
        %4431 = vmatpush1.msra.mxu0 0.0
        %4432 = vmatprep.subr.mxu0 0.0
        %4433 = vmatpush1.msra.mxu0 0.0
        %4434 = vmatprep.subr.mxu0 0.0
        %4435 = vmatpush1.msra.mxu0 0.0
        %4436 = vmatprep.subr.mxu0 0.0
        %4437 = vmatpush1.msra.mxu0 0.0
        %4438 = vmatprep.subr.mxu0 0.0
        %4439 = vmatpush1.msra.mxu0 0.0
        %4440 = vmatprep.subr.mxu0 0.0
        %4441 = vmatpush1.msra.mxu0 0.0
        %4442 = vmatprep.subr.mxu0 0.0
        %4443 = vmatpush1.msra.mxu0 0.0
        %4444 = vmatprep.subr.mxu0 0.0
        %4445 = vmatpush1.msra.mxu0 0.0
        %4446 = vmatprep.subr.mxu0 0.0
        %4447 = vmatpush1.msra.mxu0 0.0
        %4448 = vmatprep.subr.mxu0 0.0
        %4449 = vmatpush1.msra.mxu0 0.0
        %4450 = vmatprep.subr.mxu0 0.0
        %4451 = vmatpush1.msra.mxu0 0.0
        %4452 = vmatprep.subr.mxu0 0.0
        %4453 = vmatpush1.msra.mxu0 0.0
        %4454 = vmatprep.subr.mxu0 0.0
        %4455 = vmatpush1.msra.mxu0 0.0
        %4456 = vmatprep.subr.mxu0 0.0
        %4457 = vmatpush1.msra.mxu0 0.0
        %4458 = vmatprep.subr.mxu0 0.0
        %4459 = vmatpush1.msra.mxu0 0.0
        %4460 = vmatprep.subr.mxu0 0.0
        %4461 = vmatpush1.msra.mxu0 0.0
        %4462 = vmatprep.mubr.f32.mxu0 0.0
        %4463 = vmatmul.mubr.f32.gmra.mrb[0].mxu0 %v4396
        %v4464 = vpop.f32.mrb[0].mxu0
        %v4465 = vadd.f32 %v4393, %v4464
        %v4466 = vpop.f32.mrb[0].mxu0
        %4467 = vdwg.mxu0
        %v4468 = vmax.f32 %v4465, 0.0
        %s4469 = scalar_lea.vmem %s16, 64
        %v4470 = vld [vmem:[%s4469] sm:$0xff]
        %v4471 = vld [vmem:[%s4469 + $0x8] sm:$0xff]
        %v4472 = vld [vmem:[%s4469 + $0x10] sm:$0xff]
        %v4473 = vld [vmem:[%s4469 + $0x18] sm:$0xff]
        %v4474 = vld [vmem:[%s4469 + $0x20] sm:$0xff]
        %v4475 = vld [vmem:[%s4469 + $0x28] sm:$0xff]
        %v4476 = vld [vmem:[%s4469 + $0x30] sm:$0xff]
        %v4477 = vld [vmem:[%s4469 + $0x38] sm:$0xff]
        %s4478 = scalar_lea.vmem %s17, 1
        %v4479 = vld [vmem:[%s4478] sm:$0x1]
        %v4481 = vlaneseq
        %v4482 = vshrl.u32 %v4481, 7
        %v4483 = vsub.s32 0, %v4482
        %v4484 = vrot.slane %v4479, %v4483
        %v4487 = vsel %vm2591, %v4468, 0
        %4489 = vmatprep.subr.mxu0 0.0
        %4490 = vmatpush1.msra.mxu0 %v4470
        %4491 = vmatprep.subr.mxu0 0.0
        %4492 = vmatpush1.msra.mxu0 %v4471
        %4493 = vmatprep.subr.mxu0 0.0
        %4494 = vmatpush1.msra.mxu0 %v4472
        %4495 = vmatprep.subr.mxu0 0.0
        %4496 = vmatpush1.msra.mxu0 %v4473
        %4497 = vmatprep.subr.mxu0 0.0
        %4498 = vmatpush1.msra.mxu0 %v4474
        %4499 = vmatprep.subr.mxu0 0.0
        %4500 = vmatpush1.msra.mxu0 %v4475
        %4501 = vmatprep.subr.mxu0 0.0
        %4502 = vmatpush1.msra.mxu0 %v4476
        %4503 = vmatprep.subr.mxu0 0.0
        %4504 = vmatpush1.msra.mxu0 %v4477
        %4505 = vmatprep.subr.mxu0 0.0
        %4506 = vmatpush1.msra.mxu0 0.0
        %4507 = vmatprep.subr.mxu0 0.0
        %4508 = vmatpush1.msra.mxu0 0.0
        %4509 = vmatprep.subr.mxu0 0.0
        %4510 = vmatpush1.msra.mxu0 0.0
        %4511 = vmatprep.subr.mxu0 0.0
        %4512 = vmatpush1.msra.mxu0 0.0
        %4513 = vmatprep.subr.mxu0 0.0
        %4514 = vmatpush1.msra.mxu0 0.0
        %4515 = vmatprep.subr.mxu0 0.0
        %4516 = vmatpush1.msra.mxu0 0.0
        %4517 = vmatprep.subr.mxu0 0.0
        %4518 = vmatpush1.msra.mxu0 0.0
        %4519 = vmatprep.subr.mxu0 0.0
        %4520 = vmatpush1.msra.mxu0 0.0
        %4521 = vmatprep.subr.mxu0 0.0
        %4522 = vmatpush1.msra.mxu0 0.0
        %4523 = vmatprep.subr.mxu0 0.0
        %4524 = vmatpush1.msra.mxu0 0.0
        %4525 = vmatprep.subr.mxu0 0.0
        %4526 = vmatpush1.msra.mxu0 0.0
        %4527 = vmatprep.subr.mxu0 0.0
        %4528 = vmatpush1.msra.mxu0 0.0
        %4529 = vmatprep.subr.mxu0 0.0
        %4530 = vmatpush1.msra.mxu0 0.0
        %4531 = vmatprep.subr.mxu0 0.0
        %4532 = vmatpush1.msra.mxu0 0.0
        %4533 = vmatprep.subr.mxu0 0.0
        %4534 = vmatpush1.msra.mxu0 0.0
        %4535 = vmatprep.subr.mxu0 0.0
        %4536 = vmatpush1.msra.mxu0 0.0
        %4537 = vmatprep.subr.mxu0 0.0
        %4538 = vmatpush1.msra.mxu0 0.0
        %4539 = vmatprep.subr.mxu0 0.0
        %4540 = vmatpush1.msra.mxu0 0.0
        %4541 = vmatprep.subr.mxu0 0.0
        %4542 = vmatpush1.msra.mxu0 0.0
        %4543 = vmatprep.subr.mxu0 0.0
        %4544 = vmatpush1.msra.mxu0 0.0
        %4545 = vmatprep.subr.mxu0 0.0
        %4546 = vmatpush1.msra.mxu0 0.0
        %4547 = vmatprep.subr.mxu0 0.0
        %4548 = vmatpush1.msra.mxu0 0.0
        %4549 = vmatprep.subr.mxu0 0.0
        %4550 = vmatpush1.msra.mxu0 0.0
        %4551 = vmatprep.subr.mxu0 0.0
        %4552 = vmatpush1.msra.mxu0 0.0
        %4553 = vmatprep.mubr.f32.mxu0 0.0
        %4554 = vmatmul.mubr.f32.gmra.mrb[0].mxu0 %v4487
        %v4555 = vpop.f32.mrb[0].mxu0
        %v4556 = vadd.f32 %v4484, %v4555
        %v4557 = vpop.f32.mrb[0].mxu0
        %4558 = vdwg.mxu0
        %v4559 = vadd.f32 %v4343, %v4556
        %v4560 = vld [vmem:[%s18] sm:$0x1]
        %v4561 = vld [vmem:[%s19] sm:$0x1]
        %v4562 = vsel %vm785, %v4559, 0.0
        %4563 = vadd.xlane.f32.xlu0 %v4562
        %v4564 = vpop.xlane.xlu0 %4563
        %v4565 = vmul.f32 %v4564, %v789
        %v4566 = vsub.f32 %v4559, %v4565
        %v4567 = vmul.f32 %v4566, %v4566
        %v4568 = vsel %vm785, %v4567, 0.0
        %4569 = vadd.xlane.f32.xlu0 %v4568
        %v4570 = vpop.xlane.xlu0 %4569
        %v4571 = vmul.f32 %v4570, 0.032258064
        %v4572 = vrsqrt.pop %v4571
        %v4573 = vmul.f32 %v4571, %v4572
        %vm4574 = vcmp.eq.f32.partialorder %v4571, inf
        %v4575 = vsel %vm4574, %v4571, %v4573
        %vm4576 = vcmp.eq.f32.partialorder %v4571, 0.0
        %v4577 = vand.u32 %v4571, 2147483648
        %v4578 = vsel %vm4576, %v4577, %v4575
        %v4579 = vadd.f32 %v4578, 1e-06
        %v4580 = vrcp.pop %v4579
        %v4581 = vmul.f32 %v4566, %v4580
        %v4583 = vlaneseq
        %v4584 = vshrl.u32 %v4583, 7
        %v4585 = vsub.s32 0, %v4584
        %v4586 = vrot.slane %v4560, %v4585
        %v4588 = vmul.f32 %v4586, %v4581
        %v4590 = vlaneseq
        %v4591 = vshrl.u32 %v4590, 7
        %v4592 = vsub.s32 0, %v4591
        %v4593 = vrot.slane %v4561, %v4592
        %v4595 = vadd.f32 %v4588, %v4593
        %4596 = vst.msk [vmem:[%s696] sm:$0xff] %vm785, %v4595
        %s4597 = sand.u32 %s472, 1
        %s4598 = scalar_lea.sflag [#allocation4], %s4597
        %s4599 = sand.u32 %s472, 1
        %s4600 = smul.addr %s4599, 8
        %s4601 = scalar_lea.vmem [#allocation11], %s4600
        // Predicated region
        $region121: #{tpu_custom_call.1} parent=99 // pred_check
          %p4602 = pneg %p482
        $region122: #{tpu_custom_call.1} parent=99 // pred_check_branch
          %4604 = sbr.rel (%p4602) target = $region124
        $region123: #{tpu_custom_call.1} parent=99 // pred_region
          %s4606 = ssub.s32 128, 128
          %4607 = vsyncadd %s4598, %s4606
          %s4608 = smul.addr %s39, 128
          %s4609 = scalar_lea.hbm %s20, %s4608
          %s4611 = sshll.u32 %s4601, 4
          %s4612 = int_to_ptr.vmem [resolvable:$true] %s4611
          %4614 = dma.vmem_to_hbm [thread:$0]  %s4612, 128, %s4609, %s4598
        $region124: #{tpu_custom_call.1} parent=99 // pred_fallthru
          _
      $region100: #{tpu_custom_call.1} parent=5 // pred_fallthru
        _
      %p4615 = scmp.le.s32.totalorder 2, %s34
      // Predicated region
      $region125: #{tpu_custom_call.1} parent=5 // pred_check
        %p4616 = pneg %p4615
      $region126: #{tpu_custom_call.1} parent=5 // pred_check_branch
        %4618 = sbr.rel (%p4616) target = $region128
      $region127: #{tpu_custom_call.1} parent=5 // pred_region
        %s4619 = ssub.s32 %s34, 2
        // Predicated region
        $region129: #{tpu_custom_call.1} parent=127 // pred_check
          %p4620 = pneg %p488
        $region130: #{tpu_custom_call.1} parent=127 // pred_check_branch
          %4622 = sbr.rel (%p4620) target = $region132
        $region131: #{tpu_custom_call.1} parent=127 // pred_region
          %s4623 = sand.u32 %s473, 1
          %s4624 = scalar_lea.sflag [#allocation4], %s4623
          %s4625 = sand.u32 %s473, 1
          %s4626 = smul.addr %s4625, 8
          %s4627 = scalar_lea.vmem [#allocation11], %s4626
          %4628 = dma.done %s4624, 128
        $region132: #{tpu_custom_call.1} parent=127 // pred_fallthru
          _
      $region128: #{tpu_custom_call.1} parent=5 // pred_fallthru
        _
    $region6: #{tpu_custom_call.1} parent=1 // loop_footer
      %s38 = sadd.s32 1, %s34
    $region7: #{tpu_custom_call.1} parent=1 // loop_footer_branch
      %33 = sbr.rel target = $region3
    $region8: #{tpu_custom_call.1} parent=1 // loop_exit
      _
    %4629 = vsyncpa [#allocation3], 1
    %s4630 = scalar_lea.sflag [#allocation3], 1
    %4631 = vsyncpa %s4630, 1
    %4632 = vsyncpa [#allocation6], 1
    %4633 = vsyncpa [#allocation9], 1
    %4634 = vsyncpa [#allocation4], 1
    %s4635 = scalar_lea.sflag [#allocation4], 1
    %4636 = vsyncpa %s4635, 1

</llo_original>
